<compile_context>
chip_gen: v6e
topology: v6e:2x2x1
jax: 0.10.0
libtpu: 0.0.40
codegen_flags: <defaults>
</compile_context>

<pallas_src>
import jax
import jax.numpy as jnp
from jax.experimental import pallas as pl
from jax.experimental.pallas import tpu as pltpu


_VMEM_BUDGET_BYTES = 12 * 1024 * 1024  # stay under v5e's 16 MiB scoped default


def _round_up(x, m):
    return ((x + m - 1) // m) * m


def _block_vmem_bytes(H, W, c_tile, itemsize):
    # Conservative padded VMEM footprint of one input + one output block,
    # double-buffered by the BlockSpec pipeliner.
    in_b = H * _round_up(W, 8) * _round_up(c_tile, 128) * itemsize
    out_b = _round_up(c_tile, 8) * _round_up(H * W, 128) * itemsize
    return 2 * (in_b + out_b)


def _pick_c_tile(N, H, W, C, itemsize):
    """Largest channel tile (multiple of 128 dividing C) that fits VMEM and keeps >= 2 grid steps."""
    if C % 128 == 0:
        cands = [c for c in range(128, C + 1, 128) if C % c == 0]
    else:
        # TODO(synk): tile non-128-multiple C (and very large spatial dims) instead
        # of taking the whole axis; fine for the ConvNeXt shapes this module sees.
        cands = [C]
    scored = []
    for c in cands:
        if _block_vmem_bytes(H, W, c, itemsize) > _VMEM_BUDGET_BYTES:
            continue
        steps = N * (C // c)
        scored.append((steps, -c, c))
    if not scored:
        return min(cands)
    multi = [s for s in scored if s[0] >= 2]  # >= 2 steps: pipelining + both v7x TCs busy
    pool = multi if multi else scored
    return min(pool)[2]  # fewest steps, then largest c_tile


def _permute_kernel(x_ref, o_ref):
    # x_ref: (H, W, c_tile)   NHWC slab for one image / channel strip (VMEM).
    # o_ref: (c_tile, H * W)  lane-dense NCHW-flattened slab (VMEM).
    h_dim, w_dim, c_dim = x_ref.shape
    c_step = 128 if c_dim % 128 == 0 else c_dim
    # Static unroll: h_dim and c_dim // c_step are small (14 and <= 6 here).
    # Each strip is a (W, 128) -> (128, W) XLU transpose, well under 64 vregs.
    # TODO(synk): for large spatial sizes (e.g. 224x224) switch to a fori_loop
    # body plus spatial tiling; at 14x14 the unrolled loop is fine.
    for h in range(h_dim):
        for c0 in range(0, c_dim, c_step):
            o_ref[c0:c0 + c_step, h * w_dim:(h + 1) * w_dim] = (
                x_ref[h, :, c0:c0 + c_step].T
            )


@jax.jit
def permute_nhwc_to_nchw(x):
    """x: (N, H, W, C) -> (N, C, H, W) via a Pallas TPU kernel (== torch.permute(x, [0,3,1,2]))."""
    N, H, W, C = x.shape
    c_tile = _pick_c_tile(N, H, W, C, x.dtype.itemsize)
    n_ct = C // c_tile

    out3 = pl.pallas_call(
        _permute_kernel,
        out_shape=jax.ShapeDtypeStruct((N, C, H * W), x.dtype),
        grid_spec=pltpu.PrefetchScalarGridSpec(
            num_scalar_prefetch=0,
            # Channel axis leads so the non-degenerate parallel axis is the one
            # the v7x megacore splitter shards (N is often 1).
            grid=(n_ct, N),
            in_specs=[
                pl.BlockSpec(
                    (pl.Squeezed(), H, W, c_tile),
                    lambda c, n: (n, 0, 0, c),
                )
            ],
            out_specs=pl.BlockSpec(
                (pl.Squeezed(), c_tile, H * W),
                lambda c, n: (n, c, 0),
            ),
        ),
        compiler_params=pltpu.CompilerParams(
            dimension_semantics=("parallel", "parallel"),
        ),
    )(x)

    # TODO(synk): this reshape materializes the padded NCHW layout (relayout copy);
    # fuse the permute into the consumer's BlockSpecs to remove it entirely.
    return out3.reshape(N, C, H, W)


if __name__ == "__main__":
    key = jax.random.PRNGKey(0)
    k1, k2 = jax.random.split(key)

    # Small shape consistent with the module's NHWC input (original: 1x14x14x768).
    x_small = jax.random.normal(k1, (2, 14, 14, 256), dtype=jnp.float32)
    out_small = jax.block_until_ready(permute_nhwc_to_nchw(x_small))
    ref_small = jnp.transpose(x_small, (0, 3, 1, 2))
    assert out_small.shape == ref_small.shape, (out_small.shape, ref_small.shape)
    assert jnp.array_equal(out_small, ref_small), "Pallas permute mismatch (small shape)"

    # Exact original module shape (exercises c_tile=384, grid (2, 1)).
    x_full = jax.random.normal(k2, (1, 14, 14, 768), dtype=jnp.float32)
    out_full = jax.block_until_ready(permute_nhwc_to_nchw(x_full))
    ref_full = jnp.transpose(x_full, (0, 3, 1, 2))
    assert out_full.shape == ref_full.shape, (out_full.shape, ref_full.shape)
    assert jnp.array_equal(out_full, ref_full), "Pallas permute mismatch (full shape)"

    print("KERNEL_OK")
</pallas_src>

<mosaic_0001>
module attributes {stable_mosaic.version = 11 : i64} {
  func.func @_permute_kernel(%arg0: i32, %arg1: i32, %arg2: memref<1x14x14x256xf32, #tpu.memory_space<vmem>>, %arg3: memref<1x256x196xf32, #tpu.memory_space<vmem>>) attributes {dimension_semantics = [#tpu.dimension_semantics<parallel>, #tpu.dimension_semantics<parallel>], iteration_bounds = array<i64: 1, 2>, scalar_prefetch = 0 : i64, scratch_operands = 0 : i64, tpu.core_type = #tpu.core_type<tc>, window_params = [{transform_indices = @transform_0, window_bounds = array<i64: 1, 14, 14, 256>}, {transform_indices = @transform_1, window_bounds = array<i64: 1, 256, 196>}]} {
    %c0 = arith.constant 0 : index
    %c0_0 = arith.constant 0 : index
    %c0_1 = arith.constant 0 : index
    %c0_2 = arith.constant 0 : index
    %0 = vector.load %arg2[%c0, %c0_0, %c0_1, %c0_2] : memref<1x14x14x256xf32, #tpu.memory_space<vmem>>, vector<1x1x14x128xf32>
    %1 = vector.shape_cast %0 : vector<1x1x14x128xf32> to vector<14x128xf32>
    %2 = tpu.transpose %1, [1, 0] : vector<14x128xf32> -> vector<128x14xf32>
    %c0_3 = arith.constant 0 : index
    %c0_4 = arith.constant 0 : index
    %c0_5 = arith.constant 0 : index
    %3 = vector.load %arg3[%c0_3, %c0_4, %c0_5] : memref<1x256x196xf32, #tpu.memory_space<vmem>>, vector<1x128x14xf32>
    %4 = vector.shape_cast %3 : vector<1x128x14xf32> to vector<128x14xf32>
    %5 = vector.shape_cast %2 : vector<128x14xf32> to vector<1x128x14xf32>
    tpu.vector_store %arg3[%c0_3, %c0_4, %c0_5], %5 {strides = array<i32>} : memref<1x256x196xf32, #tpu.memory_space<vmem>>, vector<1x128x14xf32>,
    %c0_6 = arith.constant 0 : index
    %c0_7 = arith.constant 0 : index
    %c0_8 = arith.constant 0 : index
    %c128 = arith.constant 128 : index
    %6 = vector.load %arg2[%c0_6, %c0_7, %c0_8, %c128] : memref<1x14x14x256xf32, #tpu.memory_space<vmem>>, vector<1x1x14x128xf32>
    %7 = vector.shape_cast %6 : vector<1x1x14x128xf32> to vector<14x128xf32>
    %8 = tpu.transpose %7, [1, 0] : vector<14x128xf32> -> vector<128x14xf32>
    %c0_9 = arith.constant 0 : index
    %c128_10 = arith.constant 128 : index
    %c0_11 = arith.constant 0 : index
    %9 = vector.load %arg3[%c0_9, %c128_10, %c0_11] : memref<1x256x196xf32, #tpu.memory_space<vmem>>, vector<1x128x14xf32>
    %10 = vector.shape_cast %9 : vector<1x128x14xf32> to vector<128x14xf32>
    %11 = vector.shape_cast %8 : vector<128x14xf32> to vector<1x128x14xf32>
    tpu.vector_store %arg3[%c0_9, %c128_10, %c0_11], %11 {strides = array<i32>} : memref<1x256x196xf32, #tpu.memory_space<vmem>>, vector<1x128x14xf32>,
    %c0_12 = arith.constant 0 : index
    %c1 = arith.constant 1 : index
    %c0_13 = arith.constant 0 : index
    %c0_14 = arith.constant 0 : index
    %12 = vector.load %arg2[%c0_12, %c1, %c0_13, %c0_14] : memref<1x14x14x256xf32, #tpu.memory_space<vmem>>, vector<1x1x14x128xf32>
    %13 = vector.shape_cast %12 : vector<1x1x14x128xf32> to vector<14x128xf32>
    %14 = tpu.transpose %13, [1, 0] : vector<14x128xf32> -> vector<128x14xf32>
    %c0_15 = arith.constant 0 : index
    %c0_16 = arith.constant 0 : index
    %c14 = arith.constant 14 : index
    %15 = vector.load %arg3[%c0_15, %c0_16, %c14] : memref<1x256x196xf32, #tpu.memory_space<vmem>>, vector<1x128x14xf32>
    %16 = vector.shape_cast %15 : vector<1x128x14xf32> to vector<128x14xf32>
    %17 = vector.shape_cast %14 : vector<128x14xf32> to vector<1x128x14xf32>
    tpu.vector_store %arg3[%c0_15, %c0_16, %c14], %17 {strides = array<i32>} : memref<1x256x196xf32, #tpu.memory_space<vmem>>, vector<1x128x14xf32>,
    %c0_17 = arith.constant 0 : index
    %c1_18 = arith.constant 1 : index
    %c0_19 = arith.constant 0 : index
    %c128_20 = arith.constant 128 : index
    %18 = vector.load %arg2[%c0_17, %c1_18, %c0_19, %c128_20] : memref<1x14x14x256xf32, #tpu.memory_space<vmem>>, vector<1x1x14x128xf32>
    %19 = vector.shape_cast %18 : vector<1x1x14x128xf32> to vector<14x128xf32>
    %20 = tpu.transpose %19, [1, 0] : vector<14x128xf32> -> vector<128x14xf32>
    %c0_21 = arith.constant 0 : index
    %c128_22 = arith.constant 128 : index
    %c14_23 = arith.constant 14 : index
    %21 = vector.load %arg3[%c0_21, %c128_22, %c14_23] : memref<1x256x196xf32, #tpu.memory_space<vmem>>, vector<1x128x14xf32>
    %22 = vector.shape_cast %21 : vector<1x128x14xf32> to vector<128x14xf32>
    %23 = vector.shape_cast %20 : vector<128x14xf32> to vector<1x128x14xf32>
    tpu.vector_store %arg3[%c0_21, %c128_22, %c14_23], %23 {strides = array<i32>} : memref<1x256x196xf32, #tpu.memory_space<vmem>>, vector<1x128x14xf32>,
    %c0_24 = arith.constant 0 : index
    %c2 = arith.constant 2 : index
    %c0_25 = arith.constant 0 : index
    %c0_26 = arith.constant 0 : index
    %24 = vector.load %arg2[%c0_24, %c2, %c0_25, %c0_26] : memref<1x14x14x256xf32, #tpu.memory_space<vmem>>, vector<1x1x14x128xf32>
    %25 = vector.shape_cast %24 : vector<1x1x14x128xf32> to vector<14x128xf32>
    %26 = tpu.transpose %25, [1, 0] : vector<14x128xf32> -> vector<128x14xf32>
    %c0_27 = arith.constant 0 : index
    %c0_28 = arith.constant 0 : index
    %c28 = arith.constant 28 : index
    %27 = vector.load %arg3[%c0_27, %c0_28, %c28] : memref<1x256x196xf32, #tpu.memory_space<vmem>>, vector<1x128x14xf32>
    %28 = vector.shape_cast %27 : vector<1x128x14xf32> to vector<128x14xf32>
    %29 = vector.shape_cast %26 : vector<128x14xf32> to vector<1x128x14xf32>
    tpu.vector_store %arg3[%c0_27, %c0_28, %c28], %29 {strides = array<i32>} : memref<1x256x196xf32, #tpu.memory_space<vmem>>, vector<1x128x14xf32>,
    %c0_29 = arith.constant 0 : index
    %c2_30 = arith.constant 2 : index
    %c0_31 = arith.constant 0 : index
    %c128_32 = arith.constant 128 : index
    %30 = vector.load %arg2[%c0_29, %c2_30, %c0_31, %c128_32] : memref<1x14x14x256xf32, #tpu.memory_space<vmem>>, vector<1x1x14x128xf32>
    %31 = vector.shape_cast %30 : vector<1x1x14x128xf32> to vector<14x128xf32>
    %32 = tpu.transpose %31, [1, 0] : vector<14x128xf32> -> vector<128x14xf32>
    %c0_33 = arith.constant 0 : index
    %c128_34 = arith.constant 128 : index
    %c28_35 = arith.constant 28 : index
    %33 = vector.load %arg3[%c0_33, %c128_34, %c28_35] : memref<1x256x196xf32, #tpu.memory_space<vmem>>, vector<1x128x14xf32>
    %34 = vector.shape_cast %33 : vector<1x128x14xf32> to vector<128x14xf32>
    %35 = vector.shape_cast %32 : vector<128x14xf32> to vector<1x128x14xf32>
    tpu.vector_store %arg3[%c0_33, %c128_34, %c28_35], %35 {strides = array<i32>} : memref<1x256x196xf32, #tpu.memory_space<vmem>>, vector<1x128x14xf32>,
    %c0_36 = arith.constant 0 : index
    %c3 = arith.constant 3 : index
    %c0_37 = arith.constant 0 : index
    %c0_38 = arith.constant 0 : index
    %36 = vector.load %arg2[%c0_36, %c3, %c0_37, %c0_38] : memref<1x14x14x256xf32, #tpu.memory_space<vmem>>, vector<1x1x14x128xf32>
    %37 = vector.shape_cast %36 : vector<1x1x14x128xf32> to vector<14x128xf32>
    %38 = tpu.transpose %37, [1, 0] : vector<14x128xf32> -> vector<128x14xf32>
    %c0_39 = arith.constant 0 : index
    %c0_40 = arith.constant 0 : index
    %c42 = arith.constant 42 : index
    %39 = vector.load %arg3[%c0_39, %c0_40, %c42] : memref<1x256x196xf32, #tpu.memory_space<vmem>>, vector<1x128x14xf32>
    %40 = vector.shape_cast %39 : vector<1x128x14xf32> to vector<128x14xf32>
    %41 = vector.shape_cast %38 : vector<128x14xf32> to vector<1x128x14xf32>
    tpu.vector_store %arg3[%c0_39, %c0_40, %c42], %41 {strides = array<i32>} : memref<1x256x196xf32, #tpu.memory_space<vmem>>, vector<1x128x14xf32>,
    %c0_41 = arith.constant 0 : index
    %c3_42 = arith.constant 3 : index
    %c0_43 = arith.constant 0 : index
    %c128_44 = arith.constant 128 : index
    %42 = vector.load %arg2[%c0_41, %c3_42, %c0_43, %c128_44] : memref<1x14x14x256xf32, #tpu.memory_space<vmem>>, vector<1x1x14x128xf32>
    %43 = vector.shape_cast %42 : vector<1x1x14x128xf32> to vector<14x128xf32>
    %44 = tpu.transpose %43, [1, 0] : vector<14x128xf32> -> vector<128x14xf32>
    %c0_45 = arith.constant 0 : index
    %c128_46 = arith.constant 128 : index
    %c42_47 = arith.constant 42 : index
    %45 = vector.load %arg3[%c0_45, %c128_46, %c42_47] : memref<1x256x196xf32, #tpu.memory_space<vmem>>, vector<1x128x14xf32>
    %46 = vector.shape_cast %45 : vector<1x128x14xf32> to vector<128x14xf32>
    %47 = vector.shape_cast %44 : vector<128x14xf32> to vector<1x128x14xf32>
    tpu.vector_store %arg3[%c0_45, %c128_46, %c42_47], %47 {strides = array<i32>} : memref<1x256x196xf32, #tpu.memory_space<vmem>>, vector<1x128x14xf32>,
    %c0_48 = arith.constant 0 : index
    %c4 = arith.constant 4 : index
    %c0_49 = arith.constant 0 : index
    %c0_50 = arith.constant 0 : index
    %48 = vector.load %arg2[%c0_48, %c4, %c0_49, %c0_50] : memref<1x14x14x256xf32, #tpu.memory_space<vmem>>, vector<1x1x14x128xf32>
    %49 = vector.shape_cast %48 : vector<1x1x14x128xf32> to vector<14x128xf32>
    %50 = tpu.transpose %49, [1, 0] : vector<14x128xf32> -> vector<128x14xf32>
    %c0_51 = arith.constant 0 : index
    %c0_52 = arith.constant 0 : index
    %c56 = arith.constant 56 : index
    %51 = vector.load %arg3[%c0_51, %c0_52, %c56] : memref<1x256x196xf32, #tpu.memory_space<vmem>>, vector<1x128x14xf32>
    %52 = vector.shape_cast %51 : vector<1x128x14xf32> to vector<128x14xf32>
    %53 = vector.shape_cast %50 : vector<128x14xf32> to vector<1x128x14xf32>
    tpu.vector_store %arg3[%c0_51, %c0_52, %c56], %53 {strides = array<i32>} : memref<1x256x196xf32, #tpu.memory_space<vmem>>, vector<1x128x14xf32>,
    %c0_53 = arith.constant 0 : index
    %c4_54 = arith.constant 4 : index
    %c0_55 = arith.constant 0 : index
    %c128_56 = arith.constant 128 : index
    %54 = vector.load %arg2[%c0_53, %c4_54, %c0_55, %c128_56] : memref<1x14x14x256xf32, #tpu.memory_space<vmem>>, vector<1x1x14x128xf32>
    %55 = vector.shape_cast %54 : vector<1x1x14x128xf32> to vector<14x128xf32>
    %56 = tpu.transpose %55, [1, 0] : vector<14x128xf32> -> vector<128x14xf32>
    %c0_57 = arith.constant 0 : index
    %c128_58 = arith.constant 128 : index
    %c56_59 = arith.constant 56 : index
    %57 = vector.load %arg3[%c0_57, %c128_58, %c56_59] : memref<1x256x196xf32, #tpu.memory_space<vmem>>, vector<1x128x14xf32>
    %58 = vector.shape_cast %57 : vector<1x128x14xf32> to vector<128x14xf32>
    %59 = vector.shape_cast %56 : vector<128x14xf32> to vector<1x128x14xf32>
    tpu.vector_store %arg3[%c0_57, %c128_58, %c56_59], %59 {strides = array<i32>} : memref<1x256x196xf32, #tpu.memory_space<vmem>>, vector<1x128x14xf32>,
    %c0_60 = arith.constant 0 : index
    %c5 = arith.constant 5 : index
    %c0_61 = arith.constant 0 : index
    %c0_62 = arith.constant 0 : index
    %60 = vector.load %arg2[%c0_60, %c5, %c0_61, %c0_62] : memref<1x14x14x256xf32, #tpu.memory_space<vmem>>, vector<1x1x14x128xf32>
    %61 = vector.shape_cast %60 : vector<1x1x14x128xf32> to vector<14x128xf32>
    %62 = tpu.transpose %61, [1, 0] : vector<14x128xf32> -> vector<128x14xf32>
    %c0_63 = arith.constant 0 : index
    %c0_64 = arith.constant 0 : index
    %c70 = arith.constant 70 : index
    %63 = vector.load %arg3[%c0_63, %c0_64, %c70] : memref<1x256x196xf32, #tpu.memory_space<vmem>>, vector<1x128x14xf32>
    %64 = vector.shape_cast %63 : vector<1x128x14xf32> to vector<128x14xf32>
    %65 = vector.shape_cast %62 : vector<128x14xf32> to vector<1x128x14xf32>
    tpu.vector_store %arg3[%c0_63, %c0_64, %c70], %65 {strides = array<i32>} : memref<1x256x196xf32, #tpu.memory_space<vmem>>, vector<1x128x14xf32>,
    %c0_65 = arith.constant 0 : index
    %c5_66 = arith.constant 5 : index
    %c0_67 = arith.constant 0 : index
    %c128_68 = arith.constant 128 : index
    %66 = vector.load %arg2[%c0_65, %c5_66, %c0_67, %c128_68] : memref<1x14x14x256xf32, #tpu.memory_space<vmem>>, vector<1x1x14x128xf32>
    %67 = vector.shape_cast %66 : vector<1x1x14x128xf32> to vector<14x128xf32>
    %68 = tpu.transpose %67, [1, 0] : vector<14x128xf32> -> vector<128x14xf32>
    %c0_69 = arith.constant 0 : index
    %c128_70 = arith.constant 128 : index
    %c70_71 = arith.constant 70 : index
    %69 = vector.load %arg3[%c0_69, %c128_70, %c70_71] : memref<1x256x196xf32, #tpu.memory_space<vmem>>, vector<1x128x14xf32>
    %70 = vector.shape_cast %69 : vector<1x128x14xf32> to vector<128x14xf32>
    %71 = vector.shape_cast %68 : vector<128x14xf32> to vector<1x128x14xf32>
    tpu.vector_store %arg3[%c0_69, %c128_70, %c70_71], %71 {strides = array<i32>} : memref<1x256x196xf32, #tpu.memory_space<vmem>>, vector<1x128x14xf32>,
    %c0_72 = arith.constant 0 : index
    %c6 = arith.constant 6 : index
    %c0_73 = arith.constant 0 : index
    %c0_74 = arith.constant 0 : index
    %72 = vector.load %arg2[%c0_72, %c6, %c0_73, %c0_74] : memref<1x14x14x256xf32, #tpu.memory_space<vmem>>, vector<1x1x14x128xf32>
    %73 = vector.shape_cast %72 : vector<1x1x14x128xf32> to vector<14x128xf32>
    %74 = tpu.transpose %73, [1, 0] : vector<14x128xf32> -> vector<128x14xf32>
    %c0_75 = arith.constant 0 : index
    %c0_76 = arith.constant 0 : index
    %c84 = arith.constant 84 : index
    %75 = vector.load %arg3[%c0_75, %c0_76, %c84] : memref<1x256x196xf32, #tpu.memory_space<vmem>>, vector<1x128x14xf32>
    %76 = vector.shape_cast %75 : vector<1x128x14xf32> to vector<128x14xf32>
    %77 = vector.shape_cast %74 : vector<128x14xf32> to vector<1x128x14xf32>
    tpu.vector_store %arg3[%c0_75, %c0_76, %c84], %77 {strides = array<i32>} : memref<1x256x196xf32, #tpu.memory_space<vmem>>, vector<1x128x14xf32>,
    %c0_77 = arith.constant 0 : index
    %c6_78 = arith.constant 6 : index
    %c0_79 = arith.constant 0 : index
    %c128_80 = arith.constant 128 : index
    %78 = vector.load %arg2[%c0_77, %c6_78, %c0_79, %c128_80] : memref<1x14x14x256xf32, #tpu.memory_space<vmem>>, vector<1x1x14x128xf32>
    %79 = vector.shape_cast %78 : vector<1x1x14x128xf32> to vector<14x128xf32>
    %80 = tpu.transpose %79, [1, 0] : vector<14x128xf32> -> vector<128x14xf32>
    %c0_81 = arith.constant 0 : index
    %c128_82 = arith.constant 128 : index
    %c84_83 = arith.constant 84 : index
    %81 = vector.load %arg3[%c0_81, %c128_82, %c84_83] : memref<1x256x196xf32, #tpu.memory_space<vmem>>, vector<1x128x14xf32>
    %82 = vector.shape_cast %81 : vector<1x128x14xf32> to vector<128x14xf32>
    %83 = vector.shape_cast %80 : vector<128x14xf32> to vector<1x128x14xf32>
    tpu.vector_store %arg3[%c0_81, %c128_82, %c84_83], %83 {strides = array<i32>} : memref<1x256x196xf32, #tpu.memory_space<vmem>>, vector<1x128x14xf32>,
    %c0_84 = arith.constant 0 : index
    %c7 = arith.constant 7 : index
    %c0_85 = arith.constant 0 : index
    %c0_86 = arith.constant 0 : index
    %84 = vector.load %arg2[%c0_84, %c7, %c0_85, %c0_86] : memref<1x14x14x256xf32, #tpu.memory_space<vmem>>, vector<1x1x14x128xf32>
    %85 = vector.shape_cast %84 : vector<1x1x14x128xf32> to vector<14x128xf32>
    %86 = tpu.transpose %85, [1, 0] : vector<14x128xf32> -> vector<128x14xf32>
    %c0_87 = arith.constant 0 : index
    %c0_88 = arith.constant 0 : index
    %c98 = arith.constant 98 : index
    %87 = vector.load %arg3[%c0_87, %c0_88, %c98] : memref<1x256x196xf32, #tpu.memory_space<vmem>>, vector<1x128x14xf32>
    %88 = vector.shape_cast %87 : vector<1x128x14xf32> to vector<128x14xf32>
    %89 = vector.shape_cast %86 : vector<128x14xf32> to vector<1x128x14xf32>
    tpu.vector_store %arg3[%c0_87, %c0_88, %c98], %89 {strides = array<i32>} : memref<1x256x196xf32, #tpu.memory_space<vmem>>, vector<1x128x14xf32>,
    %c0_89 = arith.constant 0 : index
    %c7_90 = arith.constant 7 : index
    %c0_91 = arith.constant 0 : index
    %c128_92 = arith.constant 128 : index
    %90 = vector.load %arg2[%c0_89, %c7_90, %c0_91, %c128_92] : memref<1x14x14x256xf32, #tpu.memory_space<vmem>>, vector<1x1x14x128xf32>
    %91 = vector.shape_cast %90 : vector<1x1x14x128xf32> to vector<14x128xf32>
    %92 = tpu.transpose %91, [1, 0] : vector<14x128xf32> -> vector<128x14xf32>
    %c0_93 = arith.constant 0 : index
    %c128_94 = arith.constant 128 : index
    %c98_95 = arith.constant 98 : index
    %93 = vector.load %arg3[%c0_93, %c128_94, %c98_95] : memref<1x256x196xf32, #tpu.memory_space<vmem>>, vector<1x128x14xf32>
    %94 = vector.shape_cast %93 : vector<1x128x14xf32> to vector<128x14xf32>
    %95 = vector.shape_cast %92 : vector<128x14xf32> to vector<1x128x14xf32>
    tpu.vector_store %arg3[%c0_93, %c128_94, %c98_95], %95 {strides = array<i32>} : memref<1x256x196xf32, #tpu.memory_space<vmem>>, vector<1x128x14xf32>,
    %c0_96 = arith.constant 0 : index
    %c8 = arith.constant 8 : index
    %c0_97 = arith.constant 0 : index
    %c0_98 = arith.constant 0 : index
    %96 = vector.load %arg2[%c0_96, %c8, %c0_97, %c0_98] : memref<1x14x14x256xf32, #tpu.memory_space<vmem>>, vector<1x1x14x128xf32>
    %97 = vector.shape_cast %96 : vector<1x1x14x128xf32> to vector<14x128xf32>
    %98 = tpu.transpose %97, [1, 0] : vector<14x128xf32> -> vector<128x14xf32>
    %c0_99 = arith.constant 0 : index
    %c0_100 = arith.constant 0 : index
    %c112 = arith.constant 112 : index
    %99 = vector.load %arg3[%c0_99, %c0_100, %c112] : memref<1x256x196xf32, #tpu.memory_space<vmem>>, vector<1x128x14xf32>
    %100 = vector.shape_cast %99 : vector<1x128x14xf32> to vector<128x14xf32>
    %101 = vector.shape_cast %98 : vector<128x14xf32> to vector<1x128x14xf32>
    tpu.vector_store %arg3[%c0_99, %c0_100, %c112], %101 {strides = array<i32>} : memref<1x256x196xf32, #tpu.memory_space<vmem>>, vector<1x128x14xf32>,
    %c0_101 = arith.constant 0 : index
    %c8_102 = arith.constant 8 : index
    %c0_103 = arith.constant 0 : index
    %c128_104 = arith.constant 128 : index
    %102 = vector.load %arg2[%c0_101, %c8_102, %c0_103, %c128_104] : memref<1x14x14x256xf32, #tpu.memory_space<vmem>>, vector<1x1x14x128xf32>
    %103 = vector.shape_cast %102 : vector<1x1x14x128xf32> to vector<14x128xf32>
    %104 = tpu.transpose %103, [1, 0] : vector<14x128xf32> -> vector<128x14xf32>
    %c0_105 = arith.constant 0 : index
    %c128_106 = arith.constant 128 : index
    %c112_107 = arith.constant 112 : index
    %105 = vector.load %arg3[%c0_105, %c128_106, %c112_107] : memref<1x256x196xf32, #tpu.memory_space<vmem>>, vector<1x128x14xf32>
    %106 = vector.shape_cast %105 : vector<1x128x14xf32> to vector<128x14xf32>
    %107 = vector.shape_cast %104 : vector<128x14xf32> to vector<1x128x14xf32>
    tpu.vector_store %arg3[%c0_105, %c128_106, %c112_107], %107 {strides = array<i32>} : memref<1x256x196xf32, #tpu.memory_space<vmem>>, vector<1x128x14xf32>,
    %c0_108 = arith.constant 0 : index
    %c9 = arith.constant 9 : index
    %c0_109 = arith.constant 0 : index
    %c0_110 = arith.constant 0 : index
    %108 = vector.load %arg2[%c0_108, %c9, %c0_109, %c0_110] : memref<1x14x14x256xf32, #tpu.memory_space<vmem>>, vector<1x1x14x128xf32>
    %109 = vector.shape_cast %108 : vector<1x1x14x128xf32> to vector<14x128xf32>
    %110 = tpu.transpose %109, [1, 0] : vector<14x128xf32> -> vector<128x14xf32>
    %c0_111 = arith.constant 0 : index
    %c0_112 = arith.constant 0 : index
    %c126 = arith.constant 126 : index
    %111 = vector.load %arg3[%c0_111, %c0_112, %c126] : memref<1x256x196xf32, #tpu.memory_space<vmem>>, vector<1x128x14xf32>
    %112 = vector.shape_cast %111 : vector<1x128x14xf32> to vector<128x14xf32>
    %113 = vector.shape_cast %110 : vector<128x14xf32> to vector<1x128x14xf32>
    tpu.vector_store %arg3[%c0_111, %c0_112, %c126], %113 {strides = array<i32>} : memref<1x256x196xf32, #tpu.memory_space<vmem>>, vector<1x128x14xf32>,
    %c0_113 = arith.constant 0 : index
    %c9_114 = arith.constant 9 : index
    %c0_115 = arith.constant 0 : index
    %c128_116 = arith.constant 128 : index
    %114 = vector.load %arg2[%c0_113, %c9_114, %c0_115, %c128_116] : memref<1x14x14x256xf32, #tpu.memory_space<vmem>>, vector<1x1x14x128xf32>
    %115 = vector.shape_cast %114 : vector<1x1x14x128xf32> to vector<14x128xf32>
    %116 = tpu.transpose %115, [1, 0] : vector<14x128xf32> -> vector<128x14xf32>
    %c0_117 = arith.constant 0 : index
    %c128_118 = arith.constant 128 : index
    %c126_119 = arith.constant 126 : index
    %117 = vector.load %arg3[%c0_117, %c128_118, %c126_119] : memref<1x256x196xf32, #tpu.memory_space<vmem>>, vector<1x128x14xf32>
    %118 = vector.shape_cast %117 : vector<1x128x14xf32> to vector<128x14xf32>
    %119 = vector.shape_cast %116 : vector<128x14xf32> to vector<1x128x14xf32>
    tpu.vector_store %arg3[%c0_117, %c128_118, %c126_119], %119 {strides = array<i32>} : memref<1x256x196xf32, #tpu.memory_space<vmem>>, vector<1x128x14xf32>,
    %c0_120 = arith.constant 0 : index
    %c10 = arith.constant 10 : index
    %c0_121 = arith.constant 0 : index
    %c0_122 = arith.constant 0 : index
    %120 = vector.load %arg2[%c0_120, %c10, %c0_121, %c0_122] : memref<1x14x14x256xf32, #tpu.memory_space<vmem>>, vector<1x1x14x128xf32>
    %121 = vector.shape_cast %120 : vector<1x1x14x128xf32> to vector<14x128xf32>
    %122 = tpu.transpose %121, [1, 0] : vector<14x128xf32> -> vector<128x14xf32>
    %c0_123 = arith.constant 0 : index
    %c0_124 = arith.constant 0 : index
    %c140 = arith.constant 140 : index
    %123 = vector.load %arg3[%c0_123, %c0_124, %c140] : memref<1x256x196xf32, #tpu.memory_space<vmem>>, vector<1x128x14xf32>
    %124 = vector.shape_cast %123 : vector<1x128x14xf32> to vector<128x14xf32>
    %125 = vector.shape_cast %122 : vector<128x14xf32> to vector<1x128x14xf32>
    tpu.vector_store %arg3[%c0_123, %c0_124, %c140], %125 {strides = array<i32>} : memref<1x256x196xf32, #tpu.memory_space<vmem>>, vector<1x128x14xf32>,
    %c0_125 = arith.constant 0 : index
    %c10_126 = arith.constant 10 : index
    %c0_127 = arith.constant 0 : index
    %c128_128 = arith.constant 128 : index
    %126 = vector.load %arg2[%c0_125, %c10_126, %c0_127, %c128_128] : memref<1x14x14x256xf32, #tpu.memory_space<vmem>>, vector<1x1x14x128xf32>
    %127 = vector.shape_cast %126 : vector<1x1x14x128xf32> to vector<14x128xf32>
    %128 = tpu.transpose %127, [1, 0] : vector<14x128xf32> -> vector<128x14xf32>
    %c0_129 = arith.constant 0 : index
    %c128_130 = arith.constant 128 : index
    %c140_131 = arith.constant 140 : index
    %129 = vector.load %arg3[%c0_129, %c128_130, %c140_131] : memref<1x256x196xf32, #tpu.memory_space<vmem>>, vector<1x128x14xf32>
    %130 = vector.shape_cast %129 : vector<1x128x14xf32> to vector<128x14xf32>
    %131 = vector.shape_cast %128 : vector<128x14xf32> to vector<1x128x14xf32>
    tpu.vector_store %arg3[%c0_129, %c128_130, %c140_131], %131 {strides = array<i32>} : memref<1x256x196xf32, #tpu.memory_space<vmem>>, vector<1x128x14xf32>,
    %c0_132 = arith.constant 0 : index
    %c11 = arith.constant 11 : index
    %c0_133 = arith.constant 0 : index
    %c0_134 = arith.constant 0 : index
    %132 = vector.load %arg2[%c0_132, %c11, %c0_133, %c0_134] : memref<1x14x14x256xf32, #tpu.memory_space<vmem>>, vector<1x1x14x128xf32>
    %133 = vector.shape_cast %132 : vector<1x1x14x128xf32> to vector<14x128xf32>
    %134 = tpu.transpose %133, [1, 0] : vector<14x128xf32> -> vector<128x14xf32>
    %c0_135 = arith.constant 0 : index
    %c0_136 = arith.constant 0 : index
    %c154 = arith.constant 154 : index
    %135 = vector.load %arg3[%c0_135, %c0_136, %c154] : memref<1x256x196xf32, #tpu.memory_space<vmem>>, vector<1x128x14xf32>
    %136 = vector.shape_cast %135 : vector<1x128x14xf32> to vector<128x14xf32>
    %137 = vector.shape_cast %134 : vector<128x14xf32> to vector<1x128x14xf32>
    tpu.vector_store %arg3[%c0_135, %c0_136, %c154], %137 {strides = array<i32>} : memref<1x256x196xf32, #tpu.memory_space<vmem>>, vector<1x128x14xf32>,
    %c0_137 = arith.constant 0 : index
    %c11_138 = arith.constant 11 : index
    %c0_139 = arith.constant 0 : index
    %c128_140 = arith.constant 128 : index
    %138 = vector.load %arg2[%c0_137, %c11_138, %c0_139, %c128_140] : memref<1x14x14x256xf32, #tpu.memory_space<vmem>>, vector<1x1x14x128xf32>
    %139 = vector.shape_cast %138 : vector<1x1x14x128xf32> to vector<14x128xf32>
    %140 = tpu.transpose %139, [1, 0] : vector<14x128xf32> -> vector<128x14xf32>
    %c0_141 = arith.constant 0 : index
    %c128_142 = arith.constant 128 : index
    %c154_143 = arith.constant 154 : index
    %141 = vector.load %arg3[%c0_141, %c128_142, %c154_143] : memref<1x256x196xf32, #tpu.memory_space<vmem>>, vector<1x128x14xf32>
    %142 = vector.shape_cast %141 : vector<1x128x14xf32> to vector<128x14xf32>
    %143 = vector.shape_cast %140 : vector<128x14xf32> to vector<1x128x14xf32>
    tpu.vector_store %arg3[%c0_141, %c128_142, %c154_143], %143 {strides = array<i32>} : memref<1x256x196xf32, #tpu.memory_space<vmem>>, vector<1x128x14xf32>,
    %c0_144 = arith.constant 0 : index
    %c12 = arith.constant 12 : index
    %c0_145 = arith.constant 0 : index
    %c0_146 = arith.constant 0 : index
    %144 = vector.load %arg2[%c0_144, %c12, %c0_145, %c0_146] : memref<1x14x14x256xf32, #tpu.memory_space<vmem>>, vector<1x1x14x128xf32>
    %145 = vector.shape_cast %144 : vector<1x1x14x128xf32> to vector<14x128xf32>
    %146 = tpu.transpose %145, [1, 0] : vector<14x128xf32> -> vector<128x14xf32>
    %c0_147 = arith.constant 0 : index
    %c0_148 = arith.constant 0 : index
    %c168 = arith.constant 168 : index
    %147 = vector.load %arg3[%c0_147, %c0_148, %c168] : memref<1x256x196xf32, #tpu.memory_space<vmem>>, vector<1x128x14xf32>
    %148 = vector.shape_cast %147 : vector<1x128x14xf32> to vector<128x14xf32>
    %149 = vector.shape_cast %146 : vector<128x14xf32> to vector<1x128x14xf32>
    tpu.vector_store %arg3[%c0_147, %c0_148, %c168], %149 {strides = array<i32>} : memref<1x256x196xf32, #tpu.memory_space<vmem>>, vector<1x128x14xf32>,
    %c0_149 = arith.constant 0 : index
    %c12_150 = arith.constant 12 : index
    %c0_151 = arith.constant 0 : index
    %c128_152 = arith.constant 128 : index
    %150 = vector.load %arg2[%c0_149, %c12_150, %c0_151, %c128_152] : memref<1x14x14x256xf32, #tpu.memory_space<vmem>>, vector<1x1x14x128xf32>
    %151 = vector.shape_cast %150 : vector<1x1x14x128xf32> to vector<14x128xf32>
    %152 = tpu.transpose %151, [1, 0] : vector<14x128xf32> -> vector<128x14xf32>
    %c0_153 = arith.constant 0 : index
    %c128_154 = arith.constant 128 : index
    %c168_155 = arith.constant 168 : index
    %153 = vector.load %arg3[%c0_153, %c128_154, %c168_155] : memref<1x256x196xf32, #tpu.memory_space<vmem>>, vector<1x128x14xf32>
    %154 = vector.shape_cast %153 : vector<1x128x14xf32> to vector<128x14xf32>
    %155 = vector.shape_cast %152 : vector<128x14xf32> to vector<1x128x14xf32>
    tpu.vector_store %arg3[%c0_153, %c128_154, %c168_155], %155 {strides = array<i32>} : memref<1x256x196xf32, #tpu.memory_space<vmem>>, vector<1x128x14xf32>,
    %c0_156 = arith.constant 0 : index
    %c13 = arith.constant 13 : index
    %c0_157 = arith.constant 0 : index
    %c0_158 = arith.constant 0 : index
    %156 = vector.load %arg2[%c0_156, %c13, %c0_157, %c0_158] : memref<1x14x14x256xf32, #tpu.memory_space<vmem>>, vector<1x1x14x128xf32>
    %157 = vector.shape_cast %156 : vector<1x1x14x128xf32> to vector<14x128xf32>
    %158 = tpu.transpose %157, [1, 0] : vector<14x128xf32> -> vector<128x14xf32>
    %c0_159 = arith.constant 0 : index
    %c0_160 = arith.constant 0 : index
    %c182 = arith.constant 182 : index
    %159 = vector.load %arg3[%c0_159, %c0_160, %c182] : memref<1x256x196xf32, #tpu.memory_space<vmem>>, vector<1x128x14xf32>
    %160 = vector.shape_cast %159 : vector<1x128x14xf32> to vector<128x14xf32>
    %161 = vector.shape_cast %158 : vector<128x14xf32> to vector<1x128x14xf32>
    tpu.vector_store %arg3[%c0_159, %c0_160, %c182], %161 {strides = array<i32>} : memref<1x256x196xf32, #tpu.memory_space<vmem>>, vector<1x128x14xf32>,
    %c0_161 = arith.constant 0 : index
    %c13_162 = arith.constant 13 : index
    %c0_163 = arith.constant 0 : index
    %c128_164 = arith.constant 128 : index
    %162 = vector.load %arg2[%c0_161, %c13_162, %c0_163, %c128_164] : memref<1x14x14x256xf32, #tpu.memory_space<vmem>>, vector<1x1x14x128xf32>
    %163 = vector.shape_cast %162 : vector<1x1x14x128xf32> to vector<14x128xf32>
    %164 = tpu.transpose %163, [1, 0] : vector<14x128xf32> -> vector<128x14xf32>
    %c0_165 = arith.constant 0 : index
    %c128_166 = arith.constant 128 : index
    %c182_167 = arith.constant 182 : index
    %165 = vector.load %arg3[%c0_165, %c128_166, %c182_167] : memref<1x256x196xf32, #tpu.memory_space<vmem>>, vector<1x128x14xf32>
    %166 = vector.shape_cast %165 : vector<1x128x14xf32> to vector<128x14xf32>
    %167 = vector.shape_cast %164 : vector<128x14xf32> to vector<1x128x14xf32>
    tpu.vector_store %arg3[%c0_165, %c128_166, %c182_167], %167 {strides = array<i32>} : memref<1x256x196xf32, #tpu.memory_space<vmem>>, vector<1x128x14xf32>,
    return
  }
  func.func @transform_0(%arg0: i32, %arg1: i32) -> (i32, i32, i32, i32) {
    %c0_i32 = arith.constant 0 : i32
    %c0_i32_0 = arith.constant 0 : i32
    %c0_i32_1 = arith.constant 0 : i32
    return %arg1, %c0_i32, %c0_i32_0, %arg0 : i32, i32, i32, i32
  }
  func.func @transform_1(%arg0: i32, %arg1: i32) -> (i32, i32, i32) {
    %c0_i32 = arith.constant 0 : i32
    %c0_i32_0 = arith.constant 0 : i32
    return %arg1, %arg0, %c0_i32 : i32, i32, i32
  }
}

</mosaic_0001>

<llo_original>
// kernel: permute_nhwc_to_nchw.1
$region0: #{permute_nhwc_to_nchw.1}
  #allocation0 [shape = 'u32[]', space=smem, size = 0x4, offset = 0x4, fixed_abs, tag = 'smem constant byte address 0x4 - core index']
  #allocation1 [shape = 'u32[144,128]{1,0:T(1,128)}', space=vmem, size = 0x12000, scoped, tag = 'internal scratch']
  %s0 = inlined_call_operand.vmem [shape: f32[2,14,14,256], index: 0, kind: input, shape index: {}]
  %s1 = inlined_call_operand.vmem [shape: f32[2,256,196], index: 1, kind: output, shape index: {}]
  %s2 = sld [smem:[#allocation0]]
  $region37: #{permute_nhwc_to_nchw.1} parent=0
    _
  %s4 = ssub.s32 1, %s2
  %s5 = scalar_select 0, %s4, %s2
  loop: start=0, step=1, limit=4
  $region2: #{permute_nhwc_to_nchw.1} parent=0 // loop_pre_header
    _
  $region3: #{permute_nhwc_to_nchw.1} parent=0 // loop_header
    %s7 = sphi 0, %s11
    %p8 = scmp.ge.s32.totalorder %s7, 4
    %s14 = sphi 0, %s26
    %s15 = sphi 0, %s22
    %s16 = sphi 0, %s14
    %s17 = sphi 0, %s15
    %s18 = sphi 0, %s16
    %s19 = sphi 0, %s17
    %s31 = sphi 0, %s33
    %s34 = sphi 0, %s31
    %s35 = sphi 0, %s34
    %s51 = sphi 0, %s35
    %s59 = sphi 0, %s61
    %s62 = sphi 0, %s59
    %s63 = sphi 0, %s62
    %s79 = sphi 0, %s63
  $region4: #{permute_nhwc_to_nchw.1} parent=0 // loop_header_branch
    %10 = sbr.rel (%p8) target = $region8
  $region5: #{permute_nhwc_to_nchw.1} parent=0 // loop_body
    %s12 = ssub.s32 %s7, 1
    %s13 = ssub.s32 %s7, 2
    %s20 = sadd.s32 1, %s15
    %p21 = scmp.ge.s32.totalorder %s20, 2
    %s22 = scalar_select %p21, 0, %s20
    %s23 = sadd.s32 1, %s14
    %s24 = scalar_select %p21, %s23, %s14
    %p25 = scmp.ge.s32.totalorder %s24, 1
    %s26 = scalar_select %p25, 0, %s24
    %s27 = ssub.s32 %s15, %s22
    %s28 = ssub.s32 %s14, %s26
    %s29 = sor.u32 %s27, %s28
    %p30 = scmp.eq.s32.totalorder %s29, 0
    %s32 = sadd.s32 %s31, 1
    %s33 = scalar_select %p30, %s31, %s32
    %p36 = pneg %p30
    %p37 = scmp.eq.s32.totalorder %s7, 1
    %p38 = por %p36, %p37
    %p39 = scmp.ne.s32.totalorder %s31, %s34
    %p40 = scmp.eq.s32.totalorder %s7, 0
    %p41 = por %p39, %p40
    %p42 = scmp.ne.s32.totalorder %s31, %s34
    %p43 = scmp.eq.s32.totalorder %s12, 1
    %p44 = por %p42, %p43
    %p45 = scmp.ne.s32.totalorder %s34, %s35
    %p46 = scmp.eq.s32.totalorder %s12, 0
    %p47 = por %p45, %p46
    %p48 = scmp.ne.s32.totalorder %s34, %s35
    %p49 = scmp.eq.s32.totalorder %s13, 1
    %p50 = por %p48, %p49
    %p52 = scmp.ne.s32.totalorder %s35, %s51
    %p53 = scmp.eq.s32.totalorder %s13, 0
    %p54 = por %p52, %p53
    %s55 = ssub.s32 %s15, %s22
    %s56 = ssub.s32 %s14, %s26
    %s57 = sor.u32 %s55, %s56
    %p58 = scmp.eq.s32.totalorder %s57, 0
    %s60 = sadd.s32 %s59, 1
    %s61 = scalar_select %p58, %s59, %s60
    %p64 = pneg %p58
    %p65 = scmp.eq.s32.totalorder %s7, 1
    %p66 = por %p64, %p65
    %p67 = scmp.ne.s32.totalorder %s59, %s62
    %p68 = scmp.eq.s32.totalorder %s7, 0
    %p69 = por %p67, %p68
    %p70 = scmp.ne.s32.totalorder %s59, %s62
    %p71 = scmp.eq.s32.totalorder %s12, 1
    %p72 = por %p70, %p71
    %p73 = scmp.ne.s32.totalorder %s62, %s63
    %p74 = scmp.eq.s32.totalorder %s12, 0
    %p75 = por %p73, %p74
    %p76 = scmp.ne.s32.totalorder %s62, %s63
    %p77 = scmp.eq.s32.totalorder %s13, 1
    %p78 = por %p76, %p77
    %p80 = scmp.ne.s32.totalorder %s63, %s79
    %p81 = scmp.eq.s32.totalorder %s13, 0
    %p82 = por %p80, %p81
    %p83 = scmp.le.s32.totalorder 1, %s7
    %p84 = scmp.lt.s32.totalorder %s7, 3
    %p85 = pnand %p83, %p84
    %p86 = pneg %p85
    // Predicated region
    $region9: #{permute_nhwc_to_nchw.1} parent=5 // pred_check
      _
    $region10: #{permute_nhwc_to_nchw.1} parent=5 // pred_check_branch
      %88 = sbr.rel (%p85) target = $region12
    $region11: #{permute_nhwc_to_nchw.1} parent=5 // pred_region
      %s89 = ssub.s32 %s7, 1
    $region12: #{permute_nhwc_to_nchw.1} parent=5 // pred_fallthru
      _
    %p90 = scmp.lt.s32.totalorder %s7, 2
    // Predicated region
    $region13: #{permute_nhwc_to_nchw.1} parent=5 // pred_check
      %p91 = pneg %p90
    $region14: #{permute_nhwc_to_nchw.1} parent=5 // pred_check_branch
      %93 = sbr.rel (%p91) target = $region16
    $region15: #{permute_nhwc_to_nchw.1} parent=5 // pred_region
      // Predicated region
      $region17: #{permute_nhwc_to_nchw.1} parent=15 // pred_check
        %p94 = pneg %p41
      $region18: #{permute_nhwc_to_nchw.1} parent=15 // pred_check_branch
        %96 = sbr.rel (%p94) target = $region20
      $region19: #{permute_nhwc_to_nchw.1} parent=15 // pred_region
        %s97 = smul.u32 2, %s14
        %p98 = scmp.lt.s32.totalorder %s15, 1
        %s99 = scalar_select %p98, %s15, 1
        %p100 = scmp.lt.s32.totalorder %s97, 1
        %s101 = scalar_select %p100, %s97, 1
        %s102 = smul.addr %s99, 56
        %s103 = sadd.s32 %s101, %s102
        %s104 = smul.addr %s103, 8
        %s105 = scalar_lea.vmem %s0, %s104
        %s106 = smul.u32 2, %s14
      $region20: #{permute_nhwc_to_nchw.1} parent=15 // pred_fallthru
        _
    $region16: #{permute_nhwc_to_nchw.1} parent=5 // pred_fallthru
      _
    %p107 = scmp.le.s32.totalorder 1, %s7
    %p108 = scmp.lt.s32.totalorder %s7, 3
    %p109 = pnand %p107, %p108
    %p110 = pneg %p109
    // Predicated region
    $region21: #{permute_nhwc_to_nchw.1} parent=5 // pred_check
      _
    $region22: #{permute_nhwc_to_nchw.1} parent=5 // pred_check_branch
      %112 = sbr.rel (%p109) target = $region24
    $region23: #{permute_nhwc_to_nchw.1} parent=5 // pred_region
      %s113 = ssub.s32 %s7, 1
      %s114 = smul.u32 2, %s16
      %p115 = scmp.lt.s32.totalorder %s17, 1
      %s116 = scalar_select %p115, %s17, 1
      %p117 = scmp.lt.s32.totalorder %s114, 1
      %s118 = scalar_select %p117, %s114, 1
      %s119 = smul.addr %s116, 56
      %s120 = sadd.s32 %s118, %s119
      %s121 = smul.addr %s120, 8
      %s122 = scalar_lea.vmem %s0, %s121
      %p123 = pneg %p47
      %p124 = pneg %p44
      %p125 = pneg %p75
      %p126 = pneg %p72
      %s127 = smul.u32 32, %s16
      %p128 = scmp.lt.s32.totalorder %s17, 1
      %s129 = scalar_select %p128, %s17, 1
      %p130 = scmp.lt.s32.totalorder %s127, 31
      %s131 = scalar_select %p130, %s127, 31
      %s132 = smul.addr %s131, 2
      %s133 = smul.addr %s129, 64
      %s134 = sadd.s32 %s132, %s133
      %s135 = smul.addr %s134, 8
      %s136 = scalar_lea.vmem %s1, %s135
      %s137 = smul.u32 2, %s16
      %p138 = scmp.lt.s32.totalorder %s17, 1
      %s139 = scalar_select %p138, %s17, 1
      %p140 = scmp.lt.s32.totalorder %s137, 1
      %s141 = scalar_select %p140, %s137, 1
      %s142 = smul.addr %s139, 56
      %s143 = sadd.s32 %s141, %s142
      %s144 = smul.addr %s143, 8
      %s145 = scalar_lea.vmem %s0, %s144
      %s146 = smul.u32 2, %s16
      %s147 = smul.u32 32, %s16
      %p148 = scmp.lt.s32.totalorder %s17, 1
      %s149 = scalar_select %p148, %s17, 1
      %p150 = scmp.lt.s32.totalorder %s147, 31
      %s151 = scalar_select %p150, %s147, 31
      %s152 = smul.addr %s151, 2
      %s153 = smul.addr %s149, 64
      %s154 = sadd.s32 %s152, %s153
      %s155 = smul.addr %s154, 8
      %s156 = scalar_lea.vmem %s1, %s155
      %s157 = smul.u32 32, %s16
      %v158 = vld [vmem:[%s145] sm:$0xff]
      %v159 = vld [vmem:[%s145 + $0x10] sm:$0x3f]
      %160 = vxpose.xlu0.b32.start [1/16] %v158, 128
      %161 = vxpose.xlu0.b32.cont [2/16] %v159, 128
      %162 = vxpose.xlu0.b32.cont [3/16] 0.0, 128
      %163 = vxpose.xlu0.b32.cont [4/16] 0.0, 128
      %164 = vxpose.xlu0.b32.cont [5/16] 0.0, 128
      %165 = vxpose.xlu0.b32.cont [6/16] 0.0, 128
      %166 = vxpose.xlu0.b32.cont [7/16] 0.0, 128
      %167 = vxpose.xlu0.b32.cont [8/16] 0.0, 128
      %168 = vxpose.xlu0.b32.cont [9/16] 0.0, 128
      %169 = vxpose.xlu0.b32.cont [10/16] 0.0, 128
      %170 = vxpose.xlu0.b32.cont [11/16] 0.0, 128
      %171 = vxpose.xlu0.b32.cont [12/16] 0.0, 128
      %172 = vxpose.xlu0.b32.cont [13/16] 0.0, 128
      %173 = vxpose.xlu0.b32.cont [14/16] 0.0, 128
      %174 = vxpose.xlu0.b32.cont [15/16] 0.0, 128
      %175 = vxpose.xlu0.b32.end [16/16] 0.0, 128
      %v176 = vpop.trf.xlu0
      %v177 = vpop.trf.xlu0
      %v178 = vpop.trf.xlu0
      %v179 = vpop.trf.xlu0
      %v180 = vpop.trf.xlu0
      %v181 = vpop.trf.xlu0
      %v182 = vpop.trf.xlu0
      %v183 = vpop.trf.xlu0
      %v184 = vpop.trf.xlu0
      %v185 = vpop.trf.xlu0
      %v186 = vpop.trf.xlu0
      %v187 = vpop.trf.xlu0
      %v188 = vpop.trf.xlu0
      %v189 = vpop.trf.xlu0
      %v190 = vpop.trf.xlu0
      %v191 = vpop.trf.xlu0
      %vm192 = vcmask 113664
      %193 = vst.msk [vmem:[%s156] sm:$0xff] %vm192, %v176
      %194 = vst.msk [vmem:[%s156 + $0x10] sm:$0xff] %vm192, %v177
      %195 = vst.msk [vmem:[%s156 + $0x20] sm:$0xff] %vm192, %v178
      %196 = vst.msk [vmem:[%s156 + $0x30] sm:$0xff] %vm192, %v179
      %197 = vst.msk [vmem:[%s156 + $0x40] sm:$0xff] %vm192, %v180
      %198 = vst.msk [vmem:[%s156 + $0x50] sm:$0xff] %vm192, %v181
      %199 = vst.msk [vmem:[%s156 + $0x60] sm:$0xff] %vm192, %v182
      %200 = vst.msk [vmem:[%s156 + $0x70] sm:$0xff] %vm192, %v183
      %201 = vst.msk [vmem:[%s156 + $0x80] sm:$0xff] %vm192, %v184
      %202 = vst.msk [vmem:[%s156 + $0x90] sm:$0xff] %vm192, %v185
      %203 = vst.msk [vmem:[%s156 + $0xa0] sm:$0xff] %vm192, %v186
      %204 = vst.msk [vmem:[%s156 + $0xb0] sm:$0xff] %vm192, %v187
      %205 = vst.msk [vmem:[%s156 + $0xc0] sm:$0xff] %vm192, %v188
      %206 = vst.msk [vmem:[%s156 + $0xd0] sm:$0xff] %vm192, %v189
      %207 = vst.msk [vmem:[%s156 + $0xe0] sm:$0xff] %vm192, %v190
      %208 = vst.msk [vmem:[%s156 + $0xf0] sm:$0xff] %vm192, %v191
      %v209 = vld [vmem:[%s145 + $0x8] sm:$0xff]
      %v210 = vld [vmem:[%s145 + $0x18] sm:$0x3f]
      %211 = vxpose.xlu0.b32.start [1/16] %v209, 128
      %212 = vxpose.xlu0.b32.cont [2/16] %v210, 128
      %213 = vxpose.xlu0.b32.cont [3/16] 0.0, 128
      %214 = vxpose.xlu0.b32.cont [4/16] 0.0, 128
      %215 = vxpose.xlu0.b32.cont [5/16] 0.0, 128
      %216 = vxpose.xlu0.b32.cont [6/16] 0.0, 128
      %217 = vxpose.xlu0.b32.cont [7/16] 0.0, 128
      %218 = vxpose.xlu0.b32.cont [8/16] 0.0, 128
      %219 = vxpose.xlu0.b32.cont [9/16] 0.0, 128
      %220 = vxpose.xlu0.b32.cont [10/16] 0.0, 128
      %221 = vxpose.xlu0.b32.cont [11/16] 0.0, 128
      %222 = vxpose.xlu0.b32.cont [12/16] 0.0, 128
      %223 = vxpose.xlu0.b32.cont [13/16] 0.0, 128
      %224 = vxpose.xlu0.b32.cont [14/16] 0.0, 128
      %225 = vxpose.xlu0.b32.cont [15/16] 0.0, 128
      %226 = vxpose.xlu0.b32.end [16/16] 0.0, 128
      %v227 = vpop.trf.xlu0
      %v228 = vpop.trf.xlu0
      %v229 = vpop.trf.xlu0
      %v230 = vpop.trf.xlu0
      %v231 = vpop.trf.xlu0
      %v232 = vpop.trf.xlu0
      %v233 = vpop.trf.xlu0
      %v234 = vpop.trf.xlu0
      %v235 = vpop.trf.xlu0
      %v236 = vpop.trf.xlu0
      %v237 = vpop.trf.xlu0
      %v238 = vpop.trf.xlu0
      %v239 = vpop.trf.xlu0
      %v240 = vpop.trf.xlu0
      %v241 = vpop.trf.xlu0
      %v242 = vpop.trf.xlu0
      %243 = vst.msk [vmem:[%s156 + $0x100] sm:$0xff] %vm192, %v227
      %244 = vst.msk [vmem:[%s156 + $0x110] sm:$0xff] %vm192, %v228
      %245 = vst.msk [vmem:[%s156 + $0x120] sm:$0xff] %vm192, %v229
      %246 = vst.msk [vmem:[%s156 + $0x130] sm:$0xff] %vm192, %v230
      %247 = vst.msk [vmem:[%s156 + $0x140] sm:$0xff] %vm192, %v231
      %248 = vst.msk [vmem:[%s156 + $0x150] sm:$0xff] %vm192, %v232
      %249 = vst.msk [vmem:[%s156 + $0x160] sm:$0xff] %vm192, %v233
      %250 = vst.msk [vmem:[%s156 + $0x170] sm:$0xff] %vm192, %v234
      %251 = vst.msk [vmem:[%s156 + $0x180] sm:$0xff] %vm192, %v235
      %252 = vst.msk [vmem:[%s156 + $0x190] sm:$0xff] %vm192, %v236
      %253 = vst.msk [vmem:[%s156 + $0x1a0] sm:$0xff] %vm192, %v237
      %254 = vst.msk [vmem:[%s156 + $0x1b0] sm:$0xff] %vm192, %v238
      %255 = vst.msk [vmem:[%s156 + $0x1c0] sm:$0xff] %vm192, %v239
      %256 = vst.msk [vmem:[%s156 + $0x1d0] sm:$0xff] %vm192, %v240
      %257 = vst.msk [vmem:[%s156 + $0x1e0] sm:$0xff] %vm192, %v241
      %258 = vst.msk [vmem:[%s156 + $0x1f0] sm:$0xff] %vm192, %v242
      %s259 = scalar_lea.vmem %s145, 32
      %v260 = vld [vmem:[%s259] sm:$0xff]
      %v261 = vld [vmem:[%s259 + $0x10] sm:$0x3f]
      %262 = vxpose.xlu0.b32.start [1/16] %v260, 128
      %263 = vxpose.xlu0.b32.cont [2/16] %v261, 128
      %264 = vxpose.xlu0.b32.cont [3/16] 0.0, 128
      %265 = vxpose.xlu0.b32.cont [4/16] 0.0, 128
      %266 = vxpose.xlu0.b32.cont [5/16] 0.0, 128
      %267 = vxpose.xlu0.b32.cont [6/16] 0.0, 128
      %268 = vxpose.xlu0.b32.cont [7/16] 0.0, 128
      %269 = vxpose.xlu0.b32.cont [8/16] 0.0, 128
      %270 = vxpose.xlu0.b32.cont [9/16] 0.0, 128
      %271 = vxpose.xlu0.b32.cont [10/16] 0.0, 128
      %272 = vxpose.xlu0.b32.cont [11/16] 0.0, 128
      %273 = vxpose.xlu0.b32.cont [12/16] 0.0, 128
      %274 = vxpose.xlu0.b32.cont [13/16] 0.0, 128
      %275 = vxpose.xlu0.b32.cont [14/16] 0.0, 128
      %276 = vxpose.xlu0.b32.cont [15/16] 0.0, 128
      %277 = vxpose.xlu0.b32.end [16/16] 0.0, 128
      %v278 = vpop.trf.xlu0
      %v279 = vpop.trf.xlu0
      %v280 = vpop.trf.xlu0
      %v281 = vpop.trf.xlu0
      %v282 = vpop.trf.xlu0
      %v283 = vpop.trf.xlu0
      %v284 = vpop.trf.xlu0
      %v285 = vpop.trf.xlu0
      %v286 = vpop.trf.xlu0
      %v287 = vpop.trf.xlu0
      %v288 = vpop.trf.xlu0
      %v289 = vpop.trf.xlu0
      %v290 = vpop.trf.xlu0
      %v291 = vpop.trf.xlu0
      %v292 = vpop.trf.xlu0
      %v293 = vpop.trf.xlu0
      %310 = vrot.lane.b32.xlu0 %v278, 14
      %v311 = vpop.permute.xlu0 %310
      %312 = vrot.lane.b32.xlu0 %v279, 14
      %v313 = vpop.permute.xlu0 %312
      %314 = vrot.lane.b32.xlu0 %v280, 14
      %v315 = vpop.permute.xlu0 %314
      %316 = vrot.lane.b32.xlu0 %v281, 14
      %v317 = vpop.permute.xlu0 %316
      %318 = vrot.lane.b32.xlu0 %v282, 14
      %v319 = vpop.permute.xlu0 %318
      %320 = vrot.lane.b32.xlu0 %v283, 14
      %v321 = vpop.permute.xlu0 %320
      %322 = vrot.lane.b32.xlu0 %v284, 14
      %v323 = vpop.permute.xlu0 %322
      %324 = vrot.lane.b32.xlu0 %v285, 14
      %v325 = vpop.permute.xlu0 %324
      %326 = vrot.lane.b32.xlu0 %v286, 14
      %v327 = vpop.permute.xlu0 %326
      %328 = vrot.lane.b32.xlu0 %v287, 14
      %v329 = vpop.permute.xlu0 %328
      %330 = vrot.lane.b32.xlu0 %v288, 14
      %v331 = vpop.permute.xlu0 %330
      %332 = vrot.lane.b32.xlu0 %v289, 14
      %v333 = vpop.permute.xlu0 %332
      %334 = vrot.lane.b32.xlu0 %v290, 14
      %v335 = vpop.permute.xlu0 %334
      %336 = vrot.lane.b32.xlu0 %v291, 14
      %v337 = vpop.permute.xlu0 %336
      %338 = vrot.lane.b32.xlu0 %v292, 14
      %v339 = vpop.permute.xlu0 %338
      %340 = vrot.lane.b32.xlu0 %v293, 14
      %v341 = vpop.permute.xlu0 %340
      %vm358 = vcmask 228464
      %359 = vst.msk [vmem:[%s156] sm:$0xff] %vm358, %v311
      %360 = vst.msk [vmem:[%s156 + $0x10] sm:$0xff] %vm358, %v313
      %361 = vst.msk [vmem:[%s156 + $0x20] sm:$0xff] %vm358, %v315
      %362 = vst.msk [vmem:[%s156 + $0x30] sm:$0xff] %vm358, %v317
      %363 = vst.msk [vmem:[%s156 + $0x40] sm:$0xff] %vm358, %v319
      %364 = vst.msk [vmem:[%s156 + $0x50] sm:$0xff] %vm358, %v321
      %365 = vst.msk [vmem:[%s156 + $0x60] sm:$0xff] %vm358, %v323
      %366 = vst.msk [vmem:[%s156 + $0x70] sm:$0xff] %vm358, %v325
      %367 = vst.msk [vmem:[%s156 + $0x80] sm:$0xff] %vm358, %v327
      %368 = vst.msk [vmem:[%s156 + $0x90] sm:$0xff] %vm358, %v329
      %369 = vst.msk [vmem:[%s156 + $0xa0] sm:$0xff] %vm358, %v331
      %370 = vst.msk [vmem:[%s156 + $0xb0] sm:$0xff] %vm358, %v333
      %371 = vst.msk [vmem:[%s156 + $0xc0] sm:$0xff] %vm358, %v335
      %372 = vst.msk [vmem:[%s156 + $0xd0] sm:$0xff] %vm358, %v337
      %373 = vst.msk [vmem:[%s156 + $0xe0] sm:$0xff] %vm358, %v339
      %374 = vst.msk [vmem:[%s156 + $0xf0] sm:$0xff] %vm358, %v341
      %v375 = vld [vmem:[%s259 + $0x8] sm:$0xff]
      %v376 = vld [vmem:[%s259 + $0x18] sm:$0x3f]
      %377 = vxpose.xlu0.b32.start [1/16] %v375, 128
      %378 = vxpose.xlu0.b32.cont [2/16] %v376, 128
      %379 = vxpose.xlu0.b32.cont [3/16] 0.0, 128
      %380 = vxpose.xlu0.b32.cont [4/16] 0.0, 128
      %381 = vxpose.xlu0.b32.cont [5/16] 0.0, 128
      %382 = vxpose.xlu0.b32.cont [6/16] 0.0, 128
      %383 = vxpose.xlu0.b32.cont [7/16] 0.0, 128
      %384 = vxpose.xlu0.b32.cont [8/16] 0.0, 128
      %385 = vxpose.xlu0.b32.cont [9/16] 0.0, 128
      %386 = vxpose.xlu0.b32.cont [10/16] 0.0, 128
      %387 = vxpose.xlu0.b32.cont [11/16] 0.0, 128
      %388 = vxpose.xlu0.b32.cont [12/16] 0.0, 128
      %389 = vxpose.xlu0.b32.cont [13/16] 0.0, 128
      %390 = vxpose.xlu0.b32.cont [14/16] 0.0, 128
      %391 = vxpose.xlu0.b32.cont [15/16] 0.0, 128
      %392 = vxpose.xlu0.b32.end [16/16] 0.0, 128
      %v393 = vpop.trf.xlu0
      %v394 = vpop.trf.xlu0
      %v395 = vpop.trf.xlu0
      %v396 = vpop.trf.xlu0
      %v397 = vpop.trf.xlu0
      %v398 = vpop.trf.xlu0
      %v399 = vpop.trf.xlu0
      %v400 = vpop.trf.xlu0
      %v401 = vpop.trf.xlu0
      %v402 = vpop.trf.xlu0
      %v403 = vpop.trf.xlu0
      %v404 = vpop.trf.xlu0
      %v405 = vpop.trf.xlu0
      %v406 = vpop.trf.xlu0
      %v407 = vpop.trf.xlu0
      %v408 = vpop.trf.xlu0
      %425 = vrot.lane.b32.xlu0 %v393, 14
      %v426 = vpop.permute.xlu0 %425
      %427 = vrot.lane.b32.xlu0 %v394, 14
      %v428 = vpop.permute.xlu0 %427
      %429 = vrot.lane.b32.xlu0 %v395, 14
      %v430 = vpop.permute.xlu0 %429
      %431 = vrot.lane.b32.xlu0 %v396, 14
      %v432 = vpop.permute.xlu0 %431
      %433 = vrot.lane.b32.xlu0 %v397, 14
      %v434 = vpop.permute.xlu0 %433
      %435 = vrot.lane.b32.xlu0 %v398, 14
      %v436 = vpop.permute.xlu0 %435
      %437 = vrot.lane.b32.xlu0 %v399, 14
      %v438 = vpop.permute.xlu0 %437
      %439 = vrot.lane.b32.xlu0 %v400, 14
      %v440 = vpop.permute.xlu0 %439
      %441 = vrot.lane.b32.xlu0 %v401, 14
      %v442 = vpop.permute.xlu0 %441
      %443 = vrot.lane.b32.xlu0 %v402, 14
      %v444 = vpop.permute.xlu0 %443
      %445 = vrot.lane.b32.xlu0 %v403, 14
      %v446 = vpop.permute.xlu0 %445
      %447 = vrot.lane.b32.xlu0 %v404, 14
      %v448 = vpop.permute.xlu0 %447
      %449 = vrot.lane.b32.xlu0 %v405, 14
      %v450 = vpop.permute.xlu0 %449
      %451 = vrot.lane.b32.xlu0 %v406, 14
      %v452 = vpop.permute.xlu0 %451
      %453 = vrot.lane.b32.xlu0 %v407, 14
      %v454 = vpop.permute.xlu0 %453
      %455 = vrot.lane.b32.xlu0 %v408, 14
      %v456 = vpop.permute.xlu0 %455
      %473 = vst.msk [vmem:[%s156 + $0x100] sm:$0xff] %vm358, %v426
      %474 = vst.msk [vmem:[%s156 + $0x110] sm:$0xff] %vm358, %v428
      %475 = vst.msk [vmem:[%s156 + $0x120] sm:$0xff] %vm358, %v430
      %476 = vst.msk [vmem:[%s156 + $0x130] sm:$0xff] %vm358, %v432
      %477 = vst.msk [vmem:[%s156 + $0x140] sm:$0xff] %vm358, %v434
      %478 = vst.msk [vmem:[%s156 + $0x150] sm:$0xff] %vm358, %v436
      %479 = vst.msk [vmem:[%s156 + $0x160] sm:$0xff] %vm358, %v438
      %480 = vst.msk [vmem:[%s156 + $0x170] sm:$0xff] %vm358, %v440
      %481 = vst.msk [vmem:[%s156 + $0x180] sm:$0xff] %vm358, %v442
      %482 = vst.msk [vmem:[%s156 + $0x190] sm:$0xff] %vm358, %v444
      %483 = vst.msk [vmem:[%s156 + $0x1a0] sm:$0xff] %vm358, %v446
      %484 = vst.msk [vmem:[%s156 + $0x1b0] sm:$0xff] %vm358, %v448
      %485 = vst.msk [vmem:[%s156 + $0x1c0] sm:$0xff] %vm358, %v450
      %486 = vst.msk [vmem:[%s156 + $0x1d0] sm:$0xff] %vm358, %v452
      %487 = vst.msk [vmem:[%s156 + $0x1e0] sm:$0xff] %vm358, %v454
      %488 = vst.msk [vmem:[%s156 + $0x1f0] sm:$0xff] %vm358, %v456
      %s489 = scalar_lea.vmem %s145, 64
      %v490 = vld [vmem:[%s489] sm:$0xff]
      %v491 = vld [vmem:[%s489 + $0x10] sm:$0x3f]
      %492 = vxpose.xlu0.b32.start [1/16] %v490, 128
      %493 = vxpose.xlu0.b32.cont [2/16] %v491, 128
      %494 = vxpose.xlu0.b32.cont [3/16] 0.0, 128
      %495 = vxpose.xlu0.b32.cont [4/16] 0.0, 128
      %496 = vxpose.xlu0.b32.cont [5/16] 0.0, 128
      %497 = vxpose.xlu0.b32.cont [6/16] 0.0, 128
      %498 = vxpose.xlu0.b32.cont [7/16] 0.0, 128
      %499 = vxpose.xlu0.b32.cont [8/16] 0.0, 128
      %500 = vxpose.xlu0.b32.cont [9/16] 0.0, 128
      %501 = vxpose.xlu0.b32.cont [10/16] 0.0, 128
      %502 = vxpose.xlu0.b32.cont [11/16] 0.0, 128
      %503 = vxpose.xlu0.b32.cont [12/16] 0.0, 128
      %504 = vxpose.xlu0.b32.cont [13/16] 0.0, 128
      %505 = vxpose.xlu0.b32.cont [14/16] 0.0, 128
      %506 = vxpose.xlu0.b32.cont [15/16] 0.0, 128
      %507 = vxpose.xlu0.b32.end [16/16] 0.0, 128
      %v508 = vpop.trf.xlu0
      %v509 = vpop.trf.xlu0
      %v510 = vpop.trf.xlu0
      %v511 = vpop.trf.xlu0
      %v512 = vpop.trf.xlu0
      %v513 = vpop.trf.xlu0
      %v514 = vpop.trf.xlu0
      %v515 = vpop.trf.xlu0
      %v516 = vpop.trf.xlu0
      %v517 = vpop.trf.xlu0
      %v518 = vpop.trf.xlu0
      %v519 = vpop.trf.xlu0
      %v520 = vpop.trf.xlu0
      %v521 = vpop.trf.xlu0
      %v522 = vpop.trf.xlu0
      %v523 = vpop.trf.xlu0
      %540 = vrot.lane.b32.xlu0 %v508, 28
      %v541 = vpop.permute.xlu0 %540
      %542 = vrot.lane.b32.xlu0 %v509, 28
      %v543 = vpop.permute.xlu0 %542
      %544 = vrot.lane.b32.xlu0 %v510, 28
      %v545 = vpop.permute.xlu0 %544
      %546 = vrot.lane.b32.xlu0 %v511, 28
      %v547 = vpop.permute.xlu0 %546
      %548 = vrot.lane.b32.xlu0 %v512, 28
      %v549 = vpop.permute.xlu0 %548
      %550 = vrot.lane.b32.xlu0 %v513, 28
      %v551 = vpop.permute.xlu0 %550
      %552 = vrot.lane.b32.xlu0 %v514, 28
      %v553 = vpop.permute.xlu0 %552
      %554 = vrot.lane.b32.xlu0 %v515, 28
      %v555 = vpop.permute.xlu0 %554
      %556 = vrot.lane.b32.xlu0 %v516, 28
      %v557 = vpop.permute.xlu0 %556
      %558 = vrot.lane.b32.xlu0 %v517, 28
      %v559 = vpop.permute.xlu0 %558
      %560 = vrot.lane.b32.xlu0 %v518, 28
      %v561 = vpop.permute.xlu0 %560
      %562 = vrot.lane.b32.xlu0 %v519, 28
      %v563 = vpop.permute.xlu0 %562
      %564 = vrot.lane.b32.xlu0 %v520, 28
      %v565 = vpop.permute.xlu0 %564
      %566 = vrot.lane.b32.xlu0 %v521, 28
      %v567 = vpop.permute.xlu0 %566
      %568 = vrot.lane.b32.xlu0 %v522, 28
      %v569 = vpop.permute.xlu0 %568
      %570 = vrot.lane.b32.xlu0 %v523, 28
      %v571 = vpop.permute.xlu0 %570
      %vm588 = vcmask 343264
      %589 = vst.msk [vmem:[%s156] sm:$0xff] %vm588, %v541
      %590 = vst.msk [vmem:[%s156 + $0x10] sm:$0xff] %vm588, %v543
      %591 = vst.msk [vmem:[%s156 + $0x20] sm:$0xff] %vm588, %v545
      %592 = vst.msk [vmem:[%s156 + $0x30] sm:$0xff] %vm588, %v547
      %593 = vst.msk [vmem:[%s156 + $0x40] sm:$0xff] %vm588, %v549
      %594 = vst.msk [vmem:[%s156 + $0x50] sm:$0xff] %vm588, %v551
      %595 = vst.msk [vmem:[%s156 + $0x60] sm:$0xff] %vm588, %v553
      %596 = vst.msk [vmem:[%s156 + $0x70] sm:$0xff] %vm588, %v555
      %597 = vst.msk [vmem:[%s156 + $0x80] sm:$0xff] %vm588, %v557
      %598 = vst.msk [vmem:[%s156 + $0x90] sm:$0xff] %vm588, %v559
      %599 = vst.msk [vmem:[%s156 + $0xa0] sm:$0xff] %vm588, %v561
      %600 = vst.msk [vmem:[%s156 + $0xb0] sm:$0xff] %vm588, %v563
      %601 = vst.msk [vmem:[%s156 + $0xc0] sm:$0xff] %vm588, %v565
      %602 = vst.msk [vmem:[%s156 + $0xd0] sm:$0xff] %vm588, %v567
      %603 = vst.msk [vmem:[%s156 + $0xe0] sm:$0xff] %vm588, %v569
      %604 = vst.msk [vmem:[%s156 + $0xf0] sm:$0xff] %vm588, %v571
      %v605 = vld [vmem:[%s489 + $0x8] sm:$0xff]
      %v606 = vld [vmem:[%s489 + $0x18] sm:$0x3f]
      %607 = vxpose.xlu0.b32.start [1/16] %v605, 128
      %608 = vxpose.xlu0.b32.cont [2/16] %v606, 128
      %609 = vxpose.xlu0.b32.cont [3/16] 0.0, 128
      %610 = vxpose.xlu0.b32.cont [4/16] 0.0, 128
      %611 = vxpose.xlu0.b32.cont [5/16] 0.0, 128
      %612 = vxpose.xlu0.b32.cont [6/16] 0.0, 128
      %613 = vxpose.xlu0.b32.cont [7/16] 0.0, 128
      %614 = vxpose.xlu0.b32.cont [8/16] 0.0, 128
      %615 = vxpose.xlu0.b32.cont [9/16] 0.0, 128
      %616 = vxpose.xlu0.b32.cont [10/16] 0.0, 128
      %617 = vxpose.xlu0.b32.cont [11/16] 0.0, 128
      %618 = vxpose.xlu0.b32.cont [12/16] 0.0, 128
      %619 = vxpose.xlu0.b32.cont [13/16] 0.0, 128
      %620 = vxpose.xlu0.b32.cont [14/16] 0.0, 128
      %621 = vxpose.xlu0.b32.cont [15/16] 0.0, 128
      %622 = vxpose.xlu0.b32.end [16/16] 0.0, 128
      %v623 = vpop.trf.xlu0
      %v624 = vpop.trf.xlu0
      %v625 = vpop.trf.xlu0
      %v626 = vpop.trf.xlu0
      %v627 = vpop.trf.xlu0
      %v628 = vpop.trf.xlu0
      %v629 = vpop.trf.xlu0
      %v630 = vpop.trf.xlu0
      %v631 = vpop.trf.xlu0
      %v632 = vpop.trf.xlu0
      %v633 = vpop.trf.xlu0
      %v634 = vpop.trf.xlu0
      %v635 = vpop.trf.xlu0
      %v636 = vpop.trf.xlu0
      %v637 = vpop.trf.xlu0
      %v638 = vpop.trf.xlu0
      %655 = vrot.lane.b32.xlu0 %v623, 28
      %v656 = vpop.permute.xlu0 %655
      %657 = vrot.lane.b32.xlu0 %v624, 28
      %v658 = vpop.permute.xlu0 %657
      %659 = vrot.lane.b32.xlu0 %v625, 28
      %v660 = vpop.permute.xlu0 %659
      %661 = vrot.lane.b32.xlu0 %v626, 28
      %v662 = vpop.permute.xlu0 %661
      %663 = vrot.lane.b32.xlu0 %v627, 28
      %v664 = vpop.permute.xlu0 %663
      %665 = vrot.lane.b32.xlu0 %v628, 28
      %v666 = vpop.permute.xlu0 %665
      %667 = vrot.lane.b32.xlu0 %v629, 28
      %v668 = vpop.permute.xlu0 %667
      %669 = vrot.lane.b32.xlu0 %v630, 28
      %v670 = vpop.permute.xlu0 %669
      %671 = vrot.lane.b32.xlu0 %v631, 28
      %v672 = vpop.permute.xlu0 %671
      %673 = vrot.lane.b32.xlu0 %v632, 28
      %v674 = vpop.permute.xlu0 %673
      %675 = vrot.lane.b32.xlu0 %v633, 28
      %v676 = vpop.permute.xlu0 %675
      %677 = vrot.lane.b32.xlu0 %v634, 28
      %v678 = vpop.permute.xlu0 %677
      %679 = vrot.lane.b32.xlu0 %v635, 28
      %v680 = vpop.permute.xlu0 %679
      %681 = vrot.lane.b32.xlu0 %v636, 28
      %v682 = vpop.permute.xlu0 %681
      %683 = vrot.lane.b32.xlu0 %v637, 28
      %v684 = vpop.permute.xlu0 %683
      %685 = vrot.lane.b32.xlu0 %v638, 28
      %v686 = vpop.permute.xlu0 %685
      %703 = vst.msk [vmem:[%s156 + $0x100] sm:$0xff] %vm588, %v656
      %704 = vst.msk [vmem:[%s156 + $0x110] sm:$0xff] %vm588, %v658
      %705 = vst.msk [vmem:[%s156 + $0x120] sm:$0xff] %vm588, %v660
      %706 = vst.msk [vmem:[%s156 + $0x130] sm:$0xff] %vm588, %v662
      %707 = vst.msk [vmem:[%s156 + $0x140] sm:$0xff] %vm588, %v664
      %708 = vst.msk [vmem:[%s156 + $0x150] sm:$0xff] %vm588, %v666
      %709 = vst.msk [vmem:[%s156 + $0x160] sm:$0xff] %vm588, %v668
      %710 = vst.msk [vmem:[%s156 + $0x170] sm:$0xff] %vm588, %v670
      %711 = vst.msk [vmem:[%s156 + $0x180] sm:$0xff] %vm588, %v672
      %712 = vst.msk [vmem:[%s156 + $0x190] sm:$0xff] %vm588, %v674
      %713 = vst.msk [vmem:[%s156 + $0x1a0] sm:$0xff] %vm588, %v676
      %714 = vst.msk [vmem:[%s156 + $0x1b0] sm:$0xff] %vm588, %v678
      %715 = vst.msk [vmem:[%s156 + $0x1c0] sm:$0xff] %vm588, %v680
      %716 = vst.msk [vmem:[%s156 + $0x1d0] sm:$0xff] %vm588, %v682
      %717 = vst.msk [vmem:[%s156 + $0x1e0] sm:$0xff] %vm588, %v684
      %718 = vst.msk [vmem:[%s156 + $0x1f0] sm:$0xff] %vm588, %v686
      %s719 = scalar_lea.vmem %s145, 96
      %v720 = vld [vmem:[%s719] sm:$0xff]
      %v721 = vld [vmem:[%s719 + $0x10] sm:$0x3f]
      %722 = vxpose.xlu0.b32.start [1/16] %v720, 128
      %723 = vxpose.xlu0.b32.cont [2/16] %v721, 128
      %724 = vxpose.xlu0.b32.cont [3/16] 0.0, 128
      %725 = vxpose.xlu0.b32.cont [4/16] 0.0, 128
      %726 = vxpose.xlu0.b32.cont [5/16] 0.0, 128
      %727 = vxpose.xlu0.b32.cont [6/16] 0.0, 128
      %728 = vxpose.xlu0.b32.cont [7/16] 0.0, 128
      %729 = vxpose.xlu0.b32.cont [8/16] 0.0, 128
      %730 = vxpose.xlu0.b32.cont [9/16] 0.0, 128
      %731 = vxpose.xlu0.b32.cont [10/16] 0.0, 128
      %732 = vxpose.xlu0.b32.cont [11/16] 0.0, 128
      %733 = vxpose.xlu0.b32.cont [12/16] 0.0, 128
      %734 = vxpose.xlu0.b32.cont [13/16] 0.0, 128
      %735 = vxpose.xlu0.b32.cont [14/16] 0.0, 128
      %736 = vxpose.xlu0.b32.cont [15/16] 0.0, 128
      %737 = vxpose.xlu0.b32.end [16/16] 0.0, 128
      %v738 = vpop.trf.xlu0
      %v739 = vpop.trf.xlu0
      %v740 = vpop.trf.xlu0
      %v741 = vpop.trf.xlu0
      %v742 = vpop.trf.xlu0
      %v743 = vpop.trf.xlu0
      %v744 = vpop.trf.xlu0
      %v745 = vpop.trf.xlu0
      %v746 = vpop.trf.xlu0
      %v747 = vpop.trf.xlu0
      %v748 = vpop.trf.xlu0
      %v749 = vpop.trf.xlu0
      %v750 = vpop.trf.xlu0
      %v751 = vpop.trf.xlu0
      %v752 = vpop.trf.xlu0
      %v753 = vpop.trf.xlu0
      %770 = vrot.lane.b32.xlu0 %v738, 42
      %v771 = vpop.permute.xlu0 %770
      %772 = vrot.lane.b32.xlu0 %v739, 42
      %v773 = vpop.permute.xlu0 %772
      %774 = vrot.lane.b32.xlu0 %v740, 42
      %v775 = vpop.permute.xlu0 %774
      %776 = vrot.lane.b32.xlu0 %v741, 42
      %v777 = vpop.permute.xlu0 %776
      %778 = vrot.lane.b32.xlu0 %v742, 42
      %v779 = vpop.permute.xlu0 %778
      %780 = vrot.lane.b32.xlu0 %v743, 42
      %v781 = vpop.permute.xlu0 %780
      %782 = vrot.lane.b32.xlu0 %v744, 42
      %v783 = vpop.permute.xlu0 %782
      %784 = vrot.lane.b32.xlu0 %v745, 42
      %v785 = vpop.permute.xlu0 %784
      %786 = vrot.lane.b32.xlu0 %v746, 42
      %v787 = vpop.permute.xlu0 %786
      %788 = vrot.lane.b32.xlu0 %v747, 42
      %v789 = vpop.permute.xlu0 %788
      %790 = vrot.lane.b32.xlu0 %v748, 42
      %v791 = vpop.permute.xlu0 %790
      %792 = vrot.lane.b32.xlu0 %v749, 42
      %v793 = vpop.permute.xlu0 %792
      %794 = vrot.lane.b32.xlu0 %v750, 42
      %v795 = vpop.permute.xlu0 %794
      %796 = vrot.lane.b32.xlu0 %v751, 42
      %v797 = vpop.permute.xlu0 %796
      %798 = vrot.lane.b32.xlu0 %v752, 42
      %v799 = vpop.permute.xlu0 %798
      %800 = vrot.lane.b32.xlu0 %v753, 42
      %v801 = vpop.permute.xlu0 %800
      %vm818 = vcmask 458064
      %819 = vst.msk [vmem:[%s156] sm:$0xff] %vm818, %v771
      %820 = vst.msk [vmem:[%s156 + $0x10] sm:$0xff] %vm818, %v773
      %821 = vst.msk [vmem:[%s156 + $0x20] sm:$0xff] %vm818, %v775
      %822 = vst.msk [vmem:[%s156 + $0x30] sm:$0xff] %vm818, %v777
      %823 = vst.msk [vmem:[%s156 + $0x40] sm:$0xff] %vm818, %v779
      %824 = vst.msk [vmem:[%s156 + $0x50] sm:$0xff] %vm818, %v781
      %825 = vst.msk [vmem:[%s156 + $0x60] sm:$0xff] %vm818, %v783
      %826 = vst.msk [vmem:[%s156 + $0x70] sm:$0xff] %vm818, %v785
      %827 = vst.msk [vmem:[%s156 + $0x80] sm:$0xff] %vm818, %v787
      %828 = vst.msk [vmem:[%s156 + $0x90] sm:$0xff] %vm818, %v789
      %829 = vst.msk [vmem:[%s156 + $0xa0] sm:$0xff] %vm818, %v791
      %830 = vst.msk [vmem:[%s156 + $0xb0] sm:$0xff] %vm818, %v793
      %831 = vst.msk [vmem:[%s156 + $0xc0] sm:$0xff] %vm818, %v795
      %832 = vst.msk [vmem:[%s156 + $0xd0] sm:$0xff] %vm818, %v797
      %833 = vst.msk [vmem:[%s156 + $0xe0] sm:$0xff] %vm818, %v799
      %834 = vst.msk [vmem:[%s156 + $0xf0] sm:$0xff] %vm818, %v801
      %v835 = vld [vmem:[%s719 + $0x8] sm:$0xff]
      %v836 = vld [vmem:[%s719 + $0x18] sm:$0x3f]
      %837 = vxpose.xlu0.b32.start [1/16] %v835, 128
      %838 = vxpose.xlu0.b32.cont [2/16] %v836, 128
      %839 = vxpose.xlu0.b32.cont [3/16] 0.0, 128
      %840 = vxpose.xlu0.b32.cont [4/16] 0.0, 128
      %841 = vxpose.xlu0.b32.cont [5/16] 0.0, 128
      %842 = vxpose.xlu0.b32.cont [6/16] 0.0, 128
      %843 = vxpose.xlu0.b32.cont [7/16] 0.0, 128
      %844 = vxpose.xlu0.b32.cont [8/16] 0.0, 128
      %845 = vxpose.xlu0.b32.cont [9/16] 0.0, 128
      %846 = vxpose.xlu0.b32.cont [10/16] 0.0, 128
      %847 = vxpose.xlu0.b32.cont [11/16] 0.0, 128
      %848 = vxpose.xlu0.b32.cont [12/16] 0.0, 128
      %849 = vxpose.xlu0.b32.cont [13/16] 0.0, 128
      %850 = vxpose.xlu0.b32.cont [14/16] 0.0, 128
      %851 = vxpose.xlu0.b32.cont [15/16] 0.0, 128
      %852 = vxpose.xlu0.b32.end [16/16] 0.0, 128
      %v853 = vpop.trf.xlu0
      %v854 = vpop.trf.xlu0
      %v855 = vpop.trf.xlu0
      %v856 = vpop.trf.xlu0
      %v857 = vpop.trf.xlu0
      %v858 = vpop.trf.xlu0
      %v859 = vpop.trf.xlu0
      %v860 = vpop.trf.xlu0
      %v861 = vpop.trf.xlu0
      %v862 = vpop.trf.xlu0
      %v863 = vpop.trf.xlu0
      %v864 = vpop.trf.xlu0
      %v865 = vpop.trf.xlu0
      %v866 = vpop.trf.xlu0
      %v867 = vpop.trf.xlu0
      %v868 = vpop.trf.xlu0
      %885 = vrot.lane.b32.xlu0 %v853, 42
      %v886 = vpop.permute.xlu0 %885
      %887 = vrot.lane.b32.xlu0 %v854, 42
      %v888 = vpop.permute.xlu0 %887
      %889 = vrot.lane.b32.xlu0 %v855, 42
      %v890 = vpop.permute.xlu0 %889
      %891 = vrot.lane.b32.xlu0 %v856, 42
      %v892 = vpop.permute.xlu0 %891
      %893 = vrot.lane.b32.xlu0 %v857, 42
      %v894 = vpop.permute.xlu0 %893
      %895 = vrot.lane.b32.xlu0 %v858, 42
      %v896 = vpop.permute.xlu0 %895
      %897 = vrot.lane.b32.xlu0 %v859, 42
      %v898 = vpop.permute.xlu0 %897
      %899 = vrot.lane.b32.xlu0 %v860, 42
      %v900 = vpop.permute.xlu0 %899
      %901 = vrot.lane.b32.xlu0 %v861, 42
      %v902 = vpop.permute.xlu0 %901
      %903 = vrot.lane.b32.xlu0 %v862, 42
      %v904 = vpop.permute.xlu0 %903
      %905 = vrot.lane.b32.xlu0 %v863, 42
      %v906 = vpop.permute.xlu0 %905
      %907 = vrot.lane.b32.xlu0 %v864, 42
      %v908 = vpop.permute.xlu0 %907
      %909 = vrot.lane.b32.xlu0 %v865, 42
      %v910 = vpop.permute.xlu0 %909
      %911 = vrot.lane.b32.xlu0 %v866, 42
      %v912 = vpop.permute.xlu0 %911
      %913 = vrot.lane.b32.xlu0 %v867, 42
      %v914 = vpop.permute.xlu0 %913
      %915 = vrot.lane.b32.xlu0 %v868, 42
      %v916 = vpop.permute.xlu0 %915
      %933 = vst.msk [vmem:[%s156 + $0x100] sm:$0xff] %vm818, %v886
      %934 = vst.msk [vmem:[%s156 + $0x110] sm:$0xff] %vm818, %v888
      %935 = vst.msk [vmem:[%s156 + $0x120] sm:$0xff] %vm818, %v890
      %936 = vst.msk [vmem:[%s156 + $0x130] sm:$0xff] %vm818, %v892
      %937 = vst.msk [vmem:[%s156 + $0x140] sm:$0xff] %vm818, %v894
      %938 = vst.msk [vmem:[%s156 + $0x150] sm:$0xff] %vm818, %v896
      %939 = vst.msk [vmem:[%s156 + $0x160] sm:$0xff] %vm818, %v898
      %940 = vst.msk [vmem:[%s156 + $0x170] sm:$0xff] %vm818, %v900
      %941 = vst.msk [vmem:[%s156 + $0x180] sm:$0xff] %vm818, %v902
      %942 = vst.msk [vmem:[%s156 + $0x190] sm:$0xff] %vm818, %v904
      %943 = vst.msk [vmem:[%s156 + $0x1a0] sm:$0xff] %vm818, %v906
      %944 = vst.msk [vmem:[%s156 + $0x1b0] sm:$0xff] %vm818, %v908
      %945 = vst.msk [vmem:[%s156 + $0x1c0] sm:$0xff] %vm818, %v910
      %946 = vst.msk [vmem:[%s156 + $0x1d0] sm:$0xff] %vm818, %v912
      %947 = vst.msk [vmem:[%s156 + $0x1e0] sm:$0xff] %vm818, %v914
      %948 = vst.msk [vmem:[%s156 + $0x1f0] sm:$0xff] %vm818, %v916
      %s949 = scalar_lea.vmem %s145, 128
      %v950 = vld [vmem:[%s949] sm:$0xff]
      %v951 = vld [vmem:[%s949 + $0x10] sm:$0x3f]
      %952 = vxpose.xlu0.b32.start [1/16] %v950, 128
      %953 = vxpose.xlu0.b32.cont [2/16] %v951, 128
      %954 = vxpose.xlu0.b32.cont [3/16] 0.0, 128
      %955 = vxpose.xlu0.b32.cont [4/16] 0.0, 128
      %956 = vxpose.xlu0.b32.cont [5/16] 0.0, 128
      %957 = vxpose.xlu0.b32.cont [6/16] 0.0, 128
      %958 = vxpose.xlu0.b32.cont [7/16] 0.0, 128
      %959 = vxpose.xlu0.b32.cont [8/16] 0.0, 128
      %960 = vxpose.xlu0.b32.cont [9/16] 0.0, 128
      %961 = vxpose.xlu0.b32.cont [10/16] 0.0, 128
      %962 = vxpose.xlu0.b32.cont [11/16] 0.0, 128
      %963 = vxpose.xlu0.b32.cont [12/16] 0.0, 128
      %964 = vxpose.xlu0.b32.cont [13/16] 0.0, 128
      %965 = vxpose.xlu0.b32.cont [14/16] 0.0, 128
      %966 = vxpose.xlu0.b32.cont [15/16] 0.0, 128
      %967 = vxpose.xlu0.b32.end [16/16] 0.0, 128
      %v968 = vpop.trf.xlu0
      %v969 = vpop.trf.xlu0
      %v970 = vpop.trf.xlu0
      %v971 = vpop.trf.xlu0
      %v972 = vpop.trf.xlu0
      %v973 = vpop.trf.xlu0
      %v974 = vpop.trf.xlu0
      %v975 = vpop.trf.xlu0
      %v976 = vpop.trf.xlu0
      %v977 = vpop.trf.xlu0
      %v978 = vpop.trf.xlu0
      %v979 = vpop.trf.xlu0
      %v980 = vpop.trf.xlu0
      %v981 = vpop.trf.xlu0
      %v982 = vpop.trf.xlu0
      %v983 = vpop.trf.xlu0
      %1000 = vrot.lane.b32.xlu0 %v968, 56
      %v1001 = vpop.permute.xlu0 %1000
      %1002 = vrot.lane.b32.xlu0 %v969, 56
      %v1003 = vpop.permute.xlu0 %1002
      %1004 = vrot.lane.b32.xlu0 %v970, 56
      %v1005 = vpop.permute.xlu0 %1004
      %1006 = vrot.lane.b32.xlu0 %v971, 56
      %v1007 = vpop.permute.xlu0 %1006
      %1008 = vrot.lane.b32.xlu0 %v972, 56
      %v1009 = vpop.permute.xlu0 %1008
      %1010 = vrot.lane.b32.xlu0 %v973, 56
      %v1011 = vpop.permute.xlu0 %1010
      %1012 = vrot.lane.b32.xlu0 %v974, 56
      %v1013 = vpop.permute.xlu0 %1012
      %1014 = vrot.lane.b32.xlu0 %v975, 56
      %v1015 = vpop.permute.xlu0 %1014
      %1016 = vrot.lane.b32.xlu0 %v976, 56
      %v1017 = vpop.permute.xlu0 %1016
      %1018 = vrot.lane.b32.xlu0 %v977, 56
      %v1019 = vpop.permute.xlu0 %1018
      %1020 = vrot.lane.b32.xlu0 %v978, 56
      %v1021 = vpop.permute.xlu0 %1020
      %1022 = vrot.lane.b32.xlu0 %v979, 56
      %v1023 = vpop.permute.xlu0 %1022
      %1024 = vrot.lane.b32.xlu0 %v980, 56
      %v1025 = vpop.permute.xlu0 %1024
      %1026 = vrot.lane.b32.xlu0 %v981, 56
      %v1027 = vpop.permute.xlu0 %1026
      %1028 = vrot.lane.b32.xlu0 %v982, 56
      %v1029 = vpop.permute.xlu0 %1028
      %1030 = vrot.lane.b32.xlu0 %v983, 56
      %v1031 = vpop.permute.xlu0 %1030
      %vm1048 = vcmask 572864
      %1049 = vst.msk [vmem:[%s156] sm:$0xff] %vm1048, %v1001
      %1050 = vst.msk [vmem:[%s156 + $0x10] sm:$0xff] %vm1048, %v1003
      %1051 = vst.msk [vmem:[%s156 + $0x20] sm:$0xff] %vm1048, %v1005
      %1052 = vst.msk [vmem:[%s156 + $0x30] sm:$0xff] %vm1048, %v1007
      %1053 = vst.msk [vmem:[%s156 + $0x40] sm:$0xff] %vm1048, %v1009
      %1054 = vst.msk [vmem:[%s156 + $0x50] sm:$0xff] %vm1048, %v1011
      %1055 = vst.msk [vmem:[%s156 + $0x60] sm:$0xff] %vm1048, %v1013
      %1056 = vst.msk [vmem:[%s156 + $0x70] sm:$0xff] %vm1048, %v1015
      %1057 = vst.msk [vmem:[%s156 + $0x80] sm:$0xff] %vm1048, %v1017
      %1058 = vst.msk [vmem:[%s156 + $0x90] sm:$0xff] %vm1048, %v1019
      %1059 = vst.msk [vmem:[%s156 + $0xa0] sm:$0xff] %vm1048, %v1021
      %1060 = vst.msk [vmem:[%s156 + $0xb0] sm:$0xff] %vm1048, %v1023
      %1061 = vst.msk [vmem:[%s156 + $0xc0] sm:$0xff] %vm1048, %v1025
      %1062 = vst.msk [vmem:[%s156 + $0xd0] sm:$0xff] %vm1048, %v1027
      %1063 = vst.msk [vmem:[%s156 + $0xe0] sm:$0xff] %vm1048, %v1029
      %1064 = vst.msk [vmem:[%s156 + $0xf0] sm:$0xff] %vm1048, %v1031
      %v1065 = vld [vmem:[%s949 + $0x8] sm:$0xff]
      %v1066 = vld [vmem:[%s949 + $0x18] sm:$0x3f]
      %1067 = vxpose.xlu0.b32.start [1/16] %v1065, 128
      %1068 = vxpose.xlu0.b32.cont [2/16] %v1066, 128
      %1069 = vxpose.xlu0.b32.cont [3/16] 0.0, 128
      %1070 = vxpose.xlu0.b32.cont [4/16] 0.0, 128
      %1071 = vxpose.xlu0.b32.cont [5/16] 0.0, 128
      %1072 = vxpose.xlu0.b32.cont [6/16] 0.0, 128
      %1073 = vxpose.xlu0.b32.cont [7/16] 0.0, 128
      %1074 = vxpose.xlu0.b32.cont [8/16] 0.0, 128
      %1075 = vxpose.xlu0.b32.cont [9/16] 0.0, 128
      %1076 = vxpose.xlu0.b32.cont [10/16] 0.0, 128
      %1077 = vxpose.xlu0.b32.cont [11/16] 0.0, 128
      %1078 = vxpose.xlu0.b32.cont [12/16] 0.0, 128
      %1079 = vxpose.xlu0.b32.cont [13/16] 0.0, 128
      %1080 = vxpose.xlu0.b32.cont [14/16] 0.0, 128
      %1081 = vxpose.xlu0.b32.cont [15/16] 0.0, 128
      %1082 = vxpose.xlu0.b32.end [16/16] 0.0, 128
      %v1083 = vpop.trf.xlu0
      %v1084 = vpop.trf.xlu0
      %v1085 = vpop.trf.xlu0
      %v1086 = vpop.trf.xlu0
      %v1087 = vpop.trf.xlu0
      %v1088 = vpop.trf.xlu0
      %v1089 = vpop.trf.xlu0
      %v1090 = vpop.trf.xlu0
      %v1091 = vpop.trf.xlu0
      %v1092 = vpop.trf.xlu0
      %v1093 = vpop.trf.xlu0
      %v1094 = vpop.trf.xlu0
      %v1095 = vpop.trf.xlu0
      %v1096 = vpop.trf.xlu0
      %v1097 = vpop.trf.xlu0
      %v1098 = vpop.trf.xlu0
      %1115 = vrot.lane.b32.xlu0 %v1083, 56
      %v1116 = vpop.permute.xlu0 %1115
      %1117 = vrot.lane.b32.xlu0 %v1084, 56
      %v1118 = vpop.permute.xlu0 %1117
      %1119 = vrot.lane.b32.xlu0 %v1085, 56
      %v1120 = vpop.permute.xlu0 %1119
      %1121 = vrot.lane.b32.xlu0 %v1086, 56
      %v1122 = vpop.permute.xlu0 %1121
      %1123 = vrot.lane.b32.xlu0 %v1087, 56
      %v1124 = vpop.permute.xlu0 %1123
      %1125 = vrot.lane.b32.xlu0 %v1088, 56
      %v1126 = vpop.permute.xlu0 %1125
      %1127 = vrot.lane.b32.xlu0 %v1089, 56
      %v1128 = vpop.permute.xlu0 %1127
      %1129 = vrot.lane.b32.xlu0 %v1090, 56
      %v1130 = vpop.permute.xlu0 %1129
      %1131 = vrot.lane.b32.xlu0 %v1091, 56
      %v1132 = vpop.permute.xlu0 %1131
      %1133 = vrot.lane.b32.xlu0 %v1092, 56
      %v1134 = vpop.permute.xlu0 %1133
      %1135 = vrot.lane.b32.xlu0 %v1093, 56
      %v1136 = vpop.permute.xlu0 %1135
      %1137 = vrot.lane.b32.xlu0 %v1094, 56
      %v1138 = vpop.permute.xlu0 %1137
      %1139 = vrot.lane.b32.xlu0 %v1095, 56
      %v1140 = vpop.permute.xlu0 %1139
      %1141 = vrot.lane.b32.xlu0 %v1096, 56
      %v1142 = vpop.permute.xlu0 %1141
      %1143 = vrot.lane.b32.xlu0 %v1097, 56
      %v1144 = vpop.permute.xlu0 %1143
      %1145 = vrot.lane.b32.xlu0 %v1098, 56
      %v1146 = vpop.permute.xlu0 %1145
      %1163 = vst.msk [vmem:[%s156 + $0x100] sm:$0xff] %vm1048, %v1116
      %1164 = vst.msk [vmem:[%s156 + $0x110] sm:$0xff] %vm1048, %v1118
      %1165 = vst.msk [vmem:[%s156 + $0x120] sm:$0xff] %vm1048, %v1120
      %1166 = vst.msk [vmem:[%s156 + $0x130] sm:$0xff] %vm1048, %v1122
      %1167 = vst.msk [vmem:[%s156 + $0x140] sm:$0xff] %vm1048, %v1124
      %1168 = vst.msk [vmem:[%s156 + $0x150] sm:$0xff] %vm1048, %v1126
      %1169 = vst.msk [vmem:[%s156 + $0x160] sm:$0xff] %vm1048, %v1128
      %1170 = vst.msk [vmem:[%s156 + $0x170] sm:$0xff] %vm1048, %v1130
      %1171 = vst.msk [vmem:[%s156 + $0x180] sm:$0xff] %vm1048, %v1132
      %1172 = vst.msk [vmem:[%s156 + $0x190] sm:$0xff] %vm1048, %v1134
      %1173 = vst.msk [vmem:[%s156 + $0x1a0] sm:$0xff] %vm1048, %v1136
      %1174 = vst.msk [vmem:[%s156 + $0x1b0] sm:$0xff] %vm1048, %v1138
      %1175 = vst.msk [vmem:[%s156 + $0x1c0] sm:$0xff] %vm1048, %v1140
      %1176 = vst.msk [vmem:[%s156 + $0x1d0] sm:$0xff] %vm1048, %v1142
      %1177 = vst.msk [vmem:[%s156 + $0x1e0] sm:$0xff] %vm1048, %v1144
      %1178 = vst.msk [vmem:[%s156 + $0x1f0] sm:$0xff] %vm1048, %v1146
      %s1179 = scalar_lea.vmem %s145, 160
      %v1180 = vld [vmem:[%s1179] sm:$0xff]
      %v1181 = vld [vmem:[%s1179 + $0x10] sm:$0x3f]
      %1182 = vxpose.xlu0.b32.start [1/16] %v1180, 128
      %1183 = vxpose.xlu0.b32.cont [2/16] %v1181, 128
      %1184 = vxpose.xlu0.b32.cont [3/16] 0.0, 128
      %1185 = vxpose.xlu0.b32.cont [4/16] 0.0, 128
      %1186 = vxpose.xlu0.b32.cont [5/16] 0.0, 128
      %1187 = vxpose.xlu0.b32.cont [6/16] 0.0, 128
      %1188 = vxpose.xlu0.b32.cont [7/16] 0.0, 128
      %1189 = vxpose.xlu0.b32.cont [8/16] 0.0, 128
      %1190 = vxpose.xlu0.b32.cont [9/16] 0.0, 128
      %1191 = vxpose.xlu0.b32.cont [10/16] 0.0, 128
      %1192 = vxpose.xlu0.b32.cont [11/16] 0.0, 128
      %1193 = vxpose.xlu0.b32.cont [12/16] 0.0, 128
      %1194 = vxpose.xlu0.b32.cont [13/16] 0.0, 128
      %1195 = vxpose.xlu0.b32.cont [14/16] 0.0, 128
      %1196 = vxpose.xlu0.b32.cont [15/16] 0.0, 128
      %1197 = vxpose.xlu0.b32.end [16/16] 0.0, 128
      %v1198 = vpop.trf.xlu0
      %v1199 = vpop.trf.xlu0
      %v1200 = vpop.trf.xlu0
      %v1201 = vpop.trf.xlu0
      %v1202 = vpop.trf.xlu0
      %v1203 = vpop.trf.xlu0
      %v1204 = vpop.trf.xlu0
      %v1205 = vpop.trf.xlu0
      %v1206 = vpop.trf.xlu0
      %v1207 = vpop.trf.xlu0
      %v1208 = vpop.trf.xlu0
      %v1209 = vpop.trf.xlu0
      %v1210 = vpop.trf.xlu0
      %v1211 = vpop.trf.xlu0
      %v1212 = vpop.trf.xlu0
      %v1213 = vpop.trf.xlu0
      %1230 = vrot.lane.b32.xlu0 %v1198, 70
      %v1231 = vpop.permute.xlu0 %1230
      %1232 = vrot.lane.b32.xlu0 %v1199, 70
      %v1233 = vpop.permute.xlu0 %1232
      %1234 = vrot.lane.b32.xlu0 %v1200, 70
      %v1235 = vpop.permute.xlu0 %1234
      %1236 = vrot.lane.b32.xlu0 %v1201, 70
      %v1237 = vpop.permute.xlu0 %1236
      %1238 = vrot.lane.b32.xlu0 %v1202, 70
      %v1239 = vpop.permute.xlu0 %1238
      %1240 = vrot.lane.b32.xlu0 %v1203, 70
      %v1241 = vpop.permute.xlu0 %1240
      %1242 = vrot.lane.b32.xlu0 %v1204, 70
      %v1243 = vpop.permute.xlu0 %1242
      %1244 = vrot.lane.b32.xlu0 %v1205, 70
      %v1245 = vpop.permute.xlu0 %1244
      %1246 = vrot.lane.b32.xlu0 %v1206, 70
      %v1247 = vpop.permute.xlu0 %1246
      %1248 = vrot.lane.b32.xlu0 %v1207, 70
      %v1249 = vpop.permute.xlu0 %1248
      %1250 = vrot.lane.b32.xlu0 %v1208, 70
      %v1251 = vpop.permute.xlu0 %1250
      %1252 = vrot.lane.b32.xlu0 %v1209, 70
      %v1253 = vpop.permute.xlu0 %1252
      %1254 = vrot.lane.b32.xlu0 %v1210, 70
      %v1255 = vpop.permute.xlu0 %1254
      %1256 = vrot.lane.b32.xlu0 %v1211, 70
      %v1257 = vpop.permute.xlu0 %1256
      %1258 = vrot.lane.b32.xlu0 %v1212, 70
      %v1259 = vpop.permute.xlu0 %1258
      %1260 = vrot.lane.b32.xlu0 %v1213, 70
      %v1261 = vpop.permute.xlu0 %1260
      %vm1278 = vcmask 687664
      %1279 = vst.msk [vmem:[%s156] sm:$0xff] %vm1278, %v1231
      %1280 = vst.msk [vmem:[%s156 + $0x10] sm:$0xff] %vm1278, %v1233
      %1281 = vst.msk [vmem:[%s156 + $0x20] sm:$0xff] %vm1278, %v1235
      %1282 = vst.msk [vmem:[%s156 + $0x30] sm:$0xff] %vm1278, %v1237
      %1283 = vst.msk [vmem:[%s156 + $0x40] sm:$0xff] %vm1278, %v1239
      %1284 = vst.msk [vmem:[%s156 + $0x50] sm:$0xff] %vm1278, %v1241
      %1285 = vst.msk [vmem:[%s156 + $0x60] sm:$0xff] %vm1278, %v1243
      %1286 = vst.msk [vmem:[%s156 + $0x70] sm:$0xff] %vm1278, %v1245
      %1287 = vst.msk [vmem:[%s156 + $0x80] sm:$0xff] %vm1278, %v1247
      %1288 = vst.msk [vmem:[%s156 + $0x90] sm:$0xff] %vm1278, %v1249
      %1289 = vst.msk [vmem:[%s156 + $0xa0] sm:$0xff] %vm1278, %v1251
      %1290 = vst.msk [vmem:[%s156 + $0xb0] sm:$0xff] %vm1278, %v1253
      %1291 = vst.msk [vmem:[%s156 + $0xc0] sm:$0xff] %vm1278, %v1255
      %1292 = vst.msk [vmem:[%s156 + $0xd0] sm:$0xff] %vm1278, %v1257
      %1293 = vst.msk [vmem:[%s156 + $0xe0] sm:$0xff] %vm1278, %v1259
      %1294 = vst.msk [vmem:[%s156 + $0xf0] sm:$0xff] %vm1278, %v1261
      %v1295 = vld [vmem:[%s1179 + $0x8] sm:$0xff]
      %v1296 = vld [vmem:[%s1179 + $0x18] sm:$0x3f]
      %1297 = vxpose.xlu0.b32.start [1/16] %v1295, 128
      %1298 = vxpose.xlu0.b32.cont [2/16] %v1296, 128
      %1299 = vxpose.xlu0.b32.cont [3/16] 0.0, 128
      %1300 = vxpose.xlu0.b32.cont [4/16] 0.0, 128
      %1301 = vxpose.xlu0.b32.cont [5/16] 0.0, 128
      %1302 = vxpose.xlu0.b32.cont [6/16] 0.0, 128
      %1303 = vxpose.xlu0.b32.cont [7/16] 0.0, 128
      %1304 = vxpose.xlu0.b32.cont [8/16] 0.0, 128
      %1305 = vxpose.xlu0.b32.cont [9/16] 0.0, 128
      %1306 = vxpose.xlu0.b32.cont [10/16] 0.0, 128
      %1307 = vxpose.xlu0.b32.cont [11/16] 0.0, 128
      %1308 = vxpose.xlu0.b32.cont [12/16] 0.0, 128
      %1309 = vxpose.xlu0.b32.cont [13/16] 0.0, 128
      %1310 = vxpose.xlu0.b32.cont [14/16] 0.0, 128
      %1311 = vxpose.xlu0.b32.cont [15/16] 0.0, 128
      %1312 = vxpose.xlu0.b32.end [16/16] 0.0, 128
      %v1313 = vpop.trf.xlu0
      %v1314 = vpop.trf.xlu0
      %v1315 = vpop.trf.xlu0
      %v1316 = vpop.trf.xlu0
      %v1317 = vpop.trf.xlu0
      %v1318 = vpop.trf.xlu0
      %v1319 = vpop.trf.xlu0
      %v1320 = vpop.trf.xlu0
      %v1321 = vpop.trf.xlu0
      %v1322 = vpop.trf.xlu0
      %v1323 = vpop.trf.xlu0
      %v1324 = vpop.trf.xlu0
      %v1325 = vpop.trf.xlu0
      %v1326 = vpop.trf.xlu0
      %v1327 = vpop.trf.xlu0
      %v1328 = vpop.trf.xlu0
      %1345 = vrot.lane.b32.xlu0 %v1313, 70
      %v1346 = vpop.permute.xlu0 %1345
      %1347 = vrot.lane.b32.xlu0 %v1314, 70
      %v1348 = vpop.permute.xlu0 %1347
      %1349 = vrot.lane.b32.xlu0 %v1315, 70
      %v1350 = vpop.permute.xlu0 %1349
      %1351 = vrot.lane.b32.xlu0 %v1316, 70
      %v1352 = vpop.permute.xlu0 %1351
      %1353 = vrot.lane.b32.xlu0 %v1317, 70
      %v1354 = vpop.permute.xlu0 %1353
      %1355 = vrot.lane.b32.xlu0 %v1318, 70
      %v1356 = vpop.permute.xlu0 %1355
      %1357 = vrot.lane.b32.xlu0 %v1319, 70
      %v1358 = vpop.permute.xlu0 %1357
      %1359 = vrot.lane.b32.xlu0 %v1320, 70
      %v1360 = vpop.permute.xlu0 %1359
      %1361 = vrot.lane.b32.xlu0 %v1321, 70
      %v1362 = vpop.permute.xlu0 %1361
      %1363 = vrot.lane.b32.xlu0 %v1322, 70
      %v1364 = vpop.permute.xlu0 %1363
      %1365 = vrot.lane.b32.xlu0 %v1323, 70
      %v1366 = vpop.permute.xlu0 %1365
      %1367 = vrot.lane.b32.xlu0 %v1324, 70
      %v1368 = vpop.permute.xlu0 %1367
      %1369 = vrot.lane.b32.xlu0 %v1325, 70
      %v1370 = vpop.permute.xlu0 %1369
      %1371 = vrot.lane.b32.xlu0 %v1326, 70
      %v1372 = vpop.permute.xlu0 %1371
      %1373 = vrot.lane.b32.xlu0 %v1327, 70
      %v1374 = vpop.permute.xlu0 %1373
      %1375 = vrot.lane.b32.xlu0 %v1328, 70
      %v1376 = vpop.permute.xlu0 %1375
      %1393 = vst.msk [vmem:[%s156 + $0x100] sm:$0xff] %vm1278, %v1346
      %1394 = vst.msk [vmem:[%s156 + $0x110] sm:$0xff] %vm1278, %v1348
      %1395 = vst.msk [vmem:[%s156 + $0x120] sm:$0xff] %vm1278, %v1350
      %1396 = vst.msk [vmem:[%s156 + $0x130] sm:$0xff] %vm1278, %v1352
      %1397 = vst.msk [vmem:[%s156 + $0x140] sm:$0xff] %vm1278, %v1354
      %1398 = vst.msk [vmem:[%s156 + $0x150] sm:$0xff] %vm1278, %v1356
      %1399 = vst.msk [vmem:[%s156 + $0x160] sm:$0xff] %vm1278, %v1358
      %1400 = vst.msk [vmem:[%s156 + $0x170] sm:$0xff] %vm1278, %v1360
      %1401 = vst.msk [vmem:[%s156 + $0x180] sm:$0xff] %vm1278, %v1362
      %1402 = vst.msk [vmem:[%s156 + $0x190] sm:$0xff] %vm1278, %v1364
      %1403 = vst.msk [vmem:[%s156 + $0x1a0] sm:$0xff] %vm1278, %v1366
      %1404 = vst.msk [vmem:[%s156 + $0x1b0] sm:$0xff] %vm1278, %v1368
      %1405 = vst.msk [vmem:[%s156 + $0x1c0] sm:$0xff] %vm1278, %v1370
      %1406 = vst.msk [vmem:[%s156 + $0x1d0] sm:$0xff] %vm1278, %v1372
      %1407 = vst.msk [vmem:[%s156 + $0x1e0] sm:$0xff] %vm1278, %v1374
      %1408 = vst.msk [vmem:[%s156 + $0x1f0] sm:$0xff] %vm1278, %v1376
      %s1409 = scalar_lea.vmem %s145, 192
      %v1410 = vld [vmem:[%s1409] sm:$0xff]
      %v1411 = vld [vmem:[%s1409 + $0x10] sm:$0x3f]
      %1412 = vxpose.xlu0.b32.start [1/16] %v1410, 128
      %1413 = vxpose.xlu0.b32.cont [2/16] %v1411, 128
      %1414 = vxpose.xlu0.b32.cont [3/16] 0.0, 128
      %1415 = vxpose.xlu0.b32.cont [4/16] 0.0, 128
      %1416 = vxpose.xlu0.b32.cont [5/16] 0.0, 128
      %1417 = vxpose.xlu0.b32.cont [6/16] 0.0, 128
      %1418 = vxpose.xlu0.b32.cont [7/16] 0.0, 128
      %1419 = vxpose.xlu0.b32.cont [8/16] 0.0, 128
      %1420 = vxpose.xlu0.b32.cont [9/16] 0.0, 128
      %1421 = vxpose.xlu0.b32.cont [10/16] 0.0, 128
      %1422 = vxpose.xlu0.b32.cont [11/16] 0.0, 128
      %1423 = vxpose.xlu0.b32.cont [12/16] 0.0, 128
      %1424 = vxpose.xlu0.b32.cont [13/16] 0.0, 128
      %1425 = vxpose.xlu0.b32.cont [14/16] 0.0, 128
      %1426 = vxpose.xlu0.b32.cont [15/16] 0.0, 128
      %1427 = vxpose.xlu0.b32.end [16/16] 0.0, 128
      %v1428 = vpop.trf.xlu0
      %v1429 = vpop.trf.xlu0
      %v1430 = vpop.trf.xlu0
      %v1431 = vpop.trf.xlu0
      %v1432 = vpop.trf.xlu0
      %v1433 = vpop.trf.xlu0
      %v1434 = vpop.trf.xlu0
      %v1435 = vpop.trf.xlu0
      %v1436 = vpop.trf.xlu0
      %v1437 = vpop.trf.xlu0
      %v1438 = vpop.trf.xlu0
      %v1439 = vpop.trf.xlu0
      %v1440 = vpop.trf.xlu0
      %v1441 = vpop.trf.xlu0
      %v1442 = vpop.trf.xlu0
      %v1443 = vpop.trf.xlu0
      %1460 = vrot.lane.b32.xlu0 %v1428, 84
      %v1461 = vpop.permute.xlu0 %1460
      %1462 = vrot.lane.b32.xlu0 %v1429, 84
      %v1463 = vpop.permute.xlu0 %1462
      %1464 = vrot.lane.b32.xlu0 %v1430, 84
      %v1465 = vpop.permute.xlu0 %1464
      %1466 = vrot.lane.b32.xlu0 %v1431, 84
      %v1467 = vpop.permute.xlu0 %1466
      %1468 = vrot.lane.b32.xlu0 %v1432, 84
      %v1469 = vpop.permute.xlu0 %1468
      %1470 = vrot.lane.b32.xlu0 %v1433, 84
      %v1471 = vpop.permute.xlu0 %1470
      %1472 = vrot.lane.b32.xlu0 %v1434, 84
      %v1473 = vpop.permute.xlu0 %1472
      %1474 = vrot.lane.b32.xlu0 %v1435, 84
      %v1475 = vpop.permute.xlu0 %1474
      %1476 = vrot.lane.b32.xlu0 %v1436, 84
      %v1477 = vpop.permute.xlu0 %1476
      %1478 = vrot.lane.b32.xlu0 %v1437, 84
      %v1479 = vpop.permute.xlu0 %1478
      %1480 = vrot.lane.b32.xlu0 %v1438, 84
      %v1481 = vpop.permute.xlu0 %1480
      %1482 = vrot.lane.b32.xlu0 %v1439, 84
      %v1483 = vpop.permute.xlu0 %1482
      %1484 = vrot.lane.b32.xlu0 %v1440, 84
      %v1485 = vpop.permute.xlu0 %1484
      %1486 = vrot.lane.b32.xlu0 %v1441, 84
      %v1487 = vpop.permute.xlu0 %1486
      %1488 = vrot.lane.b32.xlu0 %v1442, 84
      %v1489 = vpop.permute.xlu0 %1488
      %1490 = vrot.lane.b32.xlu0 %v1443, 84
      %v1491 = vpop.permute.xlu0 %1490
      %vm1508 = vcmask 802464
      %1509 = vst.msk [vmem:[%s156] sm:$0xff] %vm1508, %v1461
      %1510 = vst.msk [vmem:[%s156 + $0x10] sm:$0xff] %vm1508, %v1463
      %1511 = vst.msk [vmem:[%s156 + $0x20] sm:$0xff] %vm1508, %v1465
      %1512 = vst.msk [vmem:[%s156 + $0x30] sm:$0xff] %vm1508, %v1467
      %1513 = vst.msk [vmem:[%s156 + $0x40] sm:$0xff] %vm1508, %v1469
      %1514 = vst.msk [vmem:[%s156 + $0x50] sm:$0xff] %vm1508, %v1471
      %1515 = vst.msk [vmem:[%s156 + $0x60] sm:$0xff] %vm1508, %v1473
      %1516 = vst.msk [vmem:[%s156 + $0x70] sm:$0xff] %vm1508, %v1475
      %1517 = vst.msk [vmem:[%s156 + $0x80] sm:$0xff] %vm1508, %v1477
      %1518 = vst.msk [vmem:[%s156 + $0x90] sm:$0xff] %vm1508, %v1479
      %1519 = vst.msk [vmem:[%s156 + $0xa0] sm:$0xff] %vm1508, %v1481
      %1520 = vst.msk [vmem:[%s156 + $0xb0] sm:$0xff] %vm1508, %v1483
      %1521 = vst.msk [vmem:[%s156 + $0xc0] sm:$0xff] %vm1508, %v1485
      %1522 = vst.msk [vmem:[%s156 + $0xd0] sm:$0xff] %vm1508, %v1487
      %1523 = vst.msk [vmem:[%s156 + $0xe0] sm:$0xff] %vm1508, %v1489
      %1524 = vst.msk [vmem:[%s156 + $0xf0] sm:$0xff] %vm1508, %v1491
      %v1525 = vld [vmem:[%s1409 + $0x8] sm:$0xff]
      %v1526 = vld [vmem:[%s1409 + $0x18] sm:$0x3f]
      %1527 = vxpose.xlu0.b32.start [1/16] %v1525, 128
      %1528 = vxpose.xlu0.b32.cont [2/16] %v1526, 128
      %1529 = vxpose.xlu0.b32.cont [3/16] 0.0, 128
      %1530 = vxpose.xlu0.b32.cont [4/16] 0.0, 128
      %1531 = vxpose.xlu0.b32.cont [5/16] 0.0, 128
      %1532 = vxpose.xlu0.b32.cont [6/16] 0.0, 128
      %1533 = vxpose.xlu0.b32.cont [7/16] 0.0, 128
      %1534 = vxpose.xlu0.b32.cont [8/16] 0.0, 128
      %1535 = vxpose.xlu0.b32.cont [9/16] 0.0, 128
      %1536 = vxpose.xlu0.b32.cont [10/16] 0.0, 128
      %1537 = vxpose.xlu0.b32.cont [11/16] 0.0, 128
      %1538 = vxpose.xlu0.b32.cont [12/16] 0.0, 128
      %1539 = vxpose.xlu0.b32.cont [13/16] 0.0, 128
      %1540 = vxpose.xlu0.b32.cont [14/16] 0.0, 128
      %1541 = vxpose.xlu0.b32.cont [15/16] 0.0, 128
      %1542 = vxpose.xlu0.b32.end [16/16] 0.0, 128
      %v1543 = vpop.trf.xlu0
      %v1544 = vpop.trf.xlu0
      %v1545 = vpop.trf.xlu0
      %v1546 = vpop.trf.xlu0
      %v1547 = vpop.trf.xlu0
      %v1548 = vpop.trf.xlu0
      %v1549 = vpop.trf.xlu0
      %v1550 = vpop.trf.xlu0
      %v1551 = vpop.trf.xlu0
      %v1552 = vpop.trf.xlu0
      %v1553 = vpop.trf.xlu0
      %v1554 = vpop.trf.xlu0
      %v1555 = vpop.trf.xlu0
      %v1556 = vpop.trf.xlu0
      %v1557 = vpop.trf.xlu0
      %v1558 = vpop.trf.xlu0
      %1575 = vrot.lane.b32.xlu0 %v1543, 84
      %v1576 = vpop.permute.xlu0 %1575
      %1577 = vrot.lane.b32.xlu0 %v1544, 84
      %v1578 = vpop.permute.xlu0 %1577
      %1579 = vrot.lane.b32.xlu0 %v1545, 84
      %v1580 = vpop.permute.xlu0 %1579
      %1581 = vrot.lane.b32.xlu0 %v1546, 84
      %v1582 = vpop.permute.xlu0 %1581
      %1583 = vrot.lane.b32.xlu0 %v1547, 84
      %v1584 = vpop.permute.xlu0 %1583
      %1585 = vrot.lane.b32.xlu0 %v1548, 84
      %v1586 = vpop.permute.xlu0 %1585
      %1587 = vrot.lane.b32.xlu0 %v1549, 84
      %v1588 = vpop.permute.xlu0 %1587
      %1589 = vrot.lane.b32.xlu0 %v1550, 84
      %v1590 = vpop.permute.xlu0 %1589
      %1591 = vrot.lane.b32.xlu0 %v1551, 84
      %v1592 = vpop.permute.xlu0 %1591
      %1593 = vrot.lane.b32.xlu0 %v1552, 84
      %v1594 = vpop.permute.xlu0 %1593
      %1595 = vrot.lane.b32.xlu0 %v1553, 84
      %v1596 = vpop.permute.xlu0 %1595
      %1597 = vrot.lane.b32.xlu0 %v1554, 84
      %v1598 = vpop.permute.xlu0 %1597
      %1599 = vrot.lane.b32.xlu0 %v1555, 84
      %v1600 = vpop.permute.xlu0 %1599
      %1601 = vrot.lane.b32.xlu0 %v1556, 84
      %v1602 = vpop.permute.xlu0 %1601
      %1603 = vrot.lane.b32.xlu0 %v1557, 84
      %v1604 = vpop.permute.xlu0 %1603
      %1605 = vrot.lane.b32.xlu0 %v1558, 84
      %v1606 = vpop.permute.xlu0 %1605
      %1623 = vst.msk [vmem:[%s156 + $0x100] sm:$0xff] %vm1508, %v1576
      %1624 = vst.msk [vmem:[%s156 + $0x110] sm:$0xff] %vm1508, %v1578
      %1625 = vst.msk [vmem:[%s156 + $0x120] sm:$0xff] %vm1508, %v1580
      %1626 = vst.msk [vmem:[%s156 + $0x130] sm:$0xff] %vm1508, %v1582
      %1627 = vst.msk [vmem:[%s156 + $0x140] sm:$0xff] %vm1508, %v1584
      %1628 = vst.msk [vmem:[%s156 + $0x150] sm:$0xff] %vm1508, %v1586
      %1629 = vst.msk [vmem:[%s156 + $0x160] sm:$0xff] %vm1508, %v1588
      %1630 = vst.msk [vmem:[%s156 + $0x170] sm:$0xff] %vm1508, %v1590
      %1631 = vst.msk [vmem:[%s156 + $0x180] sm:$0xff] %vm1508, %v1592
      %1632 = vst.msk [vmem:[%s156 + $0x190] sm:$0xff] %vm1508, %v1594
      %1633 = vst.msk [vmem:[%s156 + $0x1a0] sm:$0xff] %vm1508, %v1596
      %1634 = vst.msk [vmem:[%s156 + $0x1b0] sm:$0xff] %vm1508, %v1598
      %1635 = vst.msk [vmem:[%s156 + $0x1c0] sm:$0xff] %vm1508, %v1600
      %1636 = vst.msk [vmem:[%s156 + $0x1d0] sm:$0xff] %vm1508, %v1602
      %1637 = vst.msk [vmem:[%s156 + $0x1e0] sm:$0xff] %vm1508, %v1604
      %1638 = vst.msk [vmem:[%s156 + $0x1f0] sm:$0xff] %vm1508, %v1606
      %s1639 = scalar_lea.vmem %s145, 224
      %v1640 = vld [vmem:[%s1639] sm:$0xff]
      %v1641 = vld [vmem:[%s1639 + $0x10] sm:$0x3f]
      %1642 = vxpose.xlu0.b32.start [1/16] %v1640, 128
      %1643 = vxpose.xlu0.b32.cont [2/16] %v1641, 128
      %1644 = vxpose.xlu0.b32.cont [3/16] 0.0, 128
      %1645 = vxpose.xlu0.b32.cont [4/16] 0.0, 128
      %1646 = vxpose.xlu0.b32.cont [5/16] 0.0, 128
      %1647 = vxpose.xlu0.b32.cont [6/16] 0.0, 128
      %1648 = vxpose.xlu0.b32.cont [7/16] 0.0, 128
      %1649 = vxpose.xlu0.b32.cont [8/16] 0.0, 128
      %1650 = vxpose.xlu0.b32.cont [9/16] 0.0, 128
      %1651 = vxpose.xlu0.b32.cont [10/16] 0.0, 128
      %1652 = vxpose.xlu0.b32.cont [11/16] 0.0, 128
      %1653 = vxpose.xlu0.b32.cont [12/16] 0.0, 128
      %1654 = vxpose.xlu0.b32.cont [13/16] 0.0, 128
      %1655 = vxpose.xlu0.b32.cont [14/16] 0.0, 128
      %1656 = vxpose.xlu0.b32.cont [15/16] 0.0, 128
      %1657 = vxpose.xlu0.b32.end [16/16] 0.0, 128
      %v1658 = vpop.trf.xlu0
      %v1659 = vpop.trf.xlu0
      %v1660 = vpop.trf.xlu0
      %v1661 = vpop.trf.xlu0
      %v1662 = vpop.trf.xlu0
      %v1663 = vpop.trf.xlu0
      %v1664 = vpop.trf.xlu0
      %v1665 = vpop.trf.xlu0
      %v1666 = vpop.trf.xlu0
      %v1667 = vpop.trf.xlu0
      %v1668 = vpop.trf.xlu0
      %v1669 = vpop.trf.xlu0
      %v1670 = vpop.trf.xlu0
      %v1671 = vpop.trf.xlu0
      %v1672 = vpop.trf.xlu0
      %v1673 = vpop.trf.xlu0
      %1690 = vrot.lane.b32.xlu0 %v1658, 98
      %v1691 = vpop.permute.xlu0 %1690
      %1692 = vrot.lane.b32.xlu0 %v1659, 98
      %v1693 = vpop.permute.xlu0 %1692
      %1694 = vrot.lane.b32.xlu0 %v1660, 98
      %v1695 = vpop.permute.xlu0 %1694
      %1696 = vrot.lane.b32.xlu0 %v1661, 98
      %v1697 = vpop.permute.xlu0 %1696
      %1698 = vrot.lane.b32.xlu0 %v1662, 98
      %v1699 = vpop.permute.xlu0 %1698
      %1700 = vrot.lane.b32.xlu0 %v1663, 98
      %v1701 = vpop.permute.xlu0 %1700
      %1702 = vrot.lane.b32.xlu0 %v1664, 98
      %v1703 = vpop.permute.xlu0 %1702
      %1704 = vrot.lane.b32.xlu0 %v1665, 98
      %v1705 = vpop.permute.xlu0 %1704
      %1706 = vrot.lane.b32.xlu0 %v1666, 98
      %v1707 = vpop.permute.xlu0 %1706
      %1708 = vrot.lane.b32.xlu0 %v1667, 98
      %v1709 = vpop.permute.xlu0 %1708
      %1710 = vrot.lane.b32.xlu0 %v1668, 98
      %v1711 = vpop.permute.xlu0 %1710
      %1712 = vrot.lane.b32.xlu0 %v1669, 98
      %v1713 = vpop.permute.xlu0 %1712
      %1714 = vrot.lane.b32.xlu0 %v1670, 98
      %v1715 = vpop.permute.xlu0 %1714
      %1716 = vrot.lane.b32.xlu0 %v1671, 98
      %v1717 = vpop.permute.xlu0 %1716
      %1718 = vrot.lane.b32.xlu0 %v1672, 98
      %v1719 = vpop.permute.xlu0 %1718
      %1720 = vrot.lane.b32.xlu0 %v1673, 98
      %v1721 = vpop.permute.xlu0 %1720
      %vm1738 = vcmask 917264
      %1739 = vst.msk [vmem:[%s156] sm:$0xff] %vm1738, %v1691
      %1740 = vst.msk [vmem:[%s156 + $0x10] sm:$0xff] %vm1738, %v1693
      %1741 = vst.msk [vmem:[%s156 + $0x20] sm:$0xff] %vm1738, %v1695
      %1742 = vst.msk [vmem:[%s156 + $0x30] sm:$0xff] %vm1738, %v1697
      %1743 = vst.msk [vmem:[%s156 + $0x40] sm:$0xff] %vm1738, %v1699
      %1744 = vst.msk [vmem:[%s156 + $0x50] sm:$0xff] %vm1738, %v1701
      %1745 = vst.msk [vmem:[%s156 + $0x60] sm:$0xff] %vm1738, %v1703
      %1746 = vst.msk [vmem:[%s156 + $0x70] sm:$0xff] %vm1738, %v1705
      %1747 = vst.msk [vmem:[%s156 + $0x80] sm:$0xff] %vm1738, %v1707
      %1748 = vst.msk [vmem:[%s156 + $0x90] sm:$0xff] %vm1738, %v1709
      %1749 = vst.msk [vmem:[%s156 + $0xa0] sm:$0xff] %vm1738, %v1711
      %1750 = vst.msk [vmem:[%s156 + $0xb0] sm:$0xff] %vm1738, %v1713
      %1751 = vst.msk [vmem:[%s156 + $0xc0] sm:$0xff] %vm1738, %v1715
      %1752 = vst.msk [vmem:[%s156 + $0xd0] sm:$0xff] %vm1738, %v1717
      %1753 = vst.msk [vmem:[%s156 + $0xe0] sm:$0xff] %vm1738, %v1719
      %1754 = vst.msk [vmem:[%s156 + $0xf0] sm:$0xff] %vm1738, %v1721
      %v1755 = vld [vmem:[%s1639 + $0x8] sm:$0xff]
      %v1756 = vld [vmem:[%s1639 + $0x18] sm:$0x3f]
      %1757 = vxpose.xlu0.b32.start [1/16] %v1755, 128
      %1758 = vxpose.xlu0.b32.cont [2/16] %v1756, 128
      %1759 = vxpose.xlu0.b32.cont [3/16] 0.0, 128
      %1760 = vxpose.xlu0.b32.cont [4/16] 0.0, 128
      %1761 = vxpose.xlu0.b32.cont [5/16] 0.0, 128
      %1762 = vxpose.xlu0.b32.cont [6/16] 0.0, 128
      %1763 = vxpose.xlu0.b32.cont [7/16] 0.0, 128
      %1764 = vxpose.xlu0.b32.cont [8/16] 0.0, 128
      %1765 = vxpose.xlu0.b32.cont [9/16] 0.0, 128
      %1766 = vxpose.xlu0.b32.cont [10/16] 0.0, 128
      %1767 = vxpose.xlu0.b32.cont [11/16] 0.0, 128
      %1768 = vxpose.xlu0.b32.cont [12/16] 0.0, 128
      %1769 = vxpose.xlu0.b32.cont [13/16] 0.0, 128
      %1770 = vxpose.xlu0.b32.cont [14/16] 0.0, 128
      %1771 = vxpose.xlu0.b32.cont [15/16] 0.0, 128
      %1772 = vxpose.xlu0.b32.end [16/16] 0.0, 128
      %v1773 = vpop.trf.xlu0
      %v1774 = vpop.trf.xlu0
      %v1775 = vpop.trf.xlu0
      %v1776 = vpop.trf.xlu0
      %v1777 = vpop.trf.xlu0
      %v1778 = vpop.trf.xlu0
      %v1779 = vpop.trf.xlu0
      %v1780 = vpop.trf.xlu0
      %v1781 = vpop.trf.xlu0
      %v1782 = vpop.trf.xlu0
      %v1783 = vpop.trf.xlu0
      %v1784 = vpop.trf.xlu0
      %v1785 = vpop.trf.xlu0
      %v1786 = vpop.trf.xlu0
      %v1787 = vpop.trf.xlu0
      %v1788 = vpop.trf.xlu0
      %1805 = vrot.lane.b32.xlu0 %v1773, 98
      %v1806 = vpop.permute.xlu0 %1805
      %1807 = vrot.lane.b32.xlu0 %v1774, 98
      %v1808 = vpop.permute.xlu0 %1807
      %1809 = vrot.lane.b32.xlu0 %v1775, 98
      %v1810 = vpop.permute.xlu0 %1809
      %1811 = vrot.lane.b32.xlu0 %v1776, 98
      %v1812 = vpop.permute.xlu0 %1811
      %1813 = vrot.lane.b32.xlu0 %v1777, 98
      %v1814 = vpop.permute.xlu0 %1813
      %1815 = vrot.lane.b32.xlu0 %v1778, 98
      %v1816 = vpop.permute.xlu0 %1815
      %1817 = vrot.lane.b32.xlu0 %v1779, 98
      %v1818 = vpop.permute.xlu0 %1817
      %1819 = vrot.lane.b32.xlu0 %v1780, 98
      %v1820 = vpop.permute.xlu0 %1819
      %1821 = vrot.lane.b32.xlu0 %v1781, 98
      %v1822 = vpop.permute.xlu0 %1821
      %1823 = vrot.lane.b32.xlu0 %v1782, 98
      %v1824 = vpop.permute.xlu0 %1823
      %1825 = vrot.lane.b32.xlu0 %v1783, 98
      %v1826 = vpop.permute.xlu0 %1825
      %1827 = vrot.lane.b32.xlu0 %v1784, 98
      %v1828 = vpop.permute.xlu0 %1827
      %1829 = vrot.lane.b32.xlu0 %v1785, 98
      %v1830 = vpop.permute.xlu0 %1829
      %1831 = vrot.lane.b32.xlu0 %v1786, 98
      %v1832 = vpop.permute.xlu0 %1831
      %1833 = vrot.lane.b32.xlu0 %v1787, 98
      %v1834 = vpop.permute.xlu0 %1833
      %1835 = vrot.lane.b32.xlu0 %v1788, 98
      %v1836 = vpop.permute.xlu0 %1835
      %1853 = vst.msk [vmem:[%s156 + $0x100] sm:$0xff] %vm1738, %v1806
      %1854 = vst.msk [vmem:[%s156 + $0x110] sm:$0xff] %vm1738, %v1808
      %1855 = vst.msk [vmem:[%s156 + $0x120] sm:$0xff] %vm1738, %v1810
      %1856 = vst.msk [vmem:[%s156 + $0x130] sm:$0xff] %vm1738, %v1812
      %1857 = vst.msk [vmem:[%s156 + $0x140] sm:$0xff] %vm1738, %v1814
      %1858 = vst.msk [vmem:[%s156 + $0x150] sm:$0xff] %vm1738, %v1816
      %1859 = vst.msk [vmem:[%s156 + $0x160] sm:$0xff] %vm1738, %v1818
      %1860 = vst.msk [vmem:[%s156 + $0x170] sm:$0xff] %vm1738, %v1820
      %1861 = vst.msk [vmem:[%s156 + $0x180] sm:$0xff] %vm1738, %v1822
      %1862 = vst.msk [vmem:[%s156 + $0x190] sm:$0xff] %vm1738, %v1824
      %1863 = vst.msk [vmem:[%s156 + $0x1a0] sm:$0xff] %vm1738, %v1826
      %1864 = vst.msk [vmem:[%s156 + $0x1b0] sm:$0xff] %vm1738, %v1828
      %1865 = vst.msk [vmem:[%s156 + $0x1c0] sm:$0xff] %vm1738, %v1830
      %1866 = vst.msk [vmem:[%s156 + $0x1d0] sm:$0xff] %vm1738, %v1832
      %1867 = vst.msk [vmem:[%s156 + $0x1e0] sm:$0xff] %vm1738, %v1834
      %1868 = vst.msk [vmem:[%s156 + $0x1f0] sm:$0xff] %vm1738, %v1836
      %s1869 = scalar_lea.vmem %s145, 256
      %v1870 = vld [vmem:[%s1869] sm:$0xff]
      %v1871 = vld [vmem:[%s1869 + $0x10] sm:$0x3f]
      %1872 = vxpose.xlu0.b32.start [1/16] %v1870, 128
      %1873 = vxpose.xlu0.b32.cont [2/16] %v1871, 128
      %1874 = vxpose.xlu0.b32.cont [3/16] 0.0, 128
      %1875 = vxpose.xlu0.b32.cont [4/16] 0.0, 128
      %1876 = vxpose.xlu0.b32.cont [5/16] 0.0, 128
      %1877 = vxpose.xlu0.b32.cont [6/16] 0.0, 128
      %1878 = vxpose.xlu0.b32.cont [7/16] 0.0, 128
      %1879 = vxpose.xlu0.b32.cont [8/16] 0.0, 128
      %1880 = vxpose.xlu0.b32.cont [9/16] 0.0, 128
      %1881 = vxpose.xlu0.b32.cont [10/16] 0.0, 128
      %1882 = vxpose.xlu0.b32.cont [11/16] 0.0, 128
      %1883 = vxpose.xlu0.b32.cont [12/16] 0.0, 128
      %1884 = vxpose.xlu0.b32.cont [13/16] 0.0, 128
      %1885 = vxpose.xlu0.b32.cont [14/16] 0.0, 128
      %1886 = vxpose.xlu0.b32.cont [15/16] 0.0, 128
      %1887 = vxpose.xlu0.b32.end [16/16] 0.0, 128
      %v1888 = vpop.trf.xlu0
      %v1889 = vpop.trf.xlu0
      %v1890 = vpop.trf.xlu0
      %v1891 = vpop.trf.xlu0
      %v1892 = vpop.trf.xlu0
      %v1893 = vpop.trf.xlu0
      %v1894 = vpop.trf.xlu0
      %v1895 = vpop.trf.xlu0
      %v1896 = vpop.trf.xlu0
      %v1897 = vpop.trf.xlu0
      %v1898 = vpop.trf.xlu0
      %v1899 = vpop.trf.xlu0
      %v1900 = vpop.trf.xlu0
      %v1901 = vpop.trf.xlu0
      %v1902 = vpop.trf.xlu0
      %v1903 = vpop.trf.xlu0
      %1920 = vrot.lane.b32.xlu0 %v1888, 112
      %v1921 = vpop.permute.xlu0 %1920
      %1922 = vrot.lane.b32.xlu0 %v1889, 112
      %v1923 = vpop.permute.xlu0 %1922
      %1924 = vrot.lane.b32.xlu0 %v1890, 112
      %v1925 = vpop.permute.xlu0 %1924
      %1926 = vrot.lane.b32.xlu0 %v1891, 112
      %v1927 = vpop.permute.xlu0 %1926
      %1928 = vrot.lane.b32.xlu0 %v1892, 112
      %v1929 = vpop.permute.xlu0 %1928
      %1930 = vrot.lane.b32.xlu0 %v1893, 112
      %v1931 = vpop.permute.xlu0 %1930
      %1932 = vrot.lane.b32.xlu0 %v1894, 112
      %v1933 = vpop.permute.xlu0 %1932
      %1934 = vrot.lane.b32.xlu0 %v1895, 112
      %v1935 = vpop.permute.xlu0 %1934
      %1936 = vrot.lane.b32.xlu0 %v1896, 112
      %v1937 = vpop.permute.xlu0 %1936
      %1938 = vrot.lane.b32.xlu0 %v1897, 112
      %v1939 = vpop.permute.xlu0 %1938
      %1940 = vrot.lane.b32.xlu0 %v1898, 112
      %v1941 = vpop.permute.xlu0 %1940
      %1942 = vrot.lane.b32.xlu0 %v1899, 112
      %v1943 = vpop.permute.xlu0 %1942
      %1944 = vrot.lane.b32.xlu0 %v1900, 112
      %v1945 = vpop.permute.xlu0 %1944
      %1946 = vrot.lane.b32.xlu0 %v1901, 112
      %v1947 = vpop.permute.xlu0 %1946
      %1948 = vrot.lane.b32.xlu0 %v1902, 112
      %v1949 = vpop.permute.xlu0 %1948
      %1950 = vrot.lane.b32.xlu0 %v1903, 112
      %v1951 = vpop.permute.xlu0 %1950
      %vm1968 = vcmask 1032064
      %1969 = vst.msk [vmem:[%s156] sm:$0xff] %vm1968, %v1921
      %1970 = vst.msk [vmem:[%s156 + $0x10] sm:$0xff] %vm1968, %v1923
      %1971 = vst.msk [vmem:[%s156 + $0x20] sm:$0xff] %vm1968, %v1925
      %1972 = vst.msk [vmem:[%s156 + $0x30] sm:$0xff] %vm1968, %v1927
      %1973 = vst.msk [vmem:[%s156 + $0x40] sm:$0xff] %vm1968, %v1929
      %1974 = vst.msk [vmem:[%s156 + $0x50] sm:$0xff] %vm1968, %v1931
      %1975 = vst.msk [vmem:[%s156 + $0x60] sm:$0xff] %vm1968, %v1933
      %1976 = vst.msk [vmem:[%s156 + $0x70] sm:$0xff] %vm1968, %v1935
      %1977 = vst.msk [vmem:[%s156 + $0x80] sm:$0xff] %vm1968, %v1937
      %1978 = vst.msk [vmem:[%s156 + $0x90] sm:$0xff] %vm1968, %v1939
      %1979 = vst.msk [vmem:[%s156 + $0xa0] sm:$0xff] %vm1968, %v1941
      %1980 = vst.msk [vmem:[%s156 + $0xb0] sm:$0xff] %vm1968, %v1943
      %1981 = vst.msk [vmem:[%s156 + $0xc0] sm:$0xff] %vm1968, %v1945
      %1982 = vst.msk [vmem:[%s156 + $0xd0] sm:$0xff] %vm1968, %v1947
      %1983 = vst.msk [vmem:[%s156 + $0xe0] sm:$0xff] %vm1968, %v1949
      %1984 = vst.msk [vmem:[%s156 + $0xf0] sm:$0xff] %vm1968, %v1951
      %v1985 = vld [vmem:[%s1869 + $0x8] sm:$0xff]
      %v1986 = vld [vmem:[%s1869 + $0x18] sm:$0x3f]
      %1987 = vxpose.xlu0.b32.start [1/16] %v1985, 128
      %1988 = vxpose.xlu0.b32.cont [2/16] %v1986, 128
      %1989 = vxpose.xlu0.b32.cont [3/16] 0.0, 128
      %1990 = vxpose.xlu0.b32.cont [4/16] 0.0, 128
      %1991 = vxpose.xlu0.b32.cont [5/16] 0.0, 128
      %1992 = vxpose.xlu0.b32.cont [6/16] 0.0, 128
      %1993 = vxpose.xlu0.b32.cont [7/16] 0.0, 128
      %1994 = vxpose.xlu0.b32.cont [8/16] 0.0, 128
      %1995 = vxpose.xlu0.b32.cont [9/16] 0.0, 128
      %1996 = vxpose.xlu0.b32.cont [10/16] 0.0, 128
      %1997 = vxpose.xlu0.b32.cont [11/16] 0.0, 128
      %1998 = vxpose.xlu0.b32.cont [12/16] 0.0, 128
      %1999 = vxpose.xlu0.b32.cont [13/16] 0.0, 128
      %2000 = vxpose.xlu0.b32.cont [14/16] 0.0, 128
      %2001 = vxpose.xlu0.b32.cont [15/16] 0.0, 128
      %2002 = vxpose.xlu0.b32.end [16/16] 0.0, 128
      %v2003 = vpop.trf.xlu0
      %v2004 = vpop.trf.xlu0
      %v2005 = vpop.trf.xlu0
      %v2006 = vpop.trf.xlu0
      %v2007 = vpop.trf.xlu0
      %v2008 = vpop.trf.xlu0
      %v2009 = vpop.trf.xlu0
      %v2010 = vpop.trf.xlu0
      %v2011 = vpop.trf.xlu0
      %v2012 = vpop.trf.xlu0
      %v2013 = vpop.trf.xlu0
      %v2014 = vpop.trf.xlu0
      %v2015 = vpop.trf.xlu0
      %v2016 = vpop.trf.xlu0
      %v2017 = vpop.trf.xlu0
      %v2018 = vpop.trf.xlu0
      %2035 = vrot.lane.b32.xlu0 %v2003, 112
      %v2036 = vpop.permute.xlu0 %2035
      %2037 = vrot.lane.b32.xlu0 %v2004, 112
      %v2038 = vpop.permute.xlu0 %2037
      %2039 = vrot.lane.b32.xlu0 %v2005, 112
      %v2040 = vpop.permute.xlu0 %2039
      %2041 = vrot.lane.b32.xlu0 %v2006, 112
      %v2042 = vpop.permute.xlu0 %2041
      %2043 = vrot.lane.b32.xlu0 %v2007, 112
      %v2044 = vpop.permute.xlu0 %2043
      %2045 = vrot.lane.b32.xlu0 %v2008, 112
      %v2046 = vpop.permute.xlu0 %2045
      %2047 = vrot.lane.b32.xlu0 %v2009, 112
      %v2048 = vpop.permute.xlu0 %2047
      %2049 = vrot.lane.b32.xlu0 %v2010, 112
      %v2050 = vpop.permute.xlu0 %2049
      %2051 = vrot.lane.b32.xlu0 %v2011, 112
      %v2052 = vpop.permute.xlu0 %2051
      %2053 = vrot.lane.b32.xlu0 %v2012, 112
      %v2054 = vpop.permute.xlu0 %2053
      %2055 = vrot.lane.b32.xlu0 %v2013, 112
      %v2056 = vpop.permute.xlu0 %2055
      %2057 = vrot.lane.b32.xlu0 %v2014, 112
      %v2058 = vpop.permute.xlu0 %2057
      %2059 = vrot.lane.b32.xlu0 %v2015, 112
      %v2060 = vpop.permute.xlu0 %2059
      %2061 = vrot.lane.b32.xlu0 %v2016, 112
      %v2062 = vpop.permute.xlu0 %2061
      %2063 = vrot.lane.b32.xlu0 %v2017, 112
      %v2064 = vpop.permute.xlu0 %2063
      %2065 = vrot.lane.b32.xlu0 %v2018, 112
      %v2066 = vpop.permute.xlu0 %2065
      %2083 = vst.msk [vmem:[%s156 + $0x100] sm:$0xff] %vm1968, %v2036
      %2084 = vst.msk [vmem:[%s156 + $0x110] sm:$0xff] %vm1968, %v2038
      %2085 = vst.msk [vmem:[%s156 + $0x120] sm:$0xff] %vm1968, %v2040
      %2086 = vst.msk [vmem:[%s156 + $0x130] sm:$0xff] %vm1968, %v2042
      %2087 = vst.msk [vmem:[%s156 + $0x140] sm:$0xff] %vm1968, %v2044
      %2088 = vst.msk [vmem:[%s156 + $0x150] sm:$0xff] %vm1968, %v2046
      %2089 = vst.msk [vmem:[%s156 + $0x160] sm:$0xff] %vm1968, %v2048
      %2090 = vst.msk [vmem:[%s156 + $0x170] sm:$0xff] %vm1968, %v2050
      %2091 = vst.msk [vmem:[%s156 + $0x180] sm:$0xff] %vm1968, %v2052
      %2092 = vst.msk [vmem:[%s156 + $0x190] sm:$0xff] %vm1968, %v2054
      %2093 = vst.msk [vmem:[%s156 + $0x1a0] sm:$0xff] %vm1968, %v2056
      %2094 = vst.msk [vmem:[%s156 + $0x1b0] sm:$0xff] %vm1968, %v2058
      %2095 = vst.msk [vmem:[%s156 + $0x1c0] sm:$0xff] %vm1968, %v2060
      %2096 = vst.msk [vmem:[%s156 + $0x1d0] sm:$0xff] %vm1968, %v2062
      %2097 = vst.msk [vmem:[%s156 + $0x1e0] sm:$0xff] %vm1968, %v2064
      %2098 = vst.msk [vmem:[%s156 + $0x1f0] sm:$0xff] %vm1968, %v2066
      %s2099 = scalar_lea.vmem %s145, 288
      %v2100 = vld [vmem:[%s2099] sm:$0xff]
      %v2101 = vld [vmem:[%s2099 + $0x10] sm:$0x3f]
      %2102 = vxpose.xlu0.b32.start [1/16] %v2100, 128
      %2103 = vxpose.xlu0.b32.cont [2/16] %v2101, 128
      %2104 = vxpose.xlu0.b32.cont [3/16] 0.0, 128
      %2105 = vxpose.xlu0.b32.cont [4/16] 0.0, 128
      %2106 = vxpose.xlu0.b32.cont [5/16] 0.0, 128
      %2107 = vxpose.xlu0.b32.cont [6/16] 0.0, 128
      %2108 = vxpose.xlu0.b32.cont [7/16] 0.0, 128
      %2109 = vxpose.xlu0.b32.cont [8/16] 0.0, 128
      %2110 = vxpose.xlu0.b32.cont [9/16] 0.0, 128
      %2111 = vxpose.xlu0.b32.cont [10/16] 0.0, 128
      %2112 = vxpose.xlu0.b32.cont [11/16] 0.0, 128
      %2113 = vxpose.xlu0.b32.cont [12/16] 0.0, 128
      %2114 = vxpose.xlu0.b32.cont [13/16] 0.0, 128
      %2115 = vxpose.xlu0.b32.cont [14/16] 0.0, 128
      %2116 = vxpose.xlu0.b32.cont [15/16] 0.0, 128
      %2117 = vxpose.xlu0.b32.end [16/16] 0.0, 128
      %v2118 = vpop.trf.xlu0
      %v2119 = vpop.trf.xlu0
      %v2120 = vpop.trf.xlu0
      %v2121 = vpop.trf.xlu0
      %v2122 = vpop.trf.xlu0
      %v2123 = vpop.trf.xlu0
      %v2124 = vpop.trf.xlu0
      %v2125 = vpop.trf.xlu0
      %v2126 = vpop.trf.xlu0
      %v2127 = vpop.trf.xlu0
      %v2128 = vpop.trf.xlu0
      %v2129 = vpop.trf.xlu0
      %v2130 = vpop.trf.xlu0
      %v2131 = vpop.trf.xlu0
      %v2132 = vpop.trf.xlu0
      %v2133 = vpop.trf.xlu0
      %2150 = vrot.lane.b32.xlu0 %v2118, 126
      %v2151 = vpop.permute.xlu0 %2150
      %2152 = vrot.lane.b32.xlu0 %v2119, 126
      %v2153 = vpop.permute.xlu0 %2152
      %2154 = vrot.lane.b32.xlu0 %v2120, 126
      %v2155 = vpop.permute.xlu0 %2154
      %2156 = vrot.lane.b32.xlu0 %v2121, 126
      %v2157 = vpop.permute.xlu0 %2156
      %2158 = vrot.lane.b32.xlu0 %v2122, 126
      %v2159 = vpop.permute.xlu0 %2158
      %2160 = vrot.lane.b32.xlu0 %v2123, 126
      %v2161 = vpop.permute.xlu0 %2160
      %2162 = vrot.lane.b32.xlu0 %v2124, 126
      %v2163 = vpop.permute.xlu0 %2162
      %2164 = vrot.lane.b32.xlu0 %v2125, 126
      %v2165 = vpop.permute.xlu0 %2164
      %2166 = vrot.lane.b32.xlu0 %v2126, 126
      %v2167 = vpop.permute.xlu0 %2166
      %2168 = vrot.lane.b32.xlu0 %v2127, 126
      %v2169 = vpop.permute.xlu0 %2168
      %2170 = vrot.lane.b32.xlu0 %v2128, 126
      %v2171 = vpop.permute.xlu0 %2170
      %2172 = vrot.lane.b32.xlu0 %v2129, 126
      %v2173 = vpop.permute.xlu0 %2172
      %2174 = vrot.lane.b32.xlu0 %v2130, 126
      %v2175 = vpop.permute.xlu0 %2174
      %2176 = vrot.lane.b32.xlu0 %v2131, 126
      %v2177 = vpop.permute.xlu0 %2176
      %2178 = vrot.lane.b32.xlu0 %v2132, 126
      %v2179 = vpop.permute.xlu0 %2178
      %2180 = vrot.lane.b32.xlu0 %v2133, 126
      %v2181 = vpop.permute.xlu0 %2180
      %vm2198 = vcmask 1048560
      %2199 = vst.msk [vmem:[%s156] sm:$0xff] %vm2198, %v2151
      %vm2200 = vcmask 97280
      %2201 = vst.msk [vmem:[%s156 + $0x8] sm:$0xff] %vm2200, %v2151
      %2202 = vst.msk [vmem:[%s156 + $0x10] sm:$0xff] %vm2198, %v2153
      %2203 = vst.msk [vmem:[%s156 + $0x18] sm:$0xff] %vm2200, %v2153
      %2204 = vst.msk [vmem:[%s156 + $0x20] sm:$0xff] %vm2198, %v2155
      %2205 = vst.msk [vmem:[%s156 + $0x28] sm:$0xff] %vm2200, %v2155
      %2206 = vst.msk [vmem:[%s156 + $0x30] sm:$0xff] %vm2198, %v2157
      %2207 = vst.msk [vmem:[%s156 + $0x38] sm:$0xff] %vm2200, %v2157
      %2208 = vst.msk [vmem:[%s156 + $0x40] sm:$0xff] %vm2198, %v2159
      %2209 = vst.msk [vmem:[%s156 + $0x48] sm:$0xff] %vm2200, %v2159
      %2210 = vst.msk [vmem:[%s156 + $0x50] sm:$0xff] %vm2198, %v2161
      %2211 = vst.msk [vmem:[%s156 + $0x58] sm:$0xff] %vm2200, %v2161
      %2212 = vst.msk [vmem:[%s156 + $0x60] sm:$0xff] %vm2198, %v2163
      %2213 = vst.msk [vmem:[%s156 + $0x68] sm:$0xff] %vm2200, %v2163
      %2214 = vst.msk [vmem:[%s156 + $0x70] sm:$0xff] %vm2198, %v2165
      %2215 = vst.msk [vmem:[%s156 + $0x78] sm:$0xff] %vm2200, %v2165
      %2216 = vst.msk [vmem:[%s156 + $0x80] sm:$0xff] %vm2198, %v2167
      %2217 = vst.msk [vmem:[%s156 + $0x88] sm:$0xff] %vm2200, %v2167
      %2218 = vst.msk [vmem:[%s156 + $0x90] sm:$0xff] %vm2198, %v2169
      %2219 = vst.msk [vmem:[%s156 + $0x98] sm:$0xff] %vm2200, %v2169
      %2220 = vst.msk [vmem:[%s156 + $0xa0] sm:$0xff] %vm2198, %v2171
      %2221 = vst.msk [vmem:[%s156 + $0xa8] sm:$0xff] %vm2200, %v2171
      %2222 = vst.msk [vmem:[%s156 + $0xb0] sm:$0xff] %vm2198, %v2173
      %2223 = vst.msk [vmem:[%s156 + $0xb8] sm:$0xff] %vm2200, %v2173
      %2224 = vst.msk [vmem:[%s156 + $0xc0] sm:$0xff] %vm2198, %v2175
      %2225 = vst.msk [vmem:[%s156 + $0xc8] sm:$0xff] %vm2200, %v2175
      %2226 = vst.msk [vmem:[%s156 + $0xd0] sm:$0xff] %vm2198, %v2177
      %2227 = vst.msk [vmem:[%s156 + $0xd8] sm:$0xff] %vm2200, %v2177
      %2228 = vst.msk [vmem:[%s156 + $0xe0] sm:$0xff] %vm2198, %v2179
      %2229 = vst.msk [vmem:[%s156 + $0xe8] sm:$0xff] %vm2200, %v2179
      %2230 = vst.msk [vmem:[%s156 + $0xf0] sm:$0xff] %vm2198, %v2181
      %2231 = vst.msk [vmem:[%s156 + $0xf8] sm:$0xff] %vm2200, %v2181
      %v2232 = vld [vmem:[%s2099 + $0x8] sm:$0xff]
      %v2233 = vld [vmem:[%s2099 + $0x18] sm:$0x3f]
      %2234 = vxpose.xlu0.b32.start [1/16] %v2232, 128
      %2235 = vxpose.xlu0.b32.cont [2/16] %v2233, 128
      %2236 = vxpose.xlu0.b32.cont [3/16] 0.0, 128
      %2237 = vxpose.xlu0.b32.cont [4/16] 0.0, 128
      %2238 = vxpose.xlu0.b32.cont [5/16] 0.0, 128
      %2239 = vxpose.xlu0.b32.cont [6/16] 0.0, 128
      %2240 = vxpose.xlu0.b32.cont [7/16] 0.0, 128
      %2241 = vxpose.xlu0.b32.cont [8/16] 0.0, 128
      %2242 = vxpose.xlu0.b32.cont [9/16] 0.0, 128
      %2243 = vxpose.xlu0.b32.cont [10/16] 0.0, 128
      %2244 = vxpose.xlu0.b32.cont [11/16] 0.0, 128
      %2245 = vxpose.xlu0.b32.cont [12/16] 0.0, 128
      %2246 = vxpose.xlu0.b32.cont [13/16] 0.0, 128
      %2247 = vxpose.xlu0.b32.cont [14/16] 0.0, 128
      %2248 = vxpose.xlu0.b32.cont [15/16] 0.0, 128
      %2249 = vxpose.xlu0.b32.end [16/16] 0.0, 128
      %v2250 = vpop.trf.xlu0
      %v2251 = vpop.trf.xlu0
      %v2252 = vpop.trf.xlu0
      %v2253 = vpop.trf.xlu0
      %v2254 = vpop.trf.xlu0
      %v2255 = vpop.trf.xlu0
      %v2256 = vpop.trf.xlu0
      %v2257 = vpop.trf.xlu0
      %v2258 = vpop.trf.xlu0
      %v2259 = vpop.trf.xlu0
      %v2260 = vpop.trf.xlu0
      %v2261 = vpop.trf.xlu0
      %v2262 = vpop.trf.xlu0
      %v2263 = vpop.trf.xlu0
      %v2264 = vpop.trf.xlu0
      %v2265 = vpop.trf.xlu0
      %2282 = vrot.lane.b32.xlu0 %v2250, 126
      %v2283 = vpop.permute.xlu0 %2282
      %2284 = vrot.lane.b32.xlu0 %v2251, 126
      %v2285 = vpop.permute.xlu0 %2284
      %2286 = vrot.lane.b32.xlu0 %v2252, 126
      %v2287 = vpop.permute.xlu0 %2286
      %2288 = vrot.lane.b32.xlu0 %v2253, 126
      %v2289 = vpop.permute.xlu0 %2288
      %2290 = vrot.lane.b32.xlu0 %v2254, 126
      %v2291 = vpop.permute.xlu0 %2290
      %2292 = vrot.lane.b32.xlu0 %v2255, 126
      %v2293 = vpop.permute.xlu0 %2292
      %2294 = vrot.lane.b32.xlu0 %v2256, 126
      %v2295 = vpop.permute.xlu0 %2294
      %2296 = vrot.lane.b32.xlu0 %v2257, 126
      %v2297 = vpop.permute.xlu0 %2296
      %2298 = vrot.lane.b32.xlu0 %v2258, 126
      %v2299 = vpop.permute.xlu0 %2298
      %2300 = vrot.lane.b32.xlu0 %v2259, 126
      %v2301 = vpop.permute.xlu0 %2300
      %2302 = vrot.lane.b32.xlu0 %v2260, 126
      %v2303 = vpop.permute.xlu0 %2302
      %2304 = vrot.lane.b32.xlu0 %v2261, 126
      %v2305 = vpop.permute.xlu0 %2304
      %2306 = vrot.lane.b32.xlu0 %v2262, 126
      %v2307 = vpop.permute.xlu0 %2306
      %2308 = vrot.lane.b32.xlu0 %v2263, 126
      %v2309 = vpop.permute.xlu0 %2308
      %2310 = vrot.lane.b32.xlu0 %v2264, 126
      %v2311 = vpop.permute.xlu0 %2310
      %2312 = vrot.lane.b32.xlu0 %v2265, 126
      %v2313 = vpop.permute.xlu0 %2312
      %2330 = vst.msk [vmem:[%s156 + $0x100] sm:$0xff] %vm2198, %v2283
      %2331 = vst.msk [vmem:[%s156 + $0x108] sm:$0xff] %vm2200, %v2283
      %2332 = vst.msk [vmem:[%s156 + $0x110] sm:$0xff] %vm2198, %v2285
      %2333 = vst.msk [vmem:[%s156 + $0x118] sm:$0xff] %vm2200, %v2285
      %2334 = vst.msk [vmem:[%s156 + $0x120] sm:$0xff] %vm2198, %v2287
      %2335 = vst.msk [vmem:[%s156 + $0x128] sm:$0xff] %vm2200, %v2287
      %2336 = vst.msk [vmem:[%s156 + $0x130] sm:$0xff] %vm2198, %v2289
      %2337 = vst.msk [vmem:[%s156 + $0x138] sm:$0xff] %vm2200, %v2289
      %2338 = vst.msk [vmem:[%s156 + $0x140] sm:$0xff] %vm2198, %v2291
      %2339 = vst.msk [vmem:[%s156 + $0x148] sm:$0xff] %vm2200, %v2291
      %2340 = vst.msk [vmem:[%s156 + $0x150] sm:$0xff] %vm2198, %v2293
      %2341 = vst.msk [vmem:[%s156 + $0x158] sm:$0xff] %vm2200, %v2293
      %2342 = vst.msk [vmem:[%s156 + $0x160] sm:$0xff] %vm2198, %v2295
      %2343 = vst.msk [vmem:[%s156 + $0x168] sm:$0xff] %vm2200, %v2295
      %2344 = vst.msk [vmem:[%s156 + $0x170] sm:$0xff] %vm2198, %v2297
      %2345 = vst.msk [vmem:[%s156 + $0x178] sm:$0xff] %vm2200, %v2297
      %2346 = vst.msk [vmem:[%s156 + $0x180] sm:$0xff] %vm2198, %v2299
      %2347 = vst.msk [vmem:[%s156 + $0x188] sm:$0xff] %vm2200, %v2299
      %2348 = vst.msk [vmem:[%s156 + $0x190] sm:$0xff] %vm2198, %v2301
      %2349 = vst.msk [vmem:[%s156 + $0x198] sm:$0xff] %vm2200, %v2301
      %2350 = vst.msk [vmem:[%s156 + $0x1a0] sm:$0xff] %vm2198, %v2303
      %2351 = vst.msk [vmem:[%s156 + $0x1a8] sm:$0xff] %vm2200, %v2303
      %2352 = vst.msk [vmem:[%s156 + $0x1b0] sm:$0xff] %vm2198, %v2305
      %2353 = vst.msk [vmem:[%s156 + $0x1b8] sm:$0xff] %vm2200, %v2305
      %2354 = vst.msk [vmem:[%s156 + $0x1c0] sm:$0xff] %vm2198, %v2307
      %2355 = vst.msk [vmem:[%s156 + $0x1c8] sm:$0xff] %vm2200, %v2307
      %2356 = vst.msk [vmem:[%s156 + $0x1d0] sm:$0xff] %vm2198, %v2309
      %2357 = vst.msk [vmem:[%s156 + $0x1d8] sm:$0xff] %vm2200, %v2309
      %2358 = vst.msk [vmem:[%s156 + $0x1e0] sm:$0xff] %vm2198, %v2311
      %2359 = vst.msk [vmem:[%s156 + $0x1e8] sm:$0xff] %vm2200, %v2311
      %2360 = vst.msk [vmem:[%s156 + $0x1f0] sm:$0xff] %vm2198, %v2313
      %2361 = vst.msk [vmem:[%s156 + $0x1f8] sm:$0xff] %vm2200, %v2313
      %s2362 = scalar_lea.vmem %s145, 320
      %v2363 = vld [vmem:[%s2362] sm:$0xff]
      %v2364 = vld [vmem:[%s2362 + $0x10] sm:$0x3f]
      %2365 = vxpose.xlu0.b32.start [1/16] %v2363, 128
      %2366 = vxpose.xlu0.b32.cont [2/16] %v2364, 128
      %2367 = vxpose.xlu0.b32.cont [3/16] 0.0, 128
      %2368 = vxpose.xlu0.b32.cont [4/16] 0.0, 128
      %2369 = vxpose.xlu0.b32.cont [5/16] 0.0, 128
      %2370 = vxpose.xlu0.b32.cont [6/16] 0.0, 128
      %2371 = vxpose.xlu0.b32.cont [7/16] 0.0, 128
      %2372 = vxpose.xlu0.b32.cont [8/16] 0.0, 128
      %2373 = vxpose.xlu0.b32.cont [9/16] 0.0, 128
      %2374 = vxpose.xlu0.b32.cont [10/16] 0.0, 128
      %2375 = vxpose.xlu0.b32.cont [11/16] 0.0, 128
      %2376 = vxpose.xlu0.b32.cont [12/16] 0.0, 128
      %2377 = vxpose.xlu0.b32.cont [13/16] 0.0, 128
      %2378 = vxpose.xlu0.b32.cont [14/16] 0.0, 128
      %2379 = vxpose.xlu0.b32.cont [15/16] 0.0, 128
      %2380 = vxpose.xlu0.b32.end [16/16] 0.0, 128
      %v2381 = vpop.trf.xlu0
      %v2382 = vpop.trf.xlu0
      %v2383 = vpop.trf.xlu0
      %v2384 = vpop.trf.xlu0
      %v2385 = vpop.trf.xlu0
      %v2386 = vpop.trf.xlu0
      %v2387 = vpop.trf.xlu0
      %v2388 = vpop.trf.xlu0
      %v2389 = vpop.trf.xlu0
      %v2390 = vpop.trf.xlu0
      %v2391 = vpop.trf.xlu0
      %v2392 = vpop.trf.xlu0
      %v2393 = vpop.trf.xlu0
      %v2394 = vpop.trf.xlu0
      %v2395 = vpop.trf.xlu0
      %v2396 = vpop.trf.xlu0
      %2413 = vrot.lane.b32.xlu0 %v2381, 12
      %v2414 = vpop.permute.xlu0 %2413
      %2415 = vrot.lane.b32.xlu0 %v2382, 12
      %v2416 = vpop.permute.xlu0 %2415
      %2417 = vrot.lane.b32.xlu0 %v2383, 12
      %v2418 = vpop.permute.xlu0 %2417
      %2419 = vrot.lane.b32.xlu0 %v2384, 12
      %v2420 = vpop.permute.xlu0 %2419
      %2421 = vrot.lane.b32.xlu0 %v2385, 12
      %v2422 = vpop.permute.xlu0 %2421
      %2423 = vrot.lane.b32.xlu0 %v2386, 12
      %v2424 = vpop.permute.xlu0 %2423
      %2425 = vrot.lane.b32.xlu0 %v2387, 12
      %v2426 = vpop.permute.xlu0 %2425
      %2427 = vrot.lane.b32.xlu0 %v2388, 12
      %v2428 = vpop.permute.xlu0 %2427
      %2429 = vrot.lane.b32.xlu0 %v2389, 12
      %v2430 = vpop.permute.xlu0 %2429
      %2431 = vrot.lane.b32.xlu0 %v2390, 12
      %v2432 = vpop.permute.xlu0 %2431
      %2433 = vrot.lane.b32.xlu0 %v2391, 12
      %v2434 = vpop.permute.xlu0 %2433
      %2435 = vrot.lane.b32.xlu0 %v2392, 12
      %v2436 = vpop.permute.xlu0 %2435
      %2437 = vrot.lane.b32.xlu0 %v2393, 12
      %v2438 = vpop.permute.xlu0 %2437
      %2439 = vrot.lane.b32.xlu0 %v2394, 12
      %v2440 = vpop.permute.xlu0 %2439
      %2441 = vrot.lane.b32.xlu0 %v2395, 12
      %v2442 = vpop.permute.xlu0 %2441
      %2443 = vrot.lane.b32.xlu0 %v2396, 12
      %v2444 = vpop.permute.xlu0 %2443
      %vm2461 = vcmask 212064
      %2462 = vst.msk [vmem:[%s156 + $0x8] sm:$0xff] %vm2461, %v2414
      %2463 = vst.msk [vmem:[%s156 + $0x18] sm:$0xff] %vm2461, %v2416
      %2464 = vst.msk [vmem:[%s156 + $0x28] sm:$0xff] %vm2461, %v2418
      %2465 = vst.msk [vmem:[%s156 + $0x38] sm:$0xff] %vm2461, %v2420
      %2466 = vst.msk [vmem:[%s156 + $0x48] sm:$0xff] %vm2461, %v2422
      %2467 = vst.msk [vmem:[%s156 + $0x58] sm:$0xff] %vm2461, %v2424
      %2468 = vst.msk [vmem:[%s156 + $0x68] sm:$0xff] %vm2461, %v2426
      %2469 = vst.msk [vmem:[%s156 + $0x78] sm:$0xff] %vm2461, %v2428
      %2470 = vst.msk [vmem:[%s156 + $0x88] sm:$0xff] %vm2461, %v2430
      %2471 = vst.msk [vmem:[%s156 + $0x98] sm:$0xff] %vm2461, %v2432
      %2472 = vst.msk [vmem:[%s156 + $0xa8] sm:$0xff] %vm2461, %v2434
      %2473 = vst.msk [vmem:[%s156 + $0xb8] sm:$0xff] %vm2461, %v2436
      %2474 = vst.msk [vmem:[%s156 + $0xc8] sm:$0xff] %vm2461, %v2438
      %2475 = vst.msk [vmem:[%s156 + $0xd8] sm:$0xff] %vm2461, %v2440
      %2476 = vst.msk [vmem:[%s156 + $0xe8] sm:$0xff] %vm2461, %v2442
      %2477 = vst.msk [vmem:[%s156 + $0xf8] sm:$0xff] %vm2461, %v2444
      %v2478 = vld [vmem:[%s2362 + $0x8] sm:$0xff]
      %v2479 = vld [vmem:[%s2362 + $0x18] sm:$0x3f]
      %2480 = vxpose.xlu0.b32.start [1/16] %v2478, 128
      %2481 = vxpose.xlu0.b32.cont [2/16] %v2479, 128
      %2482 = vxpose.xlu0.b32.cont [3/16] 0.0, 128
      %2483 = vxpose.xlu0.b32.cont [4/16] 0.0, 128
      %2484 = vxpose.xlu0.b32.cont [5/16] 0.0, 128
      %2485 = vxpose.xlu0.b32.cont [6/16] 0.0, 128
      %2486 = vxpose.xlu0.b32.cont [7/16] 0.0, 128
      %2487 = vxpose.xlu0.b32.cont [8/16] 0.0, 128
      %2488 = vxpose.xlu0.b32.cont [9/16] 0.0, 128
      %2489 = vxpose.xlu0.b32.cont [10/16] 0.0, 128
      %2490 = vxpose.xlu0.b32.cont [11/16] 0.0, 128
      %2491 = vxpose.xlu0.b32.cont [12/16] 0.0, 128
      %2492 = vxpose.xlu0.b32.cont [13/16] 0.0, 128
      %2493 = vxpose.xlu0.b32.cont [14/16] 0.0, 128
      %2494 = vxpose.xlu0.b32.cont [15/16] 0.0, 128
      %2495 = vxpose.xlu0.b32.end [16/16] 0.0, 128
      %v2496 = vpop.trf.xlu0
      %v2497 = vpop.trf.xlu0
      %v2498 = vpop.trf.xlu0
      %v2499 = vpop.trf.xlu0
      %v2500 = vpop.trf.xlu0
      %v2501 = vpop.trf.xlu0
      %v2502 = vpop.trf.xlu0
      %v2503 = vpop.trf.xlu0
      %v2504 = vpop.trf.xlu0
      %v2505 = vpop.trf.xlu0
      %v2506 = vpop.trf.xlu0
      %v2507 = vpop.trf.xlu0
      %v2508 = vpop.trf.xlu0
      %v2509 = vpop.trf.xlu0
      %v2510 = vpop.trf.xlu0
      %v2511 = vpop.trf.xlu0
      %2528 = vrot.lane.b32.xlu0 %v2496, 12
      %v2529 = vpop.permute.xlu0 %2528
      %2530 = vrot.lane.b32.xlu0 %v2497, 12
      %v2531 = vpop.permute.xlu0 %2530
      %2532 = vrot.lane.b32.xlu0 %v2498, 12
      %v2533 = vpop.permute.xlu0 %2532
      %2534 = vrot.lane.b32.xlu0 %v2499, 12
      %v2535 = vpop.permute.xlu0 %2534
      %2536 = vrot.lane.b32.xlu0 %v2500, 12
      %v2537 = vpop.permute.xlu0 %2536
      %2538 = vrot.lane.b32.xlu0 %v2501, 12
      %v2539 = vpop.permute.xlu0 %2538
      %2540 = vrot.lane.b32.xlu0 %v2502, 12
      %v2541 = vpop.permute.xlu0 %2540
      %2542 = vrot.lane.b32.xlu0 %v2503, 12
      %v2543 = vpop.permute.xlu0 %2542
      %2544 = vrot.lane.b32.xlu0 %v2504, 12
      %v2545 = vpop.permute.xlu0 %2544
      %2546 = vrot.lane.b32.xlu0 %v2505, 12
      %v2547 = vpop.permute.xlu0 %2546
      %2548 = vrot.lane.b32.xlu0 %v2506, 12
      %v2549 = vpop.permute.xlu0 %2548
      %2550 = vrot.lane.b32.xlu0 %v2507, 12
      %v2551 = vpop.permute.xlu0 %2550
      %2552 = vrot.lane.b32.xlu0 %v2508, 12
      %v2553 = vpop.permute.xlu0 %2552
      %2554 = vrot.lane.b32.xlu0 %v2509, 12
      %v2555 = vpop.permute.xlu0 %2554
      %2556 = vrot.lane.b32.xlu0 %v2510, 12
      %v2557 = vpop.permute.xlu0 %2556
      %2558 = vrot.lane.b32.xlu0 %v2511, 12
      %v2559 = vpop.permute.xlu0 %2558
      %2576 = vst.msk [vmem:[%s156 + $0x108] sm:$0xff] %vm2461, %v2529
      %2577 = vst.msk [vmem:[%s156 + $0x118] sm:$0xff] %vm2461, %v2531
      %2578 = vst.msk [vmem:[%s156 + $0x128] sm:$0xff] %vm2461, %v2533
      %2579 = vst.msk [vmem:[%s156 + $0x138] sm:$0xff] %vm2461, %v2535
      %2580 = vst.msk [vmem:[%s156 + $0x148] sm:$0xff] %vm2461, %v2537
      %2581 = vst.msk [vmem:[%s156 + $0x158] sm:$0xff] %vm2461, %v2539
      %2582 = vst.msk [vmem:[%s156 + $0x168] sm:$0xff] %vm2461, %v2541
      %2583 = vst.msk [vmem:[%s156 + $0x178] sm:$0xff] %vm2461, %v2543
      %2584 = vst.msk [vmem:[%s156 + $0x188] sm:$0xff] %vm2461, %v2545
      %2585 = vst.msk [vmem:[%s156 + $0x198] sm:$0xff] %vm2461, %v2547
      %2586 = vst.msk [vmem:[%s156 + $0x1a8] sm:$0xff] %vm2461, %v2549
      %2587 = vst.msk [vmem:[%s156 + $0x1b8] sm:$0xff] %vm2461, %v2551
      %2588 = vst.msk [vmem:[%s156 + $0x1c8] sm:$0xff] %vm2461, %v2553
      %2589 = vst.msk [vmem:[%s156 + $0x1d8] sm:$0xff] %vm2461, %v2555
      %2590 = vst.msk [vmem:[%s156 + $0x1e8] sm:$0xff] %vm2461, %v2557
      %2591 = vst.msk [vmem:[%s156 + $0x1f8] sm:$0xff] %vm2461, %v2559
      %s2592 = scalar_lea.vmem %s145, 352
      %v2593 = vld [vmem:[%s2592] sm:$0xff]
      %v2594 = vld [vmem:[%s2592 + $0x10] sm:$0x3f]
      %2595 = vxpose.xlu0.b32.start [1/16] %v2593, 128
      %2596 = vxpose.xlu0.b32.cont [2/16] %v2594, 128
      %2597 = vxpose.xlu0.b32.cont [3/16] 0.0, 128
      %2598 = vxpose.xlu0.b32.cont [4/16] 0.0, 128
      %2599 = vxpose.xlu0.b32.cont [5/16] 0.0, 128
      %2600 = vxpose.xlu0.b32.cont [6/16] 0.0, 128
      %2601 = vxpose.xlu0.b32.cont [7/16] 0.0, 128
      %2602 = vxpose.xlu0.b32.cont [8/16] 0.0, 128
      %2603 = vxpose.xlu0.b32.cont [9/16] 0.0, 128
      %2604 = vxpose.xlu0.b32.cont [10/16] 0.0, 128
      %2605 = vxpose.xlu0.b32.cont [11/16] 0.0, 128
      %2606 = vxpose.xlu0.b32.cont [12/16] 0.0, 128
      %2607 = vxpose.xlu0.b32.cont [13/16] 0.0, 128
      %2608 = vxpose.xlu0.b32.cont [14/16] 0.0, 128
      %2609 = vxpose.xlu0.b32.cont [15/16] 0.0, 128
      %2610 = vxpose.xlu0.b32.end [16/16] 0.0, 128
      %v2611 = vpop.trf.xlu0
      %v2612 = vpop.trf.xlu0
      %v2613 = vpop.trf.xlu0
      %v2614 = vpop.trf.xlu0
      %v2615 = vpop.trf.xlu0
      %v2616 = vpop.trf.xlu0
      %v2617 = vpop.trf.xlu0
      %v2618 = vpop.trf.xlu0
      %v2619 = vpop.trf.xlu0
      %v2620 = vpop.trf.xlu0
      %v2621 = vpop.trf.xlu0
      %v2622 = vpop.trf.xlu0
      %v2623 = vpop.trf.xlu0
      %v2624 = vpop.trf.xlu0
      %v2625 = vpop.trf.xlu0
      %v2626 = vpop.trf.xlu0
      %2643 = vrot.lane.b32.xlu0 %v2611, 26
      %v2644 = vpop.permute.xlu0 %2643
      %2645 = vrot.lane.b32.xlu0 %v2612, 26
      %v2646 = vpop.permute.xlu0 %2645
      %2647 = vrot.lane.b32.xlu0 %v2613, 26
      %v2648 = vpop.permute.xlu0 %2647
      %2649 = vrot.lane.b32.xlu0 %v2614, 26
      %v2650 = vpop.permute.xlu0 %2649
      %2651 = vrot.lane.b32.xlu0 %v2615, 26
      %v2652 = vpop.permute.xlu0 %2651
      %2653 = vrot.lane.b32.xlu0 %v2616, 26
      %v2654 = vpop.permute.xlu0 %2653
      %2655 = vrot.lane.b32.xlu0 %v2617, 26
      %v2656 = vpop.permute.xlu0 %2655
      %2657 = vrot.lane.b32.xlu0 %v2618, 26
      %v2658 = vpop.permute.xlu0 %2657
      %2659 = vrot.lane.b32.xlu0 %v2619, 26
      %v2660 = vpop.permute.xlu0 %2659
      %2661 = vrot.lane.b32.xlu0 %v2620, 26
      %v2662 = vpop.permute.xlu0 %2661
      %2663 = vrot.lane.b32.xlu0 %v2621, 26
      %v2664 = vpop.permute.xlu0 %2663
      %2665 = vrot.lane.b32.xlu0 %v2622, 26
      %v2666 = vpop.permute.xlu0 %2665
      %2667 = vrot.lane.b32.xlu0 %v2623, 26
      %v2668 = vpop.permute.xlu0 %2667
      %2669 = vrot.lane.b32.xlu0 %v2624, 26
      %v2670 = vpop.permute.xlu0 %2669
      %2671 = vrot.lane.b32.xlu0 %v2625, 26
      %v2672 = vpop.permute.xlu0 %2671
      %2673 = vrot.lane.b32.xlu0 %v2626, 26
      %v2674 = vpop.permute.xlu0 %2673
      %vm2691 = vcmask 326864
      %2692 = vst.msk [vmem:[%s156 + $0x8] sm:$0xff] %vm2691, %v2644
      %2693 = vst.msk [vmem:[%s156 + $0x18] sm:$0xff] %vm2691, %v2646
      %2694 = vst.msk [vmem:[%s156 + $0x28] sm:$0xff] %vm2691, %v2648
      %2695 = vst.msk [vmem:[%s156 + $0x38] sm:$0xff] %vm2691, %v2650
      %2696 = vst.msk [vmem:[%s156 + $0x48] sm:$0xff] %vm2691, %v2652
      %2697 = vst.msk [vmem:[%s156 + $0x58] sm:$0xff] %vm2691, %v2654
      %2698 = vst.msk [vmem:[%s156 + $0x68] sm:$0xff] %vm2691, %v2656
      %2699 = vst.msk [vmem:[%s156 + $0x78] sm:$0xff] %vm2691, %v2658
      %2700 = vst.msk [vmem:[%s156 + $0x88] sm:$0xff] %vm2691, %v2660
      %2701 = vst.msk [vmem:[%s156 + $0x98] sm:$0xff] %vm2691, %v2662
      %2702 = vst.msk [vmem:[%s156 + $0xa8] sm:$0xff] %vm2691, %v2664
      %2703 = vst.msk [vmem:[%s156 + $0xb8] sm:$0xff] %vm2691, %v2666
      %2704 = vst.msk [vmem:[%s156 + $0xc8] sm:$0xff] %vm2691, %v2668
      %2705 = vst.msk [vmem:[%s156 + $0xd8] sm:$0xff] %vm2691, %v2670
      %2706 = vst.msk [vmem:[%s156 + $0xe8] sm:$0xff] %vm2691, %v2672
      %2707 = vst.msk [vmem:[%s156 + $0xf8] sm:$0xff] %vm2691, %v2674
      %v2708 = vld [vmem:[%s2592 + $0x8] sm:$0xff]
      %v2709 = vld [vmem:[%s2592 + $0x18] sm:$0x3f]
      %2710 = vxpose.xlu0.b32.start [1/16] %v2708, 128
      %2711 = vxpose.xlu0.b32.cont [2/16] %v2709, 128
      %2712 = vxpose.xlu0.b32.cont [3/16] 0.0, 128
      %2713 = vxpose.xlu0.b32.cont [4/16] 0.0, 128
      %2714 = vxpose.xlu0.b32.cont [5/16] 0.0, 128
      %2715 = vxpose.xlu0.b32.cont [6/16] 0.0, 128
      %2716 = vxpose.xlu0.b32.cont [7/16] 0.0, 128
      %2717 = vxpose.xlu0.b32.cont [8/16] 0.0, 128
      %2718 = vxpose.xlu0.b32.cont [9/16] 0.0, 128
      %2719 = vxpose.xlu0.b32.cont [10/16] 0.0, 128
      %2720 = vxpose.xlu0.b32.cont [11/16] 0.0, 128
      %2721 = vxpose.xlu0.b32.cont [12/16] 0.0, 128
      %2722 = vxpose.xlu0.b32.cont [13/16] 0.0, 128
      %2723 = vxpose.xlu0.b32.cont [14/16] 0.0, 128
      %2724 = vxpose.xlu0.b32.cont [15/16] 0.0, 128
      %2725 = vxpose.xlu0.b32.end [16/16] 0.0, 128
      %v2726 = vpop.trf.xlu0
      %v2727 = vpop.trf.xlu0
      %v2728 = vpop.trf.xlu0
      %v2729 = vpop.trf.xlu0
      %v2730 = vpop.trf.xlu0
      %v2731 = vpop.trf.xlu0
      %v2732 = vpop.trf.xlu0
      %v2733 = vpop.trf.xlu0
      %v2734 = vpop.trf.xlu0
      %v2735 = vpop.trf.xlu0
      %v2736 = vpop.trf.xlu0
      %v2737 = vpop.trf.xlu0
      %v2738 = vpop.trf.xlu0
      %v2739 = vpop.trf.xlu0
      %v2740 = vpop.trf.xlu0
      %v2741 = vpop.trf.xlu0
      %2758 = vrot.lane.b32.xlu0 %v2726, 26
      %v2759 = vpop.permute.xlu0 %2758
      %2760 = vrot.lane.b32.xlu0 %v2727, 26
      %v2761 = vpop.permute.xlu0 %2760
      %2762 = vrot.lane.b32.xlu0 %v2728, 26
      %v2763 = vpop.permute.xlu0 %2762
      %2764 = vrot.lane.b32.xlu0 %v2729, 26
      %v2765 = vpop.permute.xlu0 %2764
      %2766 = vrot.lane.b32.xlu0 %v2730, 26
      %v2767 = vpop.permute.xlu0 %2766
      %2768 = vrot.lane.b32.xlu0 %v2731, 26
      %v2769 = vpop.permute.xlu0 %2768
      %2770 = vrot.lane.b32.xlu0 %v2732, 26
      %v2771 = vpop.permute.xlu0 %2770
      %2772 = vrot.lane.b32.xlu0 %v2733, 26
      %v2773 = vpop.permute.xlu0 %2772
      %2774 = vrot.lane.b32.xlu0 %v2734, 26
      %v2775 = vpop.permute.xlu0 %2774
      %2776 = vrot.lane.b32.xlu0 %v2735, 26
      %v2777 = vpop.permute.xlu0 %2776
      %2778 = vrot.lane.b32.xlu0 %v2736, 26
      %v2779 = vpop.permute.xlu0 %2778
      %2780 = vrot.lane.b32.xlu0 %v2737, 26
      %v2781 = vpop.permute.xlu0 %2780
      %2782 = vrot.lane.b32.xlu0 %v2738, 26
      %v2783 = vpop.permute.xlu0 %2782
      %2784 = vrot.lane.b32.xlu0 %v2739, 26
      %v2785 = vpop.permute.xlu0 %2784
      %2786 = vrot.lane.b32.xlu0 %v2740, 26
      %v2787 = vpop.permute.xlu0 %2786
      %2788 = vrot.lane.b32.xlu0 %v2741, 26
      %v2789 = vpop.permute.xlu0 %2788
      %2806 = vst.msk [vmem:[%s156 + $0x108] sm:$0xff] %vm2691, %v2759
      %2807 = vst.msk [vmem:[%s156 + $0x118] sm:$0xff] %vm2691, %v2761
      %2808 = vst.msk [vmem:[%s156 + $0x128] sm:$0xff] %vm2691, %v2763
      %2809 = vst.msk [vmem:[%s156 + $0x138] sm:$0xff] %vm2691, %v2765
      %2810 = vst.msk [vmem:[%s156 + $0x148] sm:$0xff] %vm2691, %v2767
      %2811 = vst.msk [vmem:[%s156 + $0x158] sm:$0xff] %vm2691, %v2769
      %2812 = vst.msk [vmem:[%s156 + $0x168] sm:$0xff] %vm2691, %v2771
      %2813 = vst.msk [vmem:[%s156 + $0x178] sm:$0xff] %vm2691, %v2773
      %2814 = vst.msk [vmem:[%s156 + $0x188] sm:$0xff] %vm2691, %v2775
      %2815 = vst.msk [vmem:[%s156 + $0x198] sm:$0xff] %vm2691, %v2777
      %2816 = vst.msk [vmem:[%s156 + $0x1a8] sm:$0xff] %vm2691, %v2779
      %2817 = vst.msk [vmem:[%s156 + $0x1b8] sm:$0xff] %vm2691, %v2781
      %2818 = vst.msk [vmem:[%s156 + $0x1c8] sm:$0xff] %vm2691, %v2783
      %2819 = vst.msk [vmem:[%s156 + $0x1d8] sm:$0xff] %vm2691, %v2785
      %2820 = vst.msk [vmem:[%s156 + $0x1e8] sm:$0xff] %vm2691, %v2787
      %2821 = vst.msk [vmem:[%s156 + $0x1f8] sm:$0xff] %vm2691, %v2789
      %s2822 = scalar_lea.vmem %s145, 384
      %v2823 = vld [vmem:[%s2822] sm:$0xff]
      %v2824 = vld [vmem:[%s2822 + $0x10] sm:$0x3f]
      %2825 = vxpose.xlu0.b32.start [1/16] %v2823, 128
      %2826 = vxpose.xlu0.b32.cont [2/16] %v2824, 128
      %2827 = vxpose.xlu0.b32.cont [3/16] 0.0, 128
      %2828 = vxpose.xlu0.b32.cont [4/16] 0.0, 128
      %2829 = vxpose.xlu0.b32.cont [5/16] 0.0, 128
      %2830 = vxpose.xlu0.b32.cont [6/16] 0.0, 128
      %2831 = vxpose.xlu0.b32.cont [7/16] 0.0, 128
      %2832 = vxpose.xlu0.b32.cont [8/16] 0.0, 128
      %2833 = vxpose.xlu0.b32.cont [9/16] 0.0, 128
      %2834 = vxpose.xlu0.b32.cont [10/16] 0.0, 128
      %2835 = vxpose.xlu0.b32.cont [11/16] 0.0, 128
      %2836 = vxpose.xlu0.b32.cont [12/16] 0.0, 128
      %2837 = vxpose.xlu0.b32.cont [13/16] 0.0, 128
      %2838 = vxpose.xlu0.b32.cont [14/16] 0.0, 128
      %2839 = vxpose.xlu0.b32.cont [15/16] 0.0, 128
      %2840 = vxpose.xlu0.b32.end [16/16] 0.0, 128
      %v2841 = vpop.trf.xlu0
      %v2842 = vpop.trf.xlu0
      %v2843 = vpop.trf.xlu0
      %v2844 = vpop.trf.xlu0
      %v2845 = vpop.trf.xlu0
      %v2846 = vpop.trf.xlu0
      %v2847 = vpop.trf.xlu0
      %v2848 = vpop.trf.xlu0
      %v2849 = vpop.trf.xlu0
      %v2850 = vpop.trf.xlu0
      %v2851 = vpop.trf.xlu0
      %v2852 = vpop.trf.xlu0
      %v2853 = vpop.trf.xlu0
      %v2854 = vpop.trf.xlu0
      %v2855 = vpop.trf.xlu0
      %v2856 = vpop.trf.xlu0
      %2873 = vrot.lane.b32.xlu0 %v2841, 40
      %v2874 = vpop.permute.xlu0 %2873
      %2875 = vrot.lane.b32.xlu0 %v2842, 40
      %v2876 = vpop.permute.xlu0 %2875
      %2877 = vrot.lane.b32.xlu0 %v2843, 40
      %v2878 = vpop.permute.xlu0 %2877
      %2879 = vrot.lane.b32.xlu0 %v2844, 40
      %v2880 = vpop.permute.xlu0 %2879
      %2881 = vrot.lane.b32.xlu0 %v2845, 40
      %v2882 = vpop.permute.xlu0 %2881
      %2883 = vrot.lane.b32.xlu0 %v2846, 40
      %v2884 = vpop.permute.xlu0 %2883
      %2885 = vrot.lane.b32.xlu0 %v2847, 40
      %v2886 = vpop.permute.xlu0 %2885
      %2887 = vrot.lane.b32.xlu0 %v2848, 40
      %v2888 = vpop.permute.xlu0 %2887
      %2889 = vrot.lane.b32.xlu0 %v2849, 40
      %v2890 = vpop.permute.xlu0 %2889
      %2891 = vrot.lane.b32.xlu0 %v2850, 40
      %v2892 = vpop.permute.xlu0 %2891
      %2893 = vrot.lane.b32.xlu0 %v2851, 40
      %v2894 = vpop.permute.xlu0 %2893
      %2895 = vrot.lane.b32.xlu0 %v2852, 40
      %v2896 = vpop.permute.xlu0 %2895
      %2897 = vrot.lane.b32.xlu0 %v2853, 40
      %v2898 = vpop.permute.xlu0 %2897
      %2899 = vrot.lane.b32.xlu0 %v2854, 40
      %v2900 = vpop.permute.xlu0 %2899
      %2901 = vrot.lane.b32.xlu0 %v2855, 40
      %v2902 = vpop.permute.xlu0 %2901
      %2903 = vrot.lane.b32.xlu0 %v2856, 40
      %v2904 = vpop.permute.xlu0 %2903
      %vm2921 = vcmask 441664
      %2922 = vst.msk [vmem:[%s156 + $0x8] sm:$0xff] %vm2921, %v2874
      %2923 = vst.msk [vmem:[%s156 + $0x18] sm:$0xff] %vm2921, %v2876
      %2924 = vst.msk [vmem:[%s156 + $0x28] sm:$0xff] %vm2921, %v2878
      %2925 = vst.msk [vmem:[%s156 + $0x38] sm:$0xff] %vm2921, %v2880
      %2926 = vst.msk [vmem:[%s156 + $0x48] sm:$0xff] %vm2921, %v2882
      %2927 = vst.msk [vmem:[%s156 + $0x58] sm:$0xff] %vm2921, %v2884
      %2928 = vst.msk [vmem:[%s156 + $0x68] sm:$0xff] %vm2921, %v2886
      %2929 = vst.msk [vmem:[%s156 + $0x78] sm:$0xff] %vm2921, %v2888
      %2930 = vst.msk [vmem:[%s156 + $0x88] sm:$0xff] %vm2921, %v2890
      %2931 = vst.msk [vmem:[%s156 + $0x98] sm:$0xff] %vm2921, %v2892
      %2932 = vst.msk [vmem:[%s156 + $0xa8] sm:$0xff] %vm2921, %v2894
      %2933 = vst.msk [vmem:[%s156 + $0xb8] sm:$0xff] %vm2921, %v2896
      %2934 = vst.msk [vmem:[%s156 + $0xc8] sm:$0xff] %vm2921, %v2898
      %2935 = vst.msk [vmem:[%s156 + $0xd8] sm:$0xff] %vm2921, %v2900
      %2936 = vst.msk [vmem:[%s156 + $0xe8] sm:$0xff] %vm2921, %v2902
      %2937 = vst.msk [vmem:[%s156 + $0xf8] sm:$0xff] %vm2921, %v2904
      %v2938 = vld [vmem:[%s2822 + $0x8] sm:$0xff]
      %v2939 = vld [vmem:[%s2822 + $0x18] sm:$0x3f]
      %2940 = vxpose.xlu0.b32.start [1/16] %v2938, 128
      %2941 = vxpose.xlu0.b32.cont [2/16] %v2939, 128
      %2942 = vxpose.xlu0.b32.cont [3/16] 0.0, 128
      %2943 = vxpose.xlu0.b32.cont [4/16] 0.0, 128
      %2944 = vxpose.xlu0.b32.cont [5/16] 0.0, 128
      %2945 = vxpose.xlu0.b32.cont [6/16] 0.0, 128
      %2946 = vxpose.xlu0.b32.cont [7/16] 0.0, 128
      %2947 = vxpose.xlu0.b32.cont [8/16] 0.0, 128
      %2948 = vxpose.xlu0.b32.cont [9/16] 0.0, 128
      %2949 = vxpose.xlu0.b32.cont [10/16] 0.0, 128
      %2950 = vxpose.xlu0.b32.cont [11/16] 0.0, 128
      %2951 = vxpose.xlu0.b32.cont [12/16] 0.0, 128
      %2952 = vxpose.xlu0.b32.cont [13/16] 0.0, 128
      %2953 = vxpose.xlu0.b32.cont [14/16] 0.0, 128
      %2954 = vxpose.xlu0.b32.cont [15/16] 0.0, 128
      %2955 = vxpose.xlu0.b32.end [16/16] 0.0, 128
      %v2956 = vpop.trf.xlu0
      %v2957 = vpop.trf.xlu0
      %v2958 = vpop.trf.xlu0
      %v2959 = vpop.trf.xlu0
      %v2960 = vpop.trf.xlu0
      %v2961 = vpop.trf.xlu0
      %v2962 = vpop.trf.xlu0
      %v2963 = vpop.trf.xlu0
      %v2964 = vpop.trf.xlu0
      %v2965 = vpop.trf.xlu0
      %v2966 = vpop.trf.xlu0
      %v2967 = vpop.trf.xlu0
      %v2968 = vpop.trf.xlu0
      %v2969 = vpop.trf.xlu0
      %v2970 = vpop.trf.xlu0
      %v2971 = vpop.trf.xlu0
      %2988 = vrot.lane.b32.xlu0 %v2956, 40
      %v2989 = vpop.permute.xlu0 %2988
      %2990 = vrot.lane.b32.xlu0 %v2957, 40
      %v2991 = vpop.permute.xlu0 %2990
      %2992 = vrot.lane.b32.xlu0 %v2958, 40
      %v2993 = vpop.permute.xlu0 %2992
      %2994 = vrot.lane.b32.xlu0 %v2959, 40
      %v2995 = vpop.permute.xlu0 %2994
      %2996 = vrot.lane.b32.xlu0 %v2960, 40
      %v2997 = vpop.permute.xlu0 %2996
      %2998 = vrot.lane.b32.xlu0 %v2961, 40
      %v2999 = vpop.permute.xlu0 %2998
      %3000 = vrot.lane.b32.xlu0 %v2962, 40
      %v3001 = vpop.permute.xlu0 %3000
      %3002 = vrot.lane.b32.xlu0 %v2963, 40
      %v3003 = vpop.permute.xlu0 %3002
      %3004 = vrot.lane.b32.xlu0 %v2964, 40
      %v3005 = vpop.permute.xlu0 %3004
      %3006 = vrot.lane.b32.xlu0 %v2965, 40
      %v3007 = vpop.permute.xlu0 %3006
      %3008 = vrot.lane.b32.xlu0 %v2966, 40
      %v3009 = vpop.permute.xlu0 %3008
      %3010 = vrot.lane.b32.xlu0 %v2967, 40
      %v3011 = vpop.permute.xlu0 %3010
      %3012 = vrot.lane.b32.xlu0 %v2968, 40
      %v3013 = vpop.permute.xlu0 %3012
      %3014 = vrot.lane.b32.xlu0 %v2969, 40
      %v3015 = vpop.permute.xlu0 %3014
      %3016 = vrot.lane.b32.xlu0 %v2970, 40
      %v3017 = vpop.permute.xlu0 %3016
      %3018 = vrot.lane.b32.xlu0 %v2971, 40
      %v3019 = vpop.permute.xlu0 %3018
      %3036 = vst.msk [vmem:[%s156 + $0x108] sm:$0xff] %vm2921, %v2989
      %3037 = vst.msk [vmem:[%s156 + $0x118] sm:$0xff] %vm2921, %v2991
      %3038 = vst.msk [vmem:[%s156 + $0x128] sm:$0xff] %vm2921, %v2993
      %3039 = vst.msk [vmem:[%s156 + $0x138] sm:$0xff] %vm2921, %v2995
      %3040 = vst.msk [vmem:[%s156 + $0x148] sm:$0xff] %vm2921, %v2997
      %3041 = vst.msk [vmem:[%s156 + $0x158] sm:$0xff] %vm2921, %v2999
      %3042 = vst.msk [vmem:[%s156 + $0x168] sm:$0xff] %vm2921, %v3001
      %3043 = vst.msk [vmem:[%s156 + $0x178] sm:$0xff] %vm2921, %v3003
      %3044 = vst.msk [vmem:[%s156 + $0x188] sm:$0xff] %vm2921, %v3005
      %3045 = vst.msk [vmem:[%s156 + $0x198] sm:$0xff] %vm2921, %v3007
      %3046 = vst.msk [vmem:[%s156 + $0x1a8] sm:$0xff] %vm2921, %v3009
      %3047 = vst.msk [vmem:[%s156 + $0x1b8] sm:$0xff] %vm2921, %v3011
      %3048 = vst.msk [vmem:[%s156 + $0x1c8] sm:$0xff] %vm2921, %v3013
      %3049 = vst.msk [vmem:[%s156 + $0x1d8] sm:$0xff] %vm2921, %v3015
      %3050 = vst.msk [vmem:[%s156 + $0x1e8] sm:$0xff] %vm2921, %v3017
      %3051 = vst.msk [vmem:[%s156 + $0x1f8] sm:$0xff] %vm2921, %v3019
      %s3052 = scalar_lea.vmem %s145, 416
      %v3053 = vld [vmem:[%s3052] sm:$0xff]
      %v3054 = vld [vmem:[%s3052 + $0x10] sm:$0x3f]
      %3055 = vxpose.xlu0.b32.start [1/16] %v3053, 128
      %3056 = vxpose.xlu0.b32.cont [2/16] %v3054, 128
      %3057 = vxpose.xlu0.b32.cont [3/16] 0.0, 128
      %3058 = vxpose.xlu0.b32.cont [4/16] 0.0, 128
      %3059 = vxpose.xlu0.b32.cont [5/16] 0.0, 128
      %3060 = vxpose.xlu0.b32.cont [6/16] 0.0, 128
      %3061 = vxpose.xlu0.b32.cont [7/16] 0.0, 128
      %3062 = vxpose.xlu0.b32.cont [8/16] 0.0, 128
      %3063 = vxpose.xlu0.b32.cont [9/16] 0.0, 128
      %3064 = vxpose.xlu0.b32.cont [10/16] 0.0, 128
      %3065 = vxpose.xlu0.b32.cont [11/16] 0.0, 128
      %3066 = vxpose.xlu0.b32.cont [12/16] 0.0, 128
      %3067 = vxpose.xlu0.b32.cont [13/16] 0.0, 128
      %3068 = vxpose.xlu0.b32.cont [14/16] 0.0, 128
      %3069 = vxpose.xlu0.b32.cont [15/16] 0.0, 128
      %3070 = vxpose.xlu0.b32.end [16/16] 0.0, 128
      %v3071 = vpop.trf.xlu0
      %v3072 = vpop.trf.xlu0
      %v3073 = vpop.trf.xlu0
      %v3074 = vpop.trf.xlu0
      %v3075 = vpop.trf.xlu0
      %v3076 = vpop.trf.xlu0
      %v3077 = vpop.trf.xlu0
      %v3078 = vpop.trf.xlu0
      %v3079 = vpop.trf.xlu0
      %v3080 = vpop.trf.xlu0
      %v3081 = vpop.trf.xlu0
      %v3082 = vpop.trf.xlu0
      %v3083 = vpop.trf.xlu0
      %v3084 = vpop.trf.xlu0
      %v3085 = vpop.trf.xlu0
      %v3086 = vpop.trf.xlu0
      %3103 = vrot.lane.b32.xlu0 %v3071, 54
      %v3104 = vpop.permute.xlu0 %3103
      %3105 = vrot.lane.b32.xlu0 %v3072, 54
      %v3106 = vpop.permute.xlu0 %3105
      %3107 = vrot.lane.b32.xlu0 %v3073, 54
      %v3108 = vpop.permute.xlu0 %3107
      %3109 = vrot.lane.b32.xlu0 %v3074, 54
      %v3110 = vpop.permute.xlu0 %3109
      %3111 = vrot.lane.b32.xlu0 %v3075, 54
      %v3112 = vpop.permute.xlu0 %3111
      %3113 = vrot.lane.b32.xlu0 %v3076, 54
      %v3114 = vpop.permute.xlu0 %3113
      %3115 = vrot.lane.b32.xlu0 %v3077, 54
      %v3116 = vpop.permute.xlu0 %3115
      %3117 = vrot.lane.b32.xlu0 %v3078, 54
      %v3118 = vpop.permute.xlu0 %3117
      %3119 = vrot.lane.b32.xlu0 %v3079, 54
      %v3120 = vpop.permute.xlu0 %3119
      %3121 = vrot.lane.b32.xlu0 %v3080, 54
      %v3122 = vpop.permute.xlu0 %3121
      %3123 = vrot.lane.b32.xlu0 %v3081, 54
      %v3124 = vpop.permute.xlu0 %3123
      %3125 = vrot.lane.b32.xlu0 %v3082, 54
      %v3126 = vpop.permute.xlu0 %3125
      %3127 = vrot.lane.b32.xlu0 %v3083, 54
      %v3128 = vpop.permute.xlu0 %3127
      %3129 = vrot.lane.b32.xlu0 %v3084, 54
      %v3130 = vpop.permute.xlu0 %3129
      %3131 = vrot.lane.b32.xlu0 %v3085, 54
      %v3132 = vpop.permute.xlu0 %3131
      %3133 = vrot.lane.b32.xlu0 %v3086, 54
      %v3134 = vpop.permute.xlu0 %3133
      %vm3151 = vcmask 556464
      %3152 = vst.msk [vmem:[%s156 + $0x8] sm:$0xff] %vm3151, %v3104
      %3153 = vst.msk [vmem:[%s156 + $0x18] sm:$0xff] %vm3151, %v3106
      %3154 = vst.msk [vmem:[%s156 + $0x28] sm:$0xff] %vm3151, %v3108
      %3155 = vst.msk [vmem:[%s156 + $0x38] sm:$0xff] %vm3151, %v3110
      %3156 = vst.msk [vmem:[%s156 + $0x48] sm:$0xff] %vm3151, %v3112
      %3157 = vst.msk [vmem:[%s156 + $0x58] sm:$0xff] %vm3151, %v3114
      %3158 = vst.msk [vmem:[%s156 + $0x68] sm:$0xff] %vm3151, %v3116
      %3159 = vst.msk [vmem:[%s156 + $0x78] sm:$0xff] %vm3151, %v3118
      %3160 = vst.msk [vmem:[%s156 + $0x88] sm:$0xff] %vm3151, %v3120
      %3161 = vst.msk [vmem:[%s156 + $0x98] sm:$0xff] %vm3151, %v3122
      %3162 = vst.msk [vmem:[%s156 + $0xa8] sm:$0xff] %vm3151, %v3124
      %3163 = vst.msk [vmem:[%s156 + $0xb8] sm:$0xff] %vm3151, %v3126
      %3164 = vst.msk [vmem:[%s156 + $0xc8] sm:$0xff] %vm3151, %v3128
      %3165 = vst.msk [vmem:[%s156 + $0xd8] sm:$0xff] %vm3151, %v3130
      %3166 = vst.msk [vmem:[%s156 + $0xe8] sm:$0xff] %vm3151, %v3132
      %3167 = vst.msk [vmem:[%s156 + $0xf8] sm:$0xff] %vm3151, %v3134
      %v3168 = vld [vmem:[%s3052 + $0x8] sm:$0xff]
      %v3169 = vld [vmem:[%s3052 + $0x18] sm:$0x3f]
      %3170 = vxpose.xlu0.b32.start [1/16] %v3168, 128
      %3171 = vxpose.xlu0.b32.cont [2/16] %v3169, 128
      %3172 = vxpose.xlu0.b32.cont [3/16] 0.0, 128
      %3173 = vxpose.xlu0.b32.cont [4/16] 0.0, 128
      %3174 = vxpose.xlu0.b32.cont [5/16] 0.0, 128
      %3175 = vxpose.xlu0.b32.cont [6/16] 0.0, 128
      %3176 = vxpose.xlu0.b32.cont [7/16] 0.0, 128
      %3177 = vxpose.xlu0.b32.cont [8/16] 0.0, 128
      %3178 = vxpose.xlu0.b32.cont [9/16] 0.0, 128
      %3179 = vxpose.xlu0.b32.cont [10/16] 0.0, 128
      %3180 = vxpose.xlu0.b32.cont [11/16] 0.0, 128
      %3181 = vxpose.xlu0.b32.cont [12/16] 0.0, 128
      %3182 = vxpose.xlu0.b32.cont [13/16] 0.0, 128
      %3183 = vxpose.xlu0.b32.cont [14/16] 0.0, 128
      %3184 = vxpose.xlu0.b32.cont [15/16] 0.0, 128
      %3185 = vxpose.xlu0.b32.end [16/16] 0.0, 128
      %v3186 = vpop.trf.xlu0
      %v3187 = vpop.trf.xlu0
      %v3188 = vpop.trf.xlu0
      %v3189 = vpop.trf.xlu0
      %v3190 = vpop.trf.xlu0
      %v3191 = vpop.trf.xlu0
      %v3192 = vpop.trf.xlu0
      %v3193 = vpop.trf.xlu0
      %v3194 = vpop.trf.xlu0
      %v3195 = vpop.trf.xlu0
      %v3196 = vpop.trf.xlu0
      %v3197 = vpop.trf.xlu0
      %v3198 = vpop.trf.xlu0
      %v3199 = vpop.trf.xlu0
      %v3200 = vpop.trf.xlu0
      %v3201 = vpop.trf.xlu0
      %3218 = vrot.lane.b32.xlu0 %v3186, 54
      %v3219 = vpop.permute.xlu0 %3218
      %3220 = vrot.lane.b32.xlu0 %v3187, 54
      %v3221 = vpop.permute.xlu0 %3220
      %3222 = vrot.lane.b32.xlu0 %v3188, 54
      %v3223 = vpop.permute.xlu0 %3222
      %3224 = vrot.lane.b32.xlu0 %v3189, 54
      %v3225 = vpop.permute.xlu0 %3224
      %3226 = vrot.lane.b32.xlu0 %v3190, 54
      %v3227 = vpop.permute.xlu0 %3226
      %3228 = vrot.lane.b32.xlu0 %v3191, 54
      %v3229 = vpop.permute.xlu0 %3228
      %3230 = vrot.lane.b32.xlu0 %v3192, 54
      %v3231 = vpop.permute.xlu0 %3230
      %3232 = vrot.lane.b32.xlu0 %v3193, 54
      %v3233 = vpop.permute.xlu0 %3232
      %3234 = vrot.lane.b32.xlu0 %v3194, 54
      %v3235 = vpop.permute.xlu0 %3234
      %3236 = vrot.lane.b32.xlu0 %v3195, 54
      %v3237 = vpop.permute.xlu0 %3236
      %3238 = vrot.lane.b32.xlu0 %v3196, 54
      %v3239 = vpop.permute.xlu0 %3238
      %3240 = vrot.lane.b32.xlu0 %v3197, 54
      %v3241 = vpop.permute.xlu0 %3240
      %3242 = vrot.lane.b32.xlu0 %v3198, 54
      %v3243 = vpop.permute.xlu0 %3242
      %3244 = vrot.lane.b32.xlu0 %v3199, 54
      %v3245 = vpop.permute.xlu0 %3244
      %3246 = vrot.lane.b32.xlu0 %v3200, 54
      %v3247 = vpop.permute.xlu0 %3246
      %3248 = vrot.lane.b32.xlu0 %v3201, 54
      %v3249 = vpop.permute.xlu0 %3248
      %3266 = vst.msk [vmem:[%s156 + $0x108] sm:$0xff] %vm3151, %v3219
      %3267 = vst.msk [vmem:[%s156 + $0x118] sm:$0xff] %vm3151, %v3221
      %3268 = vst.msk [vmem:[%s156 + $0x128] sm:$0xff] %vm3151, %v3223
      %3269 = vst.msk [vmem:[%s156 + $0x138] sm:$0xff] %vm3151, %v3225
      %3270 = vst.msk [vmem:[%s156 + $0x148] sm:$0xff] %vm3151, %v3227
      %3271 = vst.msk [vmem:[%s156 + $0x158] sm:$0xff] %vm3151, %v3229
      %3272 = vst.msk [vmem:[%s156 + $0x168] sm:$0xff] %vm3151, %v3231
      %3273 = vst.msk [vmem:[%s156 + $0x178] sm:$0xff] %vm3151, %v3233
      %3274 = vst.msk [vmem:[%s156 + $0x188] sm:$0xff] %vm3151, %v3235
      %3275 = vst.msk [vmem:[%s156 + $0x198] sm:$0xff] %vm3151, %v3237
      %3276 = vst.msk [vmem:[%s156 + $0x1a8] sm:$0xff] %vm3151, %v3239
      %3277 = vst.msk [vmem:[%s156 + $0x1b8] sm:$0xff] %vm3151, %v3241
      %3278 = vst.msk [vmem:[%s156 + $0x1c8] sm:$0xff] %vm3151, %v3243
      %3279 = vst.msk [vmem:[%s156 + $0x1d8] sm:$0xff] %vm3151, %v3245
      %3280 = vst.msk [vmem:[%s156 + $0x1e8] sm:$0xff] %vm3151, %v3247
      %3281 = vst.msk [vmem:[%s156 + $0x1f8] sm:$0xff] %vm3151, %v3249
      %s3282 = smul.u32 32, %s16
      %p3283 = scmp.lt.s32.totalorder %s17, 1
      %s3284 = scalar_select %p3283, %s17, 1
      %p3285 = scmp.lt.s32.totalorder %s3282, 31
      %s3286 = scalar_select %p3285, %s3282, 31
      %s3287 = smul.addr %s3286, 2
      %s3288 = smul.addr %s3284, 64
      %s3289 = sadd.s32 %s3287, %s3288
      %s3290 = smul.addr %s3289, 8
      %s3291 = scalar_lea.vmem %s1, %s3290
      // Predicated region
      $region25: #{permute_nhwc_to_nchw.1} parent=23 // pred_check
        %p3292 = pneg %p72
      $region26: #{permute_nhwc_to_nchw.1} parent=23 // pred_check_branch
        %3294 = sbr.rel (%p3292) target = $region28
      $region27: #{permute_nhwc_to_nchw.1} parent=23 // pred_region
        %s3295 = smul.u32 32, %s16
      $region28: #{permute_nhwc_to_nchw.1} parent=23 // pred_fallthru
        _
    $region24: #{permute_nhwc_to_nchw.1} parent=5 // pred_fallthru
      _
    %p3296 = scmp.le.s32.totalorder 2, %s7
    // Predicated region
    $region29: #{permute_nhwc_to_nchw.1} parent=5 // pred_check
      %p3297 = pneg %p3296
    $region30: #{permute_nhwc_to_nchw.1} parent=5 // pred_check_branch
      %3299 = sbr.rel (%p3297) target = $region32
    $region31: #{permute_nhwc_to_nchw.1} parent=5 // pred_region
      %s3300 = ssub.s32 %s7, 2
      // Predicated region
      $region33: #{permute_nhwc_to_nchw.1} parent=31 // pred_check
        %p3301 = pneg %p78
      $region34: #{permute_nhwc_to_nchw.1} parent=31 // pred_check_branch
        %3303 = sbr.rel (%p3301) target = $region36
      $region35: #{permute_nhwc_to_nchw.1} parent=31 // pred_region
        %s3304 = smul.u32 32, %s18
        %p3305 = scmp.lt.s32.totalorder %s19, 1
        %s3306 = scalar_select %p3305, %s19, 1
        %p3307 = scmp.lt.s32.totalorder %s3304, 31
        %s3308 = scalar_select %p3307, %s3304, 31
        %s3309 = smul.addr %s3308, 2
        %s3310 = smul.addr %s3306, 64
        %s3311 = sadd.s32 %s3309, %s3310
        %s3312 = smul.addr %s3311, 8
        %s3313 = scalar_lea.vmem %s1, %s3312
      $region36: #{permute_nhwc_to_nchw.1} parent=31 // pred_fallthru
        _
    $region32: #{permute_nhwc_to_nchw.1} parent=5 // pred_fallthru
      _
  $region6: #{permute_nhwc_to_nchw.1} parent=0 // loop_footer
    %s11 = sadd.s32 1, %s7
  $region7: #{permute_nhwc_to_nchw.1} parent=0 // loop_footer_branch
    %6 = sbr.rel target = $region3
  $region8: #{permute_nhwc_to_nchw.1} parent=0 // loop_exit
    _

</llo_original>
